<compile_context>
chip_gen: v6e
topology: v6e:2x2x1
jax: 0.10.0
libtpu: 0.0.40
codegen_flags: <defaults>
</compile_context>

<pallas_src>
import functools

import jax
import jax.numpy as jnp
from jax.experimental import pallas as pl
from jax.experimental.pallas import tpu as pltpu


def _round_up(n, m):
    return ((n + m - 1) // m) * m


def pgltm_kernel(
    x_ref,                               # [Tc, Bt, I]  chunk of timesteps
    wi_ref, bi_ref,                      # W_i [I, H], b_i [1, H]
    wga_ref, bg_ref,                     # fused activated-half gates [H, 3H], [1, 3H]
    wrzh_ref,                            # fused h_prev-half (r, z)   [H, 2H]
    wch_ref,                             # candidate h-half (r*h_prev) [H, H]
    tresh_ref, decay_ref,                # per-unit potential params [1, H]
    wo_ref, bo_ref,                      # output head [H, O], [1, O]
    out_ref,                             # logits [Bt, O] (written at last chunk)
    h_sc, p_sc,                          # VMEM carries [Bt, H] f32
    *, t_total,
):
    tc_idx = pl.program_id(1)
    f32 = jnp.float32
    w_dtype = wi_ref.dtype
    H = h_sc.shape[-1]
    Tc = x_ref.shape[0]
    has_tail = (t_total % Tc) != 0       # static Python bool

    @pl.when(tc_idx == 0)
    def _init():
        h_sc[...] = jnp.zeros_like(h_sc)
        p_sc[...] = jnp.zeros_like(p_sc)

    # Hoisted (1, H) broadcast operands: loaded once per chunk, kept in f32.
    b_i = bi_ref[...].astype(f32)
    b_g = bg_ref[...].astype(f32)
    tresh = tresh_ref[...].astype(f32)
    decay = decay_ref[...].astype(f32)

    h = h_sc[...]
    p = p_sc[...]

    # Statically unrolled chunk loop (Tc is small, <= 16).
    for i in range(Tc):
        # processed_input = W_i(x)  (MXU, f32 accumulate)
        x = x_ref[i].astype(w_dtype)
        processed = jnp.dot(x, wi_ref[...], preferred_element_type=f32) + b_i

        # Potential dynamics.  gated_bool == InvertedBump(relu(treshed)) fwd
        # == (treshed > 0); BumpFunction fwd is its complement, so
        # non_gated == potential - activated exactly (gated_bool in {0, 1}).
        potential = p + processed
        gated_bool = ((potential - tresh) > 0.0).astype(f32)
        activated = gated_bool * potential
        p_new = (potential - activated) * decay

        # GRU gates: two fused MXU passes + one for the candidate h-half.
        ga = jnp.dot(activated.astype(w_dtype), wga_ref[...],
                     preferred_element_type=f32) + b_g                 # [Bt, 3H]
        gh = jnp.dot(h.astype(w_dtype), wrzh_ref[...],
                     preferred_element_type=f32)                       # [Bt, 2H]
        r = jax.nn.sigmoid(ga[:, 0 * H:1 * H] + gh[:, 0 * H:1 * H])
        z = jax.nn.sigmoid(ga[:, 1 * H:2 * H] + gh[:, 1 * H:2 * H])
        n = jnp.tanh(
            ga[:, 2 * H:3 * H]
            + jnp.dot((r * h).astype(w_dtype), wch_ref[...],
                      preferred_element_type=f32))
        h_new = (1.0 - z) * h + z * n

        if has_tail:
            valid = (tc_idx * Tc + i) < t_total
            h = jnp.where(valid, h_new, h)
            p = jnp.where(valid, p_new, p)
        else:
            h, p = h_new, p_new

    h_sc[...] = h
    p_sc[...] = p

    # Output head only after the final timestep (matches PGLTM.forward).
    @pl.when(tc_idx == pl.num_programs(1) - 1)
    def _final():
        logits = (jnp.dot(h.astype(w_dtype), wo_ref[...],
                          preferred_element_type=f32)
                  + bo_ref[...].astype(f32))
        out_ref[...] = logits.astype(out_ref.dtype)


def _vmem_limit_bytes(I_pad, H_pad, O_pad, bt, Tc, w_bytes, x_bytes):
    """Scoped-VMEM request from the actual padded footprint (+ headroom)."""
    weights = (I_pad * H_pad + 6 * H_pad * H_pad + H_pad * O_pad) * w_bytes  # single-buffered
    vectors = (6 * H_pad + O_pad) * 4                                        # f32 biases/tresh/decay
    x_blocks = 2 * Tc * bt * I_pad * x_bytes                                 # double-buffered input
    out_blocks = 2 * bt * O_pad * 4
    scratch = 2 * bt * H_pad * 4
    interm = 16 * bt * H_pad * 4                                             # ga/gh/temps headroom
    total = weights + vectors + x_blocks + out_blocks + scratch + interm
    return int(min(max(int(total * 1.25) + (4 << 20), 32 << 20), 100 << 20))


def pgltm_forward(data, params, *, batch_tile=128, time_chunk=8,
                  param_dtype=jnp.bfloat16):
    """data: [T, B, input_size] -> logits [B, output_size]."""
    T, B, I = data.shape
    H = params["W_i"].shape[1]
    O = params["W_o"].shape[1]

    # Lane-dense padding: feature dims to multiples of 128, batch to the tile,
    # time to the chunk.
    I_pad, H_pad, O_pad = (_round_up(d, 128) for d in (I, H, O))
    bt = min(batch_tile, _round_up(B, 8))
    B_pad = _round_up(B, bt)
    # v7x megacore: if a single batch tile could be split across both
    # TensorCores, halve it so the "parallel" axis has extent >= 2.
    if B_pad // bt == 1 and bt >= 16 and bt % 16 == 0:
        bt //= 2
    Tc = max(1, min(time_chunk, T))
    T_pad = _round_up(T, Tc)

    x_dtype = jnp.dtype(param_dtype)
    w_bytes = jnp.dtype(param_dtype).itemsize

    # Cast (and pad only if needed) directly in the compute dtype.
    data_x = data.astype(x_dtype)
    if (T_pad, B_pad, I_pad) != (T, B, I):
        data_x = jnp.pad(data_x,
                         ((0, T_pad - T), (0, B_pad - B), (0, I_pad - I)))

    def pad2(a, rows, cols):
        return jnp.pad(a, ((0, rows - a.shape[0]), (0, cols - a.shape[1])))

    # Fused + padded weights (matmul weights in param_dtype; biases and the
    # threshold/decay vectors stay f32).
    W_i = pad2(params["W_i"], I_pad, H_pad).astype(param_dtype)
    W_g_a = jnp.concatenate(
        [pad2(params[k], H_pad, H_pad) for k in ("W_r_a", "W_z_a", "W_c_a")],
        axis=1).astype(param_dtype)
    W_rz_h = jnp.concatenate(
        [pad2(params[k], H_pad, H_pad) for k in ("W_r_h", "W_z_h")],
        axis=1).astype(param_dtype)
    W_c_h = pad2(params["W_c_h"], H_pad, H_pad).astype(param_dtype)
    W_o = pad2(params["W_o"], H_pad, O_pad).astype(param_dtype)
    b_i = pad2(params["b_i"], 1, H_pad)
    b_g = jnp.concatenate(
        [pad2(params[k], 1, H_pad) for k in ("b_r", "b_z", "b_c")], axis=1)
    b_o = pad2(params["b_o"], 1, O_pad)
    tresh = pad2(params["tresh"], 1, H_pad)
    decay = pad2(params["decay"], 1, H_pad)

    x_spec = pl.BlockSpec((Tc, bt, I_pad), lambda b, t: (t, b, 0))
    # Constant block index -> VMEM-resident across the whole time loop;
    # single-buffered since re-fetching never happens.
    res = lambda shape: pl.BlockSpec(shape, lambda b, t: (0, 0),
                                     pipeline_mode=pl.Buffered(1))

    kernel = functools.partial(pgltm_kernel, t_total=T)

    out = pl.pallas_call(
        kernel,
        grid=(B_pad // bt, T_pad // Tc),
        in_specs=[
            x_spec,
            res((I_pad, H_pad)), res((1, H_pad)),
            res((H_pad, 3 * H_pad)), res((1, 3 * H_pad)),
            res((H_pad, 2 * H_pad)),
            res((H_pad, H_pad)),
            res((1, H_pad)), res((1, H_pad)),
            res((H_pad, O_pad)), res((1, O_pad)),
        ],
        out_specs=pl.BlockSpec((bt, O_pad), lambda b, t: (b, 0)),
        out_shape=jax.ShapeDtypeStruct((B_pad, O_pad), jnp.float32),
        scratch_shapes=[
            pltpu.VMEM((bt, H_pad), jnp.float32),   # hidden carry
            pltpu.VMEM((bt, H_pad), jnp.float32),   # potential carry
        ],
        compiler_params=pltpu.CompilerParams(
            # Batch tiles are independent (megacore-parallel); the time axis
            # carries state in scratch and must stay sequential.
            dimension_semantics=("parallel", "arbitrary"),
            vmem_limit_bytes=_vmem_limit_bytes(
                I_pad, H_pad, O_pad, bt, Tc, w_bytes, x_dtype.itemsize),
        ),
    )(data_x, W_i, b_i, W_g_a, b_g, W_rz_h, W_c_h, tresh, decay, W_o, b_o)
    return out[:B, :O]


# ----------------------------------------------------------------------------
# Parameter setup (plain JAX glue) -- deterministic synthetic init.
# ----------------------------------------------------------------------------
def scaled_bell_capped(key, n, center, sigma):
    v = sigma * jax.random.normal(key, (n,), dtype=jnp.float32)
    v = jnp.clip(v, -2.0 * sigma, 2.0 * sigma)
    return (center + v).reshape(1, n)


def linear_init(key, fan_in, fan_out):
    # PyTorch nn.Linear default init; stored transposed as [in, out].
    kw, kb = jax.random.split(key)
    bound = 1.0 / jnp.sqrt(fan_in)
    w = jax.random.uniform(kw, (fan_in, fan_out), jnp.float32, -bound, bound)
    b = jax.random.uniform(kb, (1, fan_out), jnp.float32, -bound, bound)
    return w, b


def init_params(key, input_size, hidden_size, output_size):
    ks = jax.random.split(key, 7)
    W_i, b_i = linear_init(ks[0], input_size, hidden_size)
    W_r, b_r = linear_init(ks[1], 2 * hidden_size, hidden_size)
    W_z, b_z = linear_init(ks[2], 2 * hidden_size, hidden_size)
    W_c, b_c = linear_init(ks[3], 2 * hidden_size, hidden_size)
    W_o, b_o = linear_init(ks[4], hidden_size, output_size)
    return {
        "W_i": W_i, "b_i": b_i,
        "W_r_a": W_r[:hidden_size], "W_r_h": W_r[hidden_size:], "b_r": b_r,
        "W_z_a": W_z[:hidden_size], "W_z_h": W_z[hidden_size:], "b_z": b_z,
        "W_c_a": W_c[:hidden_size], "W_c_h": W_c[hidden_size:], "b_c": b_c,
        "W_o": W_o, "b_o": b_o,
        "tresh": scaled_bell_capped(ks[5], hidden_size, 1.0, 0.25),
        "decay": scaled_bell_capped(ks[6], hidden_size, 0.9, 0.05),
    }


def pgltm_reference(data, p):
    """Pure-JAX reference mirroring PGLTM.forward (PGLU loop + fc_out)."""
    T, B, _ = data.shape
    H = p["W_i"].shape[1]
    dot = functools.partial(jnp.dot, precision=jax.lax.Precision.HIGHEST)
    h = jnp.zeros((B, H), jnp.float32)
    pot = jnp.zeros((B, H), jnp.float32)
    for t in range(T):
        x = data[t]
        processed = dot(x, p["W_i"]) + p["b_i"]
        potential = pot + processed
        gated = jnp.maximum(potential - p["tresh"], 0.0)
        gated_bool = (gated > 0.0).astype(jnp.float32)
        activated = gated_bool * potential
        non_gated = potential * (1.0 - gated_bool)
        pot = non_gated * p["decay"]
        r = jax.nn.sigmoid(dot(activated, p["W_r_a"]) + dot(h, p["W_r_h"]) + p["b_r"])
        z = jax.nn.sigmoid(dot(activated, p["W_z_a"]) + dot(h, p["W_z_h"]) + p["b_z"])
        n = jnp.tanh(dot(activated, p["W_c_a"]) + dot(r * h, p["W_c_h"]) + p["b_c"])
        h = (1.0 - z) * h + z * n
    return dot(h, p["W_o"]) + p["b_o"]


if __name__ == "__main__":
    T, BATCH, INPUT_SIZE, HIDDEN, OUTPUT = 8, 8, 16, 32, 8

    key = jax.random.PRNGKey(0)
    k_data, k_params = jax.random.split(key)
    data = jax.random.normal(k_data, (T, BATCH, INPUT_SIZE), jnp.float32)
    params = init_params(k_params, INPUT_SIZE, HIDDEN, OUTPUT)

    # Default (bf16 weights/inputs, f32 accumulation) path.  Smoke test only:
    # the hard threshold compare (treshed > 0) can legitimately flip for
    # potentials that round across the threshold in bf16.
    logits_bf16 = jax.block_until_ready(pgltm_forward(data, params))
    assert logits_bf16.shape == (BATCH, OUTPUT)
    assert bool(jnp.all(jnp.isfinite(logits_bf16)))

    # f32-weight path: tight numerical check against the pure-JAX reference.
    logits_f32 = jax.block_until_ready(
        pgltm_forward(data, params, param_dtype=jnp.float32))
    logits_ref = pgltm_reference(data, params)
    err = float(jnp.max(jnp.abs(logits_f32 - logits_ref)))
    assert jnp.allclose(logits_f32, logits_ref, atol=1e-4, rtol=1e-4), err

    print("KERNEL_OK")
</pallas_src>

<mosaic_0001>
module attributes {stable_mosaic.version = 11 : i64} {
  func.func @pgltm_kernel(%arg0: i32, %arg1: i32, %arg2: memref<8x8x128xbf16, #tpu.memory_space<vmem>>, %arg3: memref<128x128xbf16, #tpu.memory_space<vmem>>, %arg4: memref<1x128xf32, #tpu.memory_space<vmem>>, %arg5: memref<128x384xbf16, #tpu.memory_space<vmem>>, %arg6: memref<1x384xf32, #tpu.memory_space<vmem>>, %arg7: memref<128x256xbf16, #tpu.memory_space<vmem>>, %arg8: memref<128x128xbf16, #tpu.memory_space<vmem>>, %arg9: memref<1x128xf32, #tpu.memory_space<vmem>>, %arg10: memref<1x128xf32, #tpu.memory_space<vmem>>, %arg11: memref<128x128xbf16, #tpu.memory_space<vmem>>, %arg12: memref<1x128xf32, #tpu.memory_space<vmem>>, %arg13: memref<8x128xf32, #tpu.memory_space<vmem>>, %arg14: memref<8x128xf32, #tpu.memory_space<vmem>>, %arg15: memref<8x128xf32, #tpu.memory_space<vmem>>) attributes {dimension_semantics = [#tpu.dimension_semantics<parallel>, #tpu.dimension_semantics<arbitrary>], iteration_bounds = array<i64: 1, 1>, scalar_prefetch = 0 : i64, scratch_operands = 2 : i64, tpu.core_type = #tpu.core_type<tc>, window_params = [{transform_indices = @transform_0, window_bounds = array<i64: 8, 8, 128>}, {pipeline_mode = #tpu.pipeline_mode<synchronous>, transform_indices = @transform_1, window_bounds = array<i64: 128, 128>}, {pipeline_mode = #tpu.pipeline_mode<synchronous>, transform_indices = @transform_2, window_bounds = array<i64: 1, 128>}, {pipeline_mode = #tpu.pipeline_mode<synchronous>, transform_indices = @transform_3, window_bounds = array<i64: 128, 384>}, {pipeline_mode = #tpu.pipeline_mode<synchronous>, transform_indices = @transform_4, window_bounds = array<i64: 1, 384>}, {pipeline_mode = #tpu.pipeline_mode<synchronous>, transform_indices = @transform_5, window_bounds = array<i64: 128, 256>}, {pipeline_mode = #tpu.pipeline_mode<synchronous>, transform_indices = @transform_6, window_bounds = array<i64: 128, 128>}, {pipeline_mode = #tpu.pipeline_mode<synchronous>, transform_indices = @transform_7, window_bounds = array<i64: 1, 128>}, {pipeline_mode = #tpu.pipeline_mode<synchronous>, transform_indices = @transform_8, window_bounds = array<i64: 1, 128>}, {pipeline_mode = #tpu.pipeline_mode<synchronous>, transform_indices = @transform_9, window_bounds = array<i64: 128, 128>}, {pipeline_mode = #tpu.pipeline_mode<synchronous>, transform_indices = @transform_10, window_bounds = array<i64: 1, 128>}, {transform_indices = @transform_11, window_bounds = array<i64: 8, 128>}]} {
    %c0_i32 = arith.constant 0 : i32
    %0 = arith.cmpi eq, %arg1, %c0_i32 : i32
    %1 = arith.extui %0 : i1 to i32
    %c0_i32_0 = arith.constant 0 : i32
    %2 = arith.cmpi ne, %1, %c0_i32_0 : i32
    scf.if %2 {
      %cst_162 = arith.constant 0.000000e+00 : f32
      %438 = vector.broadcast %cst_162 : f32 to vector<8x128xf32>
      %c0_163 = arith.constant 0 : index
      %c0_164 = arith.constant 0 : index
      %439 = vector.load %arg14[%c0_163, %c0_164] : memref<8x128xf32, #tpu.memory_space<vmem>>, vector<8x128xf32>
      tpu.vector_store %arg14[%c0_163, %c0_164], %438 {strides = array<i32>} : memref<8x128xf32, #tpu.memory_space<vmem>>, vector<8x128xf32>,
      %cst_165 = arith.constant 0.000000e+00 : f32
      %440 = vector.broadcast %cst_165 : f32 to vector<8x128xf32>
      %c0_166 = arith.constant 0 : index
      %c0_167 = arith.constant 0 : index
      %441 = vector.load %arg15[%c0_166, %c0_167] : memref<8x128xf32, #tpu.memory_space<vmem>>, vector<8x128xf32>
      tpu.vector_store %arg15[%c0_166, %c0_167], %440 {strides = array<i32>} : memref<8x128xf32, #tpu.memory_space<vmem>>, vector<8x128xf32>,
    } else {
    }
    %c0 = arith.constant 0 : index
    %c0_1 = arith.constant 0 : index
    %3 = vector.load %arg4[%c0, %c0_1] : memref<1x128xf32, #tpu.memory_space<vmem>>, vector<1x128xf32>
    %c0_2 = arith.constant 0 : index
    %c0_3 = arith.constant 0 : index
    %4 = vector.load %arg6[%c0_2, %c0_3] : memref<1x384xf32, #tpu.memory_space<vmem>>, vector<1x384xf32>
    %c0_4 = arith.constant 0 : index
    %c0_5 = arith.constant 0 : index
    %5 = vector.load %arg9[%c0_4, %c0_5] : memref<1x128xf32, #tpu.memory_space<vmem>>, vector<1x128xf32>
    %c0_6 = arith.constant 0 : index
    %c0_7 = arith.constant 0 : index
    %6 = vector.load %arg10[%c0_6, %c0_7] : memref<1x128xf32, #tpu.memory_space<vmem>>, vector<1x128xf32>
    %c0_8 = arith.constant 0 : index
    %c0_9 = arith.constant 0 : index
    %7 = vector.load %arg14[%c0_8, %c0_9] : memref<8x128xf32, #tpu.memory_space<vmem>>, vector<8x128xf32>
    %c0_10 = arith.constant 0 : index
    %c0_11 = arith.constant 0 : index
    %8 = vector.load %arg15[%c0_10, %c0_11] : memref<8x128xf32, #tpu.memory_space<vmem>>, vector<8x128xf32>
    %c0_12 = arith.constant 0 : index
    %c0_13 = arith.constant 0 : index
    %c0_14 = arith.constant 0 : index
    %9 = vector.load %arg2[%c0_12, %c0_13, %c0_14] : memref<8x8x128xbf16, #tpu.memory_space<vmem>>, vector<1x8x128xbf16>
    %10 = vector.shape_cast %9 : vector<1x8x128xbf16> to vector<8x128xbf16>
    %c0_15 = arith.constant 0 : index
    %c0_16 = arith.constant 0 : index
    %11 = vector.load %arg3[%c0_15, %c0_16] : memref<128x128xbf16, #tpu.memory_space<vmem>>, vector<128x128xbf16>
    %cst = arith.constant dense<0.000000e+00> : vector<8x128xf32>
    %12 = tpu.matmul %10, %11, %cst {dimension_numbers = #tpu.dot_dimension_numbers<[1], [0], [0], [1], [0, 0, 1, 1], [], []>} : vector<8x128xbf16>, vector<128x128xbf16>, vector<8x128xf32> -> vector<8x128xf32>
    %13 = vector.broadcast %3 : vector<1x128xf32> to vector<8x128xf32>
    %14 = arith.addf %12, %13 : vector<8x128xf32>
    %15 = arith.addf %8, %14 : vector<8x128xf32>
    %16 = vector.broadcast %5 : vector<1x128xf32> to vector<8x128xf32>
    %17 = arith.subf %15, %16 : vector<8x128xf32>
    %cst_17 = arith.constant 0.000000e+00 : f32
    %18 = vector.broadcast %cst_17 : f32 to vector<8x128xf32>
    %19 = arith.cmpf ogt, %17, %18 : vector<8x128xf32>
    %20 = arith.extui %19 : vector<8x128xi1> to vector<8x128xi32>
    %21 = arith.sitofp %20 : vector<8x128xi32> to vector<8x128xf32>
    %22 = arith.mulf %21, %15 : vector<8x128xf32>
    %23 = arith.subf %15, %22 : vector<8x128xf32>
    %24 = vector.broadcast %6 : vector<1x128xf32> to vector<8x128xf32>
    %25 = arith.mulf %23, %24 : vector<8x128xf32>
    %26 = arith.truncf %22 : vector<8x128xf32> to vector<8x128xbf16>
    %c0_18 = arith.constant 0 : index
    %c0_19 = arith.constant 0 : index
    %27 = vector.load %arg5[%c0_18, %c0_19] : memref<128x384xbf16, #tpu.memory_space<vmem>>, vector<128x384xbf16>
    %cst_20 = arith.constant dense<0.000000e+00> : vector<8x384xf32>
    %28 = tpu.matmul %26, %27, %cst_20 {dimension_numbers = #tpu.dot_dimension_numbers<[1], [0], [0], [1], [0, 0, 1, 1], [], []>} : vector<8x128xbf16>, vector<128x384xbf16>, vector<8x384xf32> -> vector<8x384xf32>
    %29 = vector.broadcast %4 : vector<1x384xf32> to vector<8x384xf32>
    %30 = arith.addf %28, %29 : vector<8x384xf32>
    %31 = arith.truncf %7 : vector<8x128xf32> to vector<8x128xbf16>
    %c0_21 = arith.constant 0 : index
    %c0_22 = arith.constant 0 : index
    %32 = vector.load %arg7[%c0_21, %c0_22] : memref<128x256xbf16, #tpu.memory_space<vmem>>, vector<128x256xbf16>
    %cst_23 = arith.constant dense<0.000000e+00> : vector<8x256xf32>
    %33 = tpu.matmul %31, %32, %cst_23 {dimension_numbers = #tpu.dot_dimension_numbers<[1], [0], [0], [1], [0, 0, 1, 1], [], []>} : vector<8x128xbf16>, vector<128x256xbf16>, vector<8x256xf32> -> vector<8x256xf32>
    %34 = vector.extract_strided_slice %30 {offsets = [0, 0], sizes = [8, 128], strides = [1, 1]} : vector<8x384xf32> to vector<8x128xf32>
    %35 = vector.extract_strided_slice %33 {offsets = [0, 0], sizes = [8, 128], strides = [1, 1]} : vector<8x256xf32> to vector<8x128xf32>
    %36 = arith.addf %34, %35 : vector<8x128xf32>
    %37 = arith.negf %36 : vector<8x128xf32>
    %38 = math.exp %37 : vector<8x128xf32>
    %cst_24 = arith.constant 1.000000e+00 : f32
    %39 = vector.broadcast %cst_24 : f32 to vector<8x128xf32>
    %40 = arith.addf %39, %38 : vector<8x128xf32>
    %41 = arith.divf %39, %40 : vector<8x128xf32>
    %42 = vector.extract_strided_slice %30 {offsets = [0, 128], sizes = [8, 128], strides = [1, 1]} : vector<8x384xf32> to vector<8x128xf32>
    %43 = vector.extract_strided_slice %33 {offsets = [0, 128], sizes = [8, 128], strides = [1, 1]} : vector<8x256xf32> to vector<8x128xf32>
    %44 = arith.addf %42, %43 : vector<8x128xf32>
    %45 = arith.negf %44 : vector<8x128xf32>
    %46 = math.exp %45 : vector<8x128xf32>
    %cst_25 = arith.constant 1.000000e+00 : f32
    %47 = vector.broadcast %cst_25 : f32 to vector<8x128xf32>
    %48 = arith.addf %47, %46 : vector<8x128xf32>
    %49 = arith.divf %47, %48 : vector<8x128xf32>
    %50 = vector.extract_strided_slice %30 {offsets = [0, 256], sizes = [8, 128], strides = [1, 1]} : vector<8x384xf32> to vector<8x128xf32>
    %51 = arith.mulf %41, %7 : vector<8x128xf32>
    %52 = arith.truncf %51 : vector<8x128xf32> to vector<8x128xbf16>
    %c0_26 = arith.constant 0 : index
    %c0_27 = arith.constant 0 : index
    %53 = vector.load %arg8[%c0_26, %c0_27] : memref<128x128xbf16, #tpu.memory_space<vmem>>, vector<128x128xbf16>
    %cst_28 = arith.constant dense<0.000000e+00> : vector<8x128xf32>
    %54 = tpu.matmul %52, %53, %cst_28 {dimension_numbers = #tpu.dot_dimension_numbers<[1], [0], [0], [1], [0, 0, 1, 1], [], []>} : vector<8x128xbf16>, vector<128x128xbf16>, vector<8x128xf32> -> vector<8x128xf32>
    %55 = arith.addf %50, %54 : vector<8x128xf32>
    %56 = math.tanh %55 : vector<8x128xf32>
    %cst_29 = arith.constant 1.000000e+00 : f32
    %57 = vector.broadcast %cst_29 : f32 to vector<8x128xf32>
    %58 = arith.subf %57, %49 : vector<8x128xf32>
    %59 = arith.mulf %58, %7 : vector<8x128xf32>
    %60 = arith.mulf %49, %56 : vector<8x128xf32>
    %61 = arith.addf %59, %60 : vector<8x128xf32>
    %c1 = arith.constant 1 : index
    %c0_30 = arith.constant 0 : index
    %c0_31 = arith.constant 0 : index
    %62 = vector.load %arg2[%c1, %c0_30, %c0_31] : memref<8x8x128xbf16, #tpu.memory_space<vmem>>, vector<1x8x128xbf16>
    %63 = vector.shape_cast %62 : vector<1x8x128xbf16> to vector<8x128xbf16>
    %c0_32 = arith.constant 0 : index
    %c0_33 = arith.constant 0 : index
    %64 = vector.load %arg3[%c0_32, %c0_33] : memref<128x128xbf16, #tpu.memory_space<vmem>>, vector<128x128xbf16>
    %cst_34 = arith.constant dense<0.000000e+00> : vector<8x128xf32>
    %65 = tpu.matmul %63, %64, %cst_34 {dimension_numbers = #tpu.dot_dimension_numbers<[1], [0], [0], [1], [0, 0, 1, 1], [], []>} : vector<8x128xbf16>, vector<128x128xbf16>, vector<8x128xf32> -> vector<8x128xf32>
    %66 = vector.broadcast %3 : vector<1x128xf32> to vector<8x128xf32>
    %67 = arith.addf %65, %66 : vector<8x128xf32>
    %68 = arith.addf %25, %67 : vector<8x128xf32>
    %69 = vector.broadcast %5 : vector<1x128xf32> to vector<8x128xf32>
    %70 = arith.subf %68, %69 : vector<8x128xf32>
    %cst_35 = arith.constant 0.000000e+00 : f32
    %71 = vector.broadcast %cst_35 : f32 to vector<8x128xf32>
    %72 = arith.cmpf ogt, %70, %71 : vector<8x128xf32>
    %73 = arith.extui %72 : vector<8x128xi1> to vector<8x128xi32>
    %74 = arith.sitofp %73 : vector<8x128xi32> to vector<8x128xf32>
    %75 = arith.mulf %74, %68 : vector<8x128xf32>
    %76 = arith.subf %68, %75 : vector<8x128xf32>
    %77 = vector.broadcast %6 : vector<1x128xf32> to vector<8x128xf32>
    %78 = arith.mulf %76, %77 : vector<8x128xf32>
    %79 = arith.truncf %75 : vector<8x128xf32> to vector<8x128xbf16>
    %c0_36 = arith.constant 0 : index
    %c0_37 = arith.constant 0 : index
    %80 = vector.load %arg5[%c0_36, %c0_37] : memref<128x384xbf16, #tpu.memory_space<vmem>>, vector<128x384xbf16>
    %cst_38 = arith.constant dense<0.000000e+00> : vector<8x384xf32>
    %81 = tpu.matmul %79, %80, %cst_38 {dimension_numbers = #tpu.dot_dimension_numbers<[1], [0], [0], [1], [0, 0, 1, 1], [], []>} : vector<8x128xbf16>, vector<128x384xbf16>, vector<8x384xf32> -> vector<8x384xf32>
    %82 = vector.broadcast %4 : vector<1x384xf32> to vector<8x384xf32>
    %83 = arith.addf %81, %82 : vector<8x384xf32>
    %84 = arith.truncf %61 : vector<8x128xf32> to vector<8x128xbf16>
    %c0_39 = arith.constant 0 : index
    %c0_40 = arith.constant 0 : index
    %85 = vector.load %arg7[%c0_39, %c0_40] : memref<128x256xbf16, #tpu.memory_space<vmem>>, vector<128x256xbf16>
    %cst_41 = arith.constant dense<0.000000e+00> : vector<8x256xf32>
    %86 = tpu.matmul %84, %85, %cst_41 {dimension_numbers = #tpu.dot_dimension_numbers<[1], [0], [0], [1], [0, 0, 1, 1], [], []>} : vector<8x128xbf16>, vector<128x256xbf16>, vector<8x256xf32> -> vector<8x256xf32>
    %87 = vector.extract_strided_slice %83 {offsets = [0, 0], sizes = [8, 128], strides = [1, 1]} : vector<8x384xf32> to vector<8x128xf32>
    %88 = vector.extract_strided_slice %86 {offsets = [0, 0], sizes = [8, 128], strides = [1, 1]} : vector<8x256xf32> to vector<8x128xf32>
    %89 = arith.addf %87, %88 : vector<8x128xf32>
    %90 = arith.negf %89 : vector<8x128xf32>
    %91 = math.exp %90 : vector<8x128xf32>
    %cst_42 = arith.constant 1.000000e+00 : f32
    %92 = vector.broadcast %cst_42 : f32 to vector<8x128xf32>
    %93 = arith.addf %92, %91 : vector<8x128xf32>
    %94 = arith.divf %92, %93 : vector<8x128xf32>
    %95 = vector.extract_strided_slice %83 {offsets = [0, 128], sizes = [8, 128], strides = [1, 1]} : vector<8x384xf32> to vector<8x128xf32>
    %96 = vector.extract_strided_slice %86 {offsets = [0, 128], sizes = [8, 128], strides = [1, 1]} : vector<8x256xf32> to vector<8x128xf32>
    %97 = arith.addf %95, %96 : vector<8x128xf32>
    %98 = arith.negf %97 : vector<8x128xf32>
    %99 = math.exp %98 : vector<8x128xf32>
    %cst_43 = arith.constant 1.000000e+00 : f32
    %100 = vector.broadcast %cst_43 : f32 to vector<8x128xf32>
    %101 = arith.addf %100, %99 : vector<8x128xf32>
    %102 = arith.divf %100, %101 : vector<8x128xf32>
    %103 = vector.extract_strided_slice %83 {offsets = [0, 256], sizes = [8, 128], strides = [1, 1]} : vector<8x384xf32> to vector<8x128xf32>
    %104 = arith.mulf %94, %61 : vector<8x128xf32>
    %105 = arith.truncf %104 : vector<8x128xf32> to vector<8x128xbf16>
    %c0_44 = arith.constant 0 : index
    %c0_45 = arith.constant 0 : index
    %106 = vector.load %arg8[%c0_44, %c0_45] : memref<128x128xbf16, #tpu.memory_space<vmem>>, vector<128x128xbf16>
    %cst_46 = arith.constant dense<0.000000e+00> : vector<8x128xf32>
    %107 = tpu.matmul %105, %106, %cst_46 {dimension_numbers = #tpu.dot_dimension_numbers<[1], [0], [0], [1], [0, 0, 1, 1], [], []>} : vector<8x128xbf16>, vector<128x128xbf16>, vector<8x128xf32> -> vector<8x128xf32>
    %108 = arith.addf %103, %107 : vector<8x128xf32>
    %109 = math.tanh %108 : vector<8x128xf32>
    %cst_47 = arith.constant 1.000000e+00 : f32
    %110 = vector.broadcast %cst_47 : f32 to vector<8x128xf32>
    %111 = arith.subf %110, %102 : vector<8x128xf32>
    %112 = arith.mulf %111, %61 : vector<8x128xf32>
    %113 = arith.mulf %102, %109 : vector<8x128xf32>
    %114 = arith.addf %112, %113 : vector<8x128xf32>
    %c2 = arith.constant 2 : index
    %c0_48 = arith.constant 0 : index
    %c0_49 = arith.constant 0 : index
    %115 = vector.load %arg2[%c2, %c0_48, %c0_49] : memref<8x8x128xbf16, #tpu.memory_space<vmem>>, vector<1x8x128xbf16>
    %116 = vector.shape_cast %115 : vector<1x8x128xbf16> to vector<8x128xbf16>
    %c0_50 = arith.constant 0 : index
    %c0_51 = arith.constant 0 : index
    %117 = vector.load %arg3[%c0_50, %c0_51] : memref<128x128xbf16, #tpu.memory_space<vmem>>, vector<128x128xbf16>
    %cst_52 = arith.constant dense<0.000000e+00> : vector<8x128xf32>
    %118 = tpu.matmul %116, %117, %cst_52 {dimension_numbers = #tpu.dot_dimension_numbers<[1], [0], [0], [1], [0, 0, 1, 1], [], []>} : vector<8x128xbf16>, vector<128x128xbf16>, vector<8x128xf32> -> vector<8x128xf32>
    %119 = vector.broadcast %3 : vector<1x128xf32> to vector<8x128xf32>
    %120 = arith.addf %118, %119 : vector<8x128xf32>
    %121 = arith.addf %78, %120 : vector<8x128xf32>
    %122 = vector.broadcast %5 : vector<1x128xf32> to vector<8x128xf32>
    %123 = arith.subf %121, %122 : vector<8x128xf32>
    %cst_53 = arith.constant 0.000000e+00 : f32
    %124 = vector.broadcast %cst_53 : f32 to vector<8x128xf32>
    %125 = arith.cmpf ogt, %123, %124 : vector<8x128xf32>
    %126 = arith.extui %125 : vector<8x128xi1> to vector<8x128xi32>
    %127 = arith.sitofp %126 : vector<8x128xi32> to vector<8x128xf32>
    %128 = arith.mulf %127, %121 : vector<8x128xf32>
    %129 = arith.subf %121, %128 : vector<8x128xf32>
    %130 = vector.broadcast %6 : vector<1x128xf32> to vector<8x128xf32>
    %131 = arith.mulf %129, %130 : vector<8x128xf32>
    %132 = arith.truncf %128 : vector<8x128xf32> to vector<8x128xbf16>
    %c0_54 = arith.constant 0 : index
    %c0_55 = arith.constant 0 : index
    %133 = vector.load %arg5[%c0_54, %c0_55] : memref<128x384xbf16, #tpu.memory_space<vmem>>, vector<128x384xbf16>
    %cst_56 = arith.constant dense<0.000000e+00> : vector<8x384xf32>
    %134 = tpu.matmul %132, %133, %cst_56 {dimension_numbers = #tpu.dot_dimension_numbers<[1], [0], [0], [1], [0, 0, 1, 1], [], []>} : vector<8x128xbf16>, vector<128x384xbf16>, vector<8x384xf32> -> vector<8x384xf32>
    %135 = vector.broadcast %4 : vector<1x384xf32> to vector<8x384xf32>
    %136 = arith.addf %134, %135 : vector<8x384xf32>
    %137 = arith.truncf %114 : vector<8x128xf32> to vector<8x128xbf16>
    %c0_57 = arith.constant 0 : index
    %c0_58 = arith.constant 0 : index
    %138 = vector.load %arg7[%c0_57, %c0_58] : memref<128x256xbf16, #tpu.memory_space<vmem>>, vector<128x256xbf16>
    %cst_59 = arith.constant dense<0.000000e+00> : vector<8x256xf32>
    %139 = tpu.matmul %137, %138, %cst_59 {dimension_numbers = #tpu.dot_dimension_numbers<[1], [0], [0], [1], [0, 0, 1, 1], [], []>} : vector<8x128xbf16>, vector<128x256xbf16>, vector<8x256xf32> -> vector<8x256xf32>
    %140 = vector.extract_strided_slice %136 {offsets = [0, 0], sizes = [8, 128], strides = [1, 1]} : vector<8x384xf32> to vector<8x128xf32>
    %141 = vector.extract_strided_slice %139 {offsets = [0, 0], sizes = [8, 128], strides = [1, 1]} : vector<8x256xf32> to vector<8x128xf32>
    %142 = arith.addf %140, %141 : vector<8x128xf32>
    %143 = arith.negf %142 : vector<8x128xf32>
    %144 = math.exp %143 : vector<8x128xf32>
    %cst_60 = arith.constant 1.000000e+00 : f32
    %145 = vector.broadcast %cst_60 : f32 to vector<8x128xf32>
    %146 = arith.addf %145, %144 : vector<8x128xf32>
    %147 = arith.divf %145, %146 : vector<8x128xf32>
    %148 = vector.extract_strided_slice %136 {offsets = [0, 128], sizes = [8, 128], strides = [1, 1]} : vector<8x384xf32> to vector<8x128xf32>
    %149 = vector.extract_strided_slice %139 {offsets = [0, 128], sizes = [8, 128], strides = [1, 1]} : vector<8x256xf32> to vector<8x128xf32>
    %150 = arith.addf %148, %149 : vector<8x128xf32>
    %151 = arith.negf %150 : vector<8x128xf32>
    %152 = math.exp %151 : vector<8x128xf32>
    %cst_61 = arith.constant 1.000000e+00 : f32
    %153 = vector.broadcast %cst_61 : f32 to vector<8x128xf32>
    %154 = arith.addf %153, %152 : vector<8x128xf32>
    %155 = arith.divf %153, %154 : vector<8x128xf32>
    %156 = vector.extract_strided_slice %136 {offsets = [0, 256], sizes = [8, 128], strides = [1, 1]} : vector<8x384xf32> to vector<8x128xf32>
    %157 = arith.mulf %147, %114 : vector<8x128xf32>
    %158 = arith.truncf %157 : vector<8x128xf32> to vector<8x128xbf16>
    %c0_62 = arith.constant 0 : index
    %c0_63 = arith.constant 0 : index
    %159 = vector.load %arg8[%c0_62, %c0_63] : memref<128x128xbf16, #tpu.memory_space<vmem>>, vector<128x128xbf16>
    %cst_64 = arith.constant dense<0.000000e+00> : vector<8x128xf32>
    %160 = tpu.matmul %158, %159, %cst_64 {dimension_numbers = #tpu.dot_dimension_numbers<[1], [0], [0], [1], [0, 0, 1, 1], [], []>} : vector<8x128xbf16>, vector<128x128xbf16>, vector<8x128xf32> -> vector<8x128xf32>
    %161 = arith.addf %156, %160 : vector<8x128xf32>
    %162 = math.tanh %161 : vector<8x128xf32>
    %cst_65 = arith.constant 1.000000e+00 : f32
    %163 = vector.broadcast %cst_65 : f32 to vector<8x128xf32>
    %164 = arith.subf %163, %155 : vector<8x128xf32>
    %165 = arith.mulf %164, %114 : vector<8x128xf32>
    %166 = arith.mulf %155, %162 : vector<8x128xf32>
    %167 = arith.addf %165, %166 : vector<8x128xf32>
    %c3 = arith.constant 3 : index
    %c0_66 = arith.constant 0 : index
    %c0_67 = arith.constant 0 : index
    %168 = vector.load %arg2[%c3, %c0_66, %c0_67] : memref<8x8x128xbf16, #tpu.memory_space<vmem>>, vector<1x8x128xbf16>
    %169 = vector.shape_cast %168 : vector<1x8x128xbf16> to vector<8x128xbf16>
    %c0_68 = arith.constant 0 : index
    %c0_69 = arith.constant 0 : index
    %170 = vector.load %arg3[%c0_68, %c0_69] : memref<128x128xbf16, #tpu.memory_space<vmem>>, vector<128x128xbf16>
    %cst_70 = arith.constant dense<0.000000e+00> : vector<8x128xf32>
    %171 = tpu.matmul %169, %170, %cst_70 {dimension_numbers = #tpu.dot_dimension_numbers<[1], [0], [0], [1], [0, 0, 1, 1], [], []>} : vector<8x128xbf16>, vector<128x128xbf16>, vector<8x128xf32> -> vector<8x128xf32>
    %172 = vector.broadcast %3 : vector<1x128xf32> to vector<8x128xf32>
    %173 = arith.addf %171, %172 : vector<8x128xf32>
    %174 = arith.addf %131, %173 : vector<8x128xf32>
    %175 = vector.broadcast %5 : vector<1x128xf32> to vector<8x128xf32>
    %176 = arith.subf %174, %175 : vector<8x128xf32>
    %cst_71 = arith.constant 0.000000e+00 : f32
    %177 = vector.broadcast %cst_71 : f32 to vector<8x128xf32>
    %178 = arith.cmpf ogt, %176, %177 : vector<8x128xf32>
    %179 = arith.extui %178 : vector<8x128xi1> to vector<8x128xi32>
    %180 = arith.sitofp %179 : vector<8x128xi32> to vector<8x128xf32>
    %181 = arith.mulf %180, %174 : vector<8x128xf32>
    %182 = arith.subf %174, %181 : vector<8x128xf32>
    %183 = vector.broadcast %6 : vector<1x128xf32> to vector<8x128xf32>
    %184 = arith.mulf %182, %183 : vector<8x128xf32>
    %185 = arith.truncf %181 : vector<8x128xf32> to vector<8x128xbf16>
    %c0_72 = arith.constant 0 : index
    %c0_73 = arith.constant 0 : index
    %186 = vector.load %arg5[%c0_72, %c0_73] : memref<128x384xbf16, #tpu.memory_space<vmem>>, vector<128x384xbf16>
    %cst_74 = arith.constant dense<0.000000e+00> : vector<8x384xf32>
    %187 = tpu.matmul %185, %186, %cst_74 {dimension_numbers = #tpu.dot_dimension_numbers<[1], [0], [0], [1], [0, 0, 1, 1], [], []>} : vector<8x128xbf16>, vector<128x384xbf16>, vector<8x384xf32> -> vector<8x384xf32>
    %188 = vector.broadcast %4 : vector<1x384xf32> to vector<8x384xf32>
    %189 = arith.addf %187, %188 : vector<8x384xf32>
    %190 = arith.truncf %167 : vector<8x128xf32> to vector<8x128xbf16>
    %c0_75 = arith.constant 0 : index
    %c0_76 = arith.constant 0 : index
    %191 = vector.load %arg7[%c0_75, %c0_76] : memref<128x256xbf16, #tpu.memory_space<vmem>>, vector<128x256xbf16>
    %cst_77 = arith.constant dense<0.000000e+00> : vector<8x256xf32>
    %192 = tpu.matmul %190, %191, %cst_77 {dimension_numbers = #tpu.dot_dimension_numbers<[1], [0], [0], [1], [0, 0, 1, 1], [], []>} : vector<8x128xbf16>, vector<128x256xbf16>, vector<8x256xf32> -> vector<8x256xf32>
    %193 = vector.extract_strided_slice %189 {offsets = [0, 0], sizes = [8, 128], strides = [1, 1]} : vector<8x384xf32> to vector<8x128xf32>
    %194 = vector.extract_strided_slice %192 {offsets = [0, 0], sizes = [8, 128], strides = [1, 1]} : vector<8x256xf32> to vector<8x128xf32>
    %195 = arith.addf %193, %194 : vector<8x128xf32>
    %196 = arith.negf %195 : vector<8x128xf32>
    %197 = math.exp %196 : vector<8x128xf32>
    %cst_78 = arith.constant 1.000000e+00 : f32
    %198 = vector.broadcast %cst_78 : f32 to vector<8x128xf32>
    %199 = arith.addf %198, %197 : vector<8x128xf32>
    %200 = arith.divf %198, %199 : vector<8x128xf32>
    %201 = vector.extract_strided_slice %189 {offsets = [0, 128], sizes = [8, 128], strides = [1, 1]} : vector<8x384xf32> to vector<8x128xf32>
    %202 = vector.extract_strided_slice %192 {offsets = [0, 128], sizes = [8, 128], strides = [1, 1]} : vector<8x256xf32> to vector<8x128xf32>
    %203 = arith.addf %201, %202 : vector<8x128xf32>
    %204 = arith.negf %203 : vector<8x128xf32>
    %205 = math.exp %204 : vector<8x128xf32>
    %cst_79 = arith.constant 1.000000e+00 : f32
    %206 = vector.broadcast %cst_79 : f32 to vector<8x128xf32>
    %207 = arith.addf %206, %205 : vector<8x128xf32>
    %208 = arith.divf %206, %207 : vector<8x128xf32>
    %209 = vector.extract_strided_slice %189 {offsets = [0, 256], sizes = [8, 128], strides = [1, 1]} : vector<8x384xf32> to vector<8x128xf32>
    %210 = arith.mulf %200, %167 : vector<8x128xf32>
    %211 = arith.truncf %210 : vector<8x128xf32> to vector<8x128xbf16>
    %c0_80 = arith.constant 0 : index
    %c0_81 = arith.constant 0 : index
    %212 = vector.load %arg8[%c0_80, %c0_81] : memref<128x128xbf16, #tpu.memory_space<vmem>>, vector<128x128xbf16>
    %cst_82 = arith.constant dense<0.000000e+00> : vector<8x128xf32>
    %213 = tpu.matmul %211, %212, %cst_82 {dimension_numbers = #tpu.dot_dimension_numbers<[1], [0], [0], [1], [0, 0, 1, 1], [], []>} : vector<8x128xbf16>, vector<128x128xbf16>, vector<8x128xf32> -> vector<8x128xf32>
    %214 = arith.addf %209, %213 : vector<8x128xf32>
    %215 = math.tanh %214 : vector<8x128xf32>
    %cst_83 = arith.constant 1.000000e+00 : f32
    %216 = vector.broadcast %cst_83 : f32 to vector<8x128xf32>
    %217 = arith.subf %216, %208 : vector<8x128xf32>
    %218 = arith.mulf %217, %167 : vector<8x128xf32>
    %219 = arith.mulf %208, %215 : vector<8x128xf32>
    %220 = arith.addf %218, %219 : vector<8x128xf32>
    %c4 = arith.constant 4 : index
    %c0_84 = arith.constant 0 : index
    %c0_85 = arith.constant 0 : index
    %221 = vector.load %arg2[%c4, %c0_84, %c0_85] : memref<8x8x128xbf16, #tpu.memory_space<vmem>>, vector<1x8x128xbf16>
    %222 = vector.shape_cast %221 : vector<1x8x128xbf16> to vector<8x128xbf16>
    %c0_86 = arith.constant 0 : index
    %c0_87 = arith.constant 0 : index
    %223 = vector.load %arg3[%c0_86, %c0_87] : memref<128x128xbf16, #tpu.memory_space<vmem>>, vector<128x128xbf16>
    %cst_88 = arith.constant dense<0.000000e+00> : vector<8x128xf32>
    %224 = tpu.matmul %222, %223, %cst_88 {dimension_numbers = #tpu.dot_dimension_numbers<[1], [0], [0], [1], [0, 0, 1, 1], [], []>} : vector<8x128xbf16>, vector<128x128xbf16>, vector<8x128xf32> -> vector<8x128xf32>
    %225 = vector.broadcast %3 : vector<1x128xf32> to vector<8x128xf32>
    %226 = arith.addf %224, %225 : vector<8x128xf32>
    %227 = arith.addf %184, %226 : vector<8x128xf32>
    %228 = vector.broadcast %5 : vector<1x128xf32> to vector<8x128xf32>
    %229 = arith.subf %227, %228 : vector<8x128xf32>
    %cst_89 = arith.constant 0.000000e+00 : f32
    %230 = vector.broadcast %cst_89 : f32 to vector<8x128xf32>
    %231 = arith.cmpf ogt, %229, %230 : vector<8x128xf32>
    %232 = arith.extui %231 : vector<8x128xi1> to vector<8x128xi32>
    %233 = arith.sitofp %232 : vector<8x128xi32> to vector<8x128xf32>
    %234 = arith.mulf %233, %227 : vector<8x128xf32>
    %235 = arith.subf %227, %234 : vector<8x128xf32>
    %236 = vector.broadcast %6 : vector<1x128xf32> to vector<8x128xf32>
    %237 = arith.mulf %235, %236 : vector<8x128xf32>
    %238 = arith.truncf %234 : vector<8x128xf32> to vector<8x128xbf16>
    %c0_90 = arith.constant 0 : index
    %c0_91 = arith.constant 0 : index
    %239 = vector.load %arg5[%c0_90, %c0_91] : memref<128x384xbf16, #tpu.memory_space<vmem>>, vector<128x384xbf16>
    %cst_92 = arith.constant dense<0.000000e+00> : vector<8x384xf32>
    %240 = tpu.matmul %238, %239, %cst_92 {dimension_numbers = #tpu.dot_dimension_numbers<[1], [0], [0], [1], [0, 0, 1, 1], [], []>} : vector<8x128xbf16>, vector<128x384xbf16>, vector<8x384xf32> -> vector<8x384xf32>
    %241 = vector.broadcast %4 : vector<1x384xf32> to vector<8x384xf32>
    %242 = arith.addf %240, %241 : vector<8x384xf32>
    %243 = arith.truncf %220 : vector<8x128xf32> to vector<8x128xbf16>
    %c0_93 = arith.constant 0 : index
    %c0_94 = arith.constant 0 : index
    %244 = vector.load %arg7[%c0_93, %c0_94] : memref<128x256xbf16, #tpu.memory_space<vmem>>, vector<128x256xbf16>
    %cst_95 = arith.constant dense<0.000000e+00> : vector<8x256xf32>
    %245 = tpu.matmul %243, %244, %cst_95 {dimension_numbers = #tpu.dot_dimension_numbers<[1], [0], [0], [1], [0, 0, 1, 1], [], []>} : vector<8x128xbf16>, vector<128x256xbf16>, vector<8x256xf32> -> vector<8x256xf32>
    %246 = vector.extract_strided_slice %242 {offsets = [0, 0], sizes = [8, 128], strides = [1, 1]} : vector<8x384xf32> to vector<8x128xf32>
    %247 = vector.extract_strided_slice %245 {offsets = [0, 0], sizes = [8, 128], strides = [1, 1]} : vector<8x256xf32> to vector<8x128xf32>
    %248 = arith.addf %246, %247 : vector<8x128xf32>
    %249 = arith.negf %248 : vector<8x128xf32>
    %250 = math.exp %249 : vector<8x128xf32>
    %cst_96 = arith.constant 1.000000e+00 : f32
    %251 = vector.broadcast %cst_96 : f32 to vector<8x128xf32>
    %252 = arith.addf %251, %250 : vector<8x128xf32>
    %253 = arith.divf %251, %252 : vector<8x128xf32>
    %254 = vector.extract_strided_slice %242 {offsets = [0, 128], sizes = [8, 128], strides = [1, 1]} : vector<8x384xf32> to vector<8x128xf32>
    %255 = vector.extract_strided_slice %245 {offsets = [0, 128], sizes = [8, 128], strides = [1, 1]} : vector<8x256xf32> to vector<8x128xf32>
    %256 = arith.addf %254, %255 : vector<8x128xf32>
    %257 = arith.negf %256 : vector<8x128xf32>
    %258 = math.exp %257 : vector<8x128xf32>
    %cst_97 = arith.constant 1.000000e+00 : f32
    %259 = vector.broadcast %cst_97 : f32 to vector<8x128xf32>
    %260 = arith.addf %259, %258 : vector<8x128xf32>
    %261 = arith.divf %259, %260 : vector<8x128xf32>
    %262 = vector.extract_strided_slice %242 {offsets = [0, 256], sizes = [8, 128], strides = [1, 1]} : vector<8x384xf32> to vector<8x128xf32>
    %263 = arith.mulf %253, %220 : vector<8x128xf32>
    %264 = arith.truncf %263 : vector<8x128xf32> to vector<8x128xbf16>
    %c0_98 = arith.constant 0 : index
    %c0_99 = arith.constant 0 : index
    %265 = vector.load %arg8[%c0_98, %c0_99] : memref<128x128xbf16, #tpu.memory_space<vmem>>, vector<128x128xbf16>
    %cst_100 = arith.constant dense<0.000000e+00> : vector<8x128xf32>
    %266 = tpu.matmul %264, %265, %cst_100 {dimension_numbers = #tpu.dot_dimension_numbers<[1], [0], [0], [1], [0, 0, 1, 1], [], []>} : vector<8x128xbf16>, vector<128x128xbf16>, vector<8x128xf32> -> vector<8x128xf32>
    %267 = arith.addf %262, %266 : vector<8x128xf32>
    %268 = math.tanh %267 : vector<8x128xf32>
    %cst_101 = arith.constant 1.000000e+00 : f32
    %269 = vector.broadcast %cst_101 : f32 to vector<8x128xf32>
    %270 = arith.subf %269, %261 : vector<8x128xf32>
    %271 = arith.mulf %270, %220 : vector<8x128xf32>
    %272 = arith.mulf %261, %268 : vector<8x128xf32>
    %273 = arith.addf %271, %272 : vector<8x128xf32>
    %c5 = arith.constant 5 : index
    %c0_102 = arith.constant 0 : index
    %c0_103 = arith.constant 0 : index
    %274 = vector.load %arg2[%c5, %c0_102, %c0_103] : memref<8x8x128xbf16, #tpu.memory_space<vmem>>, vector<1x8x128xbf16>
    %275 = vector.shape_cast %274 : vector<1x8x128xbf16> to vector<8x128xbf16>
    %c0_104 = arith.constant 0 : index
    %c0_105 = arith.constant 0 : index
    %276 = vector.load %arg3[%c0_104, %c0_105] : memref<128x128xbf16, #tpu.memory_space<vmem>>, vector<128x128xbf16>
    %cst_106 = arith.constant dense<0.000000e+00> : vector<8x128xf32>
    %277 = tpu.matmul %275, %276, %cst_106 {dimension_numbers = #tpu.dot_dimension_numbers<[1], [0], [0], [1], [0, 0, 1, 1], [], []>} : vector<8x128xbf16>, vector<128x128xbf16>, vector<8x128xf32> -> vector<8x128xf32>
    %278 = vector.broadcast %3 : vector<1x128xf32> to vector<8x128xf32>
    %279 = arith.addf %277, %278 : vector<8x128xf32>
    %280 = arith.addf %237, %279 : vector<8x128xf32>
    %281 = vector.broadcast %5 : vector<1x128xf32> to vector<8x128xf32>
    %282 = arith.subf %280, %281 : vector<8x128xf32>
    %cst_107 = arith.constant 0.000000e+00 : f32
    %283 = vector.broadcast %cst_107 : f32 to vector<8x128xf32>
    %284 = arith.cmpf ogt, %282, %283 : vector<8x128xf32>
    %285 = arith.extui %284 : vector<8x128xi1> to vector<8x128xi32>
    %286 = arith.sitofp %285 : vector<8x128xi32> to vector<8x128xf32>
    %287 = arith.mulf %286, %280 : vector<8x128xf32>
    %288 = arith.subf %280, %287 : vector<8x128xf32>
    %289 = vector.broadcast %6 : vector<1x128xf32> to vector<8x128xf32>
    %290 = arith.mulf %288, %289 : vector<8x128xf32>
    %291 = arith.truncf %287 : vector<8x128xf32> to vector<8x128xbf16>
    %c0_108 = arith.constant 0 : index
    %c0_109 = arith.constant 0 : index
    %292 = vector.load %arg5[%c0_108, %c0_109] : memref<128x384xbf16, #tpu.memory_space<vmem>>, vector<128x384xbf16>
    %cst_110 = arith.constant dense<0.000000e+00> : vector<8x384xf32>
    %293 = tpu.matmul %291, %292, %cst_110 {dimension_numbers = #tpu.dot_dimension_numbers<[1], [0], [0], [1], [0, 0, 1, 1], [], []>} : vector<8x128xbf16>, vector<128x384xbf16>, vector<8x384xf32> -> vector<8x384xf32>
    %294 = vector.broadcast %4 : vector<1x384xf32> to vector<8x384xf32>
    %295 = arith.addf %293, %294 : vector<8x384xf32>
    %296 = arith.truncf %273 : vector<8x128xf32> to vector<8x128xbf16>
    %c0_111 = arith.constant 0 : index
    %c0_112 = arith.constant 0 : index
    %297 = vector.load %arg7[%c0_111, %c0_112] : memref<128x256xbf16, #tpu.memory_space<vmem>>, vector<128x256xbf16>
    %cst_113 = arith.constant dense<0.000000e+00> : vector<8x256xf32>
    %298 = tpu.matmul %296, %297, %cst_113 {dimension_numbers = #tpu.dot_dimension_numbers<[1], [0], [0], [1], [0, 0, 1, 1], [], []>} : vector<8x128xbf16>, vector<128x256xbf16>, vector<8x256xf32> -> vector<8x256xf32>
    %299 = vector.extract_strided_slice %295 {offsets = [0, 0], sizes = [8, 128], strides = [1, 1]} : vector<8x384xf32> to vector<8x128xf32>
    %300 = vector.extract_strided_slice %298 {offsets = [0, 0], sizes = [8, 128], strides = [1, 1]} : vector<8x256xf32> to vector<8x128xf32>
    %301 = arith.addf %299, %300 : vector<8x128xf32>
    %302 = arith.negf %301 : vector<8x128xf32>
    %303 = math.exp %302 : vector<8x128xf32>
    %cst_114 = arith.constant 1.000000e+00 : f32
    %304 = vector.broadcast %cst_114 : f32 to vector<8x128xf32>
    %305 = arith.addf %304, %303 : vector<8x128xf32>
    %306 = arith.divf %304, %305 : vector<8x128xf32>
    %307 = vector.extract_strided_slice %295 {offsets = [0, 128], sizes = [8, 128], strides = [1, 1]} : vector<8x384xf32> to vector<8x128xf32>
    %308 = vector.extract_strided_slice %298 {offsets = [0, 128], sizes = [8, 128], strides = [1, 1]} : vector<8x256xf32> to vector<8x128xf32>
    %309 = arith.addf %307, %308 : vector<8x128xf32>
    %310 = arith.negf %309 : vector<8x128xf32>
    %311 = math.exp %310 : vector<8x128xf32>
    %cst_115 = arith.constant 1.000000e+00 : f32
    %312 = vector.broadcast %cst_115 : f32 to vector<8x128xf32>
    %313 = arith.addf %312, %311 : vector<8x128xf32>
    %314 = arith.divf %312, %313 : vector<8x128xf32>
    %315 = vector.extract_strided_slice %295 {offsets = [0, 256], sizes = [8, 128], strides = [1, 1]} : vector<8x384xf32> to vector<8x128xf32>
    %316 = arith.mulf %306, %273 : vector<8x128xf32>
    %317 = arith.truncf %316 : vector<8x128xf32> to vector<8x128xbf16>
    %c0_116 = arith.constant 0 : index
    %c0_117 = arith.constant 0 : index
    %318 = vector.load %arg8[%c0_116, %c0_117] : memref<128x128xbf16, #tpu.memory_space<vmem>>, vector<128x128xbf16>
    %cst_118 = arith.constant dense<0.000000e+00> : vector<8x128xf32>
    %319 = tpu.matmul %317, %318, %cst_118 {dimension_numbers = #tpu.dot_dimension_numbers<[1], [0], [0], [1], [0, 0, 1, 1], [], []>} : vector<8x128xbf16>, vector<128x128xbf16>, vector<8x128xf32> -> vector<8x128xf32>
    %320 = arith.addf %315, %319 : vector<8x128xf32>
    %321 = math.tanh %320 : vector<8x128xf32>
    %cst_119 = arith.constant 1.000000e+00 : f32
    %322 = vector.broadcast %cst_119 : f32 to vector<8x128xf32>
    %323 = arith.subf %322, %314 : vector<8x128xf32>
    %324 = arith.mulf %323, %273 : vector<8x128xf32>
    %325 = arith.mulf %314, %321 : vector<8x128xf32>
    %326 = arith.addf %324, %325 : vector<8x128xf32>
    %c6 = arith.constant 6 : index
    %c0_120 = arith.constant 0 : index
    %c0_121 = arith.constant 0 : index
    %327 = vector.load %arg2[%c6, %c0_120, %c0_121] : memref<8x8x128xbf16, #tpu.memory_space<vmem>>, vector<1x8x128xbf16>
    %328 = vector.shape_cast %327 : vector<1x8x128xbf16> to vector<8x128xbf16>
    %c0_122 = arith.constant 0 : index
    %c0_123 = arith.constant 0 : index
    %329 = vector.load %arg3[%c0_122, %c0_123] : memref<128x128xbf16, #tpu.memory_space<vmem>>, vector<128x128xbf16>
    %cst_124 = arith.constant dense<0.000000e+00> : vector<8x128xf32>
    %330 = tpu.matmul %328, %329, %cst_124 {dimension_numbers = #tpu.dot_dimension_numbers<[1], [0], [0], [1], [0, 0, 1, 1], [], []>} : vector<8x128xbf16>, vector<128x128xbf16>, vector<8x128xf32> -> vector<8x128xf32>
    %331 = vector.broadcast %3 : vector<1x128xf32> to vector<8x128xf32>
    %332 = arith.addf %330, %331 : vector<8x128xf32>
    %333 = arith.addf %290, %332 : vector<8x128xf32>
    %334 = vector.broadcast %5 : vector<1x128xf32> to vector<8x128xf32>
    %335 = arith.subf %333, %334 : vector<8x128xf32>
    %cst_125 = arith.constant 0.000000e+00 : f32
    %336 = vector.broadcast %cst_125 : f32 to vector<8x128xf32>
    %337 = arith.cmpf ogt, %335, %336 : vector<8x128xf32>
    %338 = arith.extui %337 : vector<8x128xi1> to vector<8x128xi32>
    %339 = arith.sitofp %338 : vector<8x128xi32> to vector<8x128xf32>
    %340 = arith.mulf %339, %333 : vector<8x128xf32>
    %341 = arith.subf %333, %340 : vector<8x128xf32>
    %342 = vector.broadcast %6 : vector<1x128xf32> to vector<8x128xf32>
    %343 = arith.mulf %341, %342 : vector<8x128xf32>
    %344 = arith.truncf %340 : vector<8x128xf32> to vector<8x128xbf16>
    %c0_126 = arith.constant 0 : index
    %c0_127 = arith.constant 0 : index
    %345 = vector.load %arg5[%c0_126, %c0_127] : memref<128x384xbf16, #tpu.memory_space<vmem>>, vector<128x384xbf16>
    %cst_128 = arith.constant dense<0.000000e+00> : vector<8x384xf32>
    %346 = tpu.matmul %344, %345, %cst_128 {dimension_numbers = #tpu.dot_dimension_numbers<[1], [0], [0], [1], [0, 0, 1, 1], [], []>} : vector<8x128xbf16>, vector<128x384xbf16>, vector<8x384xf32> -> vector<8x384xf32>
    %347 = vector.broadcast %4 : vector<1x384xf32> to vector<8x384xf32>
    %348 = arith.addf %346, %347 : vector<8x384xf32>
    %349 = arith.truncf %326 : vector<8x128xf32> to vector<8x128xbf16>
    %c0_129 = arith.constant 0 : index
    %c0_130 = arith.constant 0 : index
    %350 = vector.load %arg7[%c0_129, %c0_130] : memref<128x256xbf16, #tpu.memory_space<vmem>>, vector<128x256xbf16>
    %cst_131 = arith.constant dense<0.000000e+00> : vector<8x256xf32>
    %351 = tpu.matmul %349, %350, %cst_131 {dimension_numbers = #tpu.dot_dimension_numbers<[1], [0], [0], [1], [0, 0, 1, 1], [], []>} : vector<8x128xbf16>, vector<128x256xbf16>, vector<8x256xf32> -> vector<8x256xf32>
    %352 = vector.extract_strided_slice %348 {offsets = [0, 0], sizes = [8, 128], strides = [1, 1]} : vector<8x384xf32> to vector<8x128xf32>
    %353 = vector.extract_strided_slice %351 {offsets = [0, 0], sizes = [8, 128], strides = [1, 1]} : vector<8x256xf32> to vector<8x128xf32>
    %354 = arith.addf %352, %353 : vector<8x128xf32>
    %355 = arith.negf %354 : vector<8x128xf32>
    %356 = math.exp %355 : vector<8x128xf32>
    %cst_132 = arith.constant 1.000000e+00 : f32
    %357 = vector.broadcast %cst_132 : f32 to vector<8x128xf32>
    %358 = arith.addf %357, %356 : vector<8x128xf32>
    %359 = arith.divf %357, %358 : vector<8x128xf32>
    %360 = vector.extract_strided_slice %348 {offsets = [0, 128], sizes = [8, 128], strides = [1, 1]} : vector<8x384xf32> to vector<8x128xf32>
    %361 = vector.extract_strided_slice %351 {offsets = [0, 128], sizes = [8, 128], strides = [1, 1]} : vector<8x256xf32> to vector<8x128xf32>
    %362 = arith.addf %360, %361 : vector<8x128xf32>
    %363 = arith.negf %362 : vector<8x128xf32>
    %364 = math.exp %363 : vector<8x128xf32>
    %cst_133 = arith.constant 1.000000e+00 : f32
    %365 = vector.broadcast %cst_133 : f32 to vector<8x128xf32>
    %366 = arith.addf %365, %364 : vector<8x128xf32>
    %367 = arith.divf %365, %366 : vector<8x128xf32>
    %368 = vector.extract_strided_slice %348 {offsets = [0, 256], sizes = [8, 128], strides = [1, 1]} : vector<8x384xf32> to vector<8x128xf32>
    %369 = arith.mulf %359, %326 : vector<8x128xf32>
    %370 = arith.truncf %369 : vector<8x128xf32> to vector<8x128xbf16>
    %c0_134 = arith.constant 0 : index
    %c0_135 = arith.constant 0 : index
    %371 = vector.load %arg8[%c0_134, %c0_135] : memref<128x128xbf16, #tpu.memory_space<vmem>>, vector<128x128xbf16>
    %cst_136 = arith.constant dense<0.000000e+00> : vector<8x128xf32>
    %372 = tpu.matmul %370, %371, %cst_136 {dimension_numbers = #tpu.dot_dimension_numbers<[1], [0], [0], [1], [0, 0, 1, 1], [], []>} : vector<8x128xbf16>, vector<128x128xbf16>, vector<8x128xf32> -> vector<8x128xf32>
    %373 = arith.addf %368, %372 : vector<8x128xf32>
    %374 = math.tanh %373 : vector<8x128xf32>
    %cst_137 = arith.constant 1.000000e+00 : f32
    %375 = vector.broadcast %cst_137 : f32 to vector<8x128xf32>
    %376 = arith.subf %375, %367 : vector<8x128xf32>
    %377 = arith.mulf %376, %326 : vector<8x128xf32>
    %378 = arith.mulf %367, %374 : vector<8x128xf32>
    %379 = arith.addf %377, %378 : vector<8x128xf32>
    %c7 = arith.constant 7 : index
    %c0_138 = arith.constant 0 : index
    %c0_139 = arith.constant 0 : index
    %380 = vector.load %arg2[%c7, %c0_138, %c0_139] : memref<8x8x128xbf16, #tpu.memory_space<vmem>>, vector<1x8x128xbf16>
    %381 = vector.shape_cast %380 : vector<1x8x128xbf16> to vector<8x128xbf16>
    %c0_140 = arith.constant 0 : index
    %c0_141 = arith.constant 0 : index
    %382 = vector.load %arg3[%c0_140, %c0_141] : memref<128x128xbf16, #tpu.memory_space<vmem>>, vector<128x128xbf16>
    %cst_142 = arith.constant dense<0.000000e+00> : vector<8x128xf32>
    %383 = tpu.matmul %381, %382, %cst_142 {dimension_numbers = #tpu.dot_dimension_numbers<[1], [0], [0], [1], [0, 0, 1, 1], [], []>} : vector<8x128xbf16>, vector<128x128xbf16>, vector<8x128xf32> -> vector<8x128xf32>
    %384 = vector.broadcast %3 : vector<1x128xf32> to vector<8x128xf32>
    %385 = arith.addf %383, %384 : vector<8x128xf32>
    %386 = arith.addf %343, %385 : vector<8x128xf32>
    %387 = vector.broadcast %5 : vector<1x128xf32> to vector<8x128xf32>
    %388 = arith.subf %386, %387 : vector<8x128xf32>
    %cst_143 = arith.constant 0.000000e+00 : f32
    %389 = vector.broadcast %cst_143 : f32 to vector<8x128xf32>
    %390 = arith.cmpf ogt, %388, %389 : vector<8x128xf32>
    %391 = arith.extui %390 : vector<8x128xi1> to vector<8x128xi32>
    %392 = arith.sitofp %391 : vector<8x128xi32> to vector<8x128xf32>
    %393 = arith.mulf %392, %386 : vector<8x128xf32>
    %394 = arith.subf %386, %393 : vector<8x128xf32>
    %395 = vector.broadcast %6 : vector<1x128xf32> to vector<8x128xf32>
    %396 = arith.mulf %394, %395 : vector<8x128xf32>
    %397 = arith.truncf %393 : vector<8x128xf32> to vector<8x128xbf16>
    %c0_144 = arith.constant 0 : index
    %c0_145 = arith.constant 0 : index
    %398 = vector.load %arg5[%c0_144, %c0_145] : memref<128x384xbf16, #tpu.memory_space<vmem>>, vector<128x384xbf16>
    %cst_146 = arith.constant dense<0.000000e+00> : vector<8x384xf32>
    %399 = tpu.matmul %397, %398, %cst_146 {dimension_numbers = #tpu.dot_dimension_numbers<[1], [0], [0], [1], [0, 0, 1, 1], [], []>} : vector<8x128xbf16>, vector<128x384xbf16>, vector<8x384xf32> -> vector<8x384xf32>
    %400 = vector.broadcast %4 : vector<1x384xf32> to vector<8x384xf32>
    %401 = arith.addf %399, %400 : vector<8x384xf32>
    %402 = arith.truncf %379 : vector<8x128xf32> to vector<8x128xbf16>
    %c0_147 = arith.constant 0 : index
    %c0_148 = arith.constant 0 : index
    %403 = vector.load %arg7[%c0_147, %c0_148] : memref<128x256xbf16, #tpu.memory_space<vmem>>, vector<128x256xbf16>
    %cst_149 = arith.constant dense<0.000000e+00> : vector<8x256xf32>
    %404 = tpu.matmul %402, %403, %cst_149 {dimension_numbers = #tpu.dot_dimension_numbers<[1], [0], [0], [1], [0, 0, 1, 1], [], []>} : vector<8x128xbf16>, vector<128x256xbf16>, vector<8x256xf32> -> vector<8x256xf32>
    %405 = vector.extract_strided_slice %401 {offsets = [0, 0], sizes = [8, 128], strides = [1, 1]} : vector<8x384xf32> to vector<8x128xf32>
    %406 = vector.extract_strided_slice %404 {offsets = [0, 0], sizes = [8, 128], strides = [1, 1]} : vector<8x256xf32> to vector<8x128xf32>
    %407 = arith.addf %405, %406 : vector<8x128xf32>
    %408 = arith.negf %407 : vector<8x128xf32>
    %409 = math.exp %408 : vector<8x128xf32>
    %cst_150 = arith.constant 1.000000e+00 : f32
    %410 = vector.broadcast %cst_150 : f32 to vector<8x128xf32>
    %411 = arith.addf %410, %409 : vector<8x128xf32>
    %412 = arith.divf %410, %411 : vector<8x128xf32>
    %413 = vector.extract_strided_slice %401 {offsets = [0, 128], sizes = [8, 128], strides = [1, 1]} : vector<8x384xf32> to vector<8x128xf32>
    %414 = vector.extract_strided_slice %404 {offsets = [0, 128], sizes = [8, 128], strides = [1, 1]} : vector<8x256xf32> to vector<8x128xf32>
    %415 = arith.addf %413, %414 : vector<8x128xf32>
    %416 = arith.negf %415 : vector<8x128xf32>
    %417 = math.exp %416 : vector<8x128xf32>
    %cst_151 = arith.constant 1.000000e+00 : f32
    %418 = vector.broadcast %cst_151 : f32 to vector<8x128xf32>
    %419 = arith.addf %418, %417 : vector<8x128xf32>
    %420 = arith.divf %418, %419 : vector<8x128xf32>
    %421 = vector.extract_strided_slice %401 {offsets = [0, 256], sizes = [8, 128], strides = [1, 1]} : vector<8x384xf32> to vector<8x128xf32>
    %422 = arith.mulf %412, %379 : vector<8x128xf32>
    %423 = arith.truncf %422 : vector<8x128xf32> to vector<8x128xbf16>
    %c0_152 = arith.constant 0 : index
    %c0_153 = arith.constant 0 : index
    %424 = vector.load %arg8[%c0_152, %c0_153] : memref<128x128xbf16, #tpu.memory_space<vmem>>, vector<128x128xbf16>
    %cst_154 = arith.constant dense<0.000000e+00> : vector<8x128xf32>
    %425 = tpu.matmul %423, %424, %cst_154 {dimension_numbers = #tpu.dot_dimension_numbers<[1], [0], [0], [1], [0, 0, 1, 1], [], []>} : vector<8x128xbf16>, vector<128x128xbf16>, vector<8x128xf32> -> vector<8x128xf32>
    %426 = arith.addf %421, %425 : vector<8x128xf32>
    %427 = math.tanh %426 : vector<8x128xf32>
    %cst_155 = arith.constant 1.000000e+00 : f32
    %428 = vector.broadcast %cst_155 : f32 to vector<8x128xf32>
    %429 = arith.subf %428, %420 : vector<8x128xf32>
    %430 = arith.mulf %429, %379 : vector<8x128xf32>
    %431 = arith.mulf %420, %427 : vector<8x128xf32>
    %432 = arith.addf %430, %431 : vector<8x128xf32>
    %c0_156 = arith.constant 0 : index
    %c0_157 = arith.constant 0 : index
    %433 = vector.load %arg14[%c0_156, %c0_157] : memref<8x128xf32, #tpu.memory_space<vmem>>, vector<8x128xf32>
    tpu.vector_store %arg14[%c0_156, %c0_157], %432 {strides = array<i32>} : memref<8x128xf32, #tpu.memory_space<vmem>>, vector<8x128xf32>,
    %c0_158 = arith.constant 0 : index
    %c0_159 = arith.constant 0 : index
    %434 = vector.load %arg15[%c0_158, %c0_159] : memref<8x128xf32, #tpu.memory_space<vmem>>, vector<8x128xf32>
    tpu.vector_store %arg15[%c0_158, %c0_159], %396 {strides = array<i32>} : memref<8x128xf32, #tpu.memory_space<vmem>>, vector<8x128xf32>,
    %c0_i32_160 = arith.constant 0 : i32
    %435 = arith.cmpi eq, %arg1, %c0_i32_160 : i32
    %436 = arith.extui %435 : i1 to i32
    %c0_i32_161 = arith.constant 0 : i32
    %437 = arith.cmpi ne, %436, %c0_i32_161 : i32
    scf.if %437 {
      %438 = arith.truncf %432 : vector<8x128xf32> to vector<8x128xbf16>
      %c0_162 = arith.constant 0 : index
      %c0_163 = arith.constant 0 : index
      %439 = vector.load %arg11[%c0_162, %c0_163] : memref<128x128xbf16, #tpu.memory_space<vmem>>, vector<128x128xbf16>
      %cst_164 = arith.constant dense<0.000000e+00> : vector<8x128xf32>
      %440 = tpu.matmul %438, %439, %cst_164 {dimension_numbers = #tpu.dot_dimension_numbers<[1], [0], [0], [1], [0, 0, 1, 1], [], []>} : vector<8x128xbf16>, vector<128x128xbf16>, vector<8x128xf32> -> vector<8x128xf32>
      %c0_165 = arith.constant 0 : index
      %c0_166 = arith.constant 0 : index
      %441 = vector.load %arg12[%c0_165, %c0_166] : memref<1x128xf32, #tpu.memory_space<vmem>>, vector<1x128xf32>
      %442 = vector.broadcast %441 : vector<1x128xf32> to vector<8x128xf32>
      %443 = arith.addf %440, %442 : vector<8x128xf32>
      %c0_167 = arith.constant 0 : index
      %c0_168 = arith.constant 0 : index
      %444 = vector.load %arg13[%c0_167, %c0_168] : memref<8x128xf32, #tpu.memory_space<vmem>>, vector<8x128xf32>
      tpu.vector_store %arg13[%c0_167, %c0_168], %443 {strides = array<i32>} : memref<8x128xf32, #tpu.memory_space<vmem>>, vector<8x128xf32>,
    } else {
    }
    return
  }
  func.func @transform_0(%arg0: i32, %arg1: i32) -> (i32, i32, i32) {
    %c0_i32 = arith.constant 0 : i32
    %c0_i32_0 = arith.constant 0 : i32
    return %arg1, %arg0, %c0_i32 : i32, i32, i32
  }
  func.func @transform_1(%arg0: i32, %arg1: i32) -> (i32, i32) {
    %c0_i32 = arith.constant 0 : i32
    %c0_i32_0 = arith.constant 0 : i32
    %c0_i32_1 = arith.constant 0 : i32
    return %c0_i32, %c0_i32_0 : i32, i32
  }
  func.func @transform_2(%arg0: i32, %arg1: i32) -> (i32, i32) {
    %c0_i32 = arith.constant 0 : i32
    %c0_i32_0 = arith.constant 0 : i32
    %c0_i32_1 = arith.constant 0 : i32
    return %c0_i32, %c0_i32_0 : i32, i32
  }
  func.func @transform_3(%arg0: i32, %arg1: i32) -> (i32, i32) {
    %c0_i32 = arith.constant 0 : i32
    %c0_i32_0 = arith.constant 0 : i32
    %c0_i32_1 = arith.constant 0 : i32
    return %c0_i32, %c0_i32_0 : i32, i32
  }
  func.func @transform_4(%arg0: i32, %arg1: i32) -> (i32, i32) {
    %c0_i32 = arith.constant 0 : i32
    %c0_i32_0 = arith.constant 0 : i32
    %c0_i32_1 = arith.constant 0 : i32
    return %c0_i32, %c0_i32_0 : i32, i32
  }
  func.func @transform_5(%arg0: i32, %arg1: i32) -> (i32, i32) {
    %c0_i32 = arith.constant 0 : i32
    %c0_i32_0 = arith.constant 0 : i32
    %c0_i32_1 = arith.constant 0 : i32
    return %c0_i32, %c0_i32_0 : i32, i32
  }
  func.func @transform_6(%arg0: i32, %arg1: i32) -> (i32, i32) {
    %c0_i32 = arith.constant 0 : i32
    %c0_i32_0 = arith.constant 0 : i32
    %c0_i32_1 = arith.constant 0 : i32
    return %c0_i32, %c0_i32_0 : i32, i32
  }
  func.func @transform_7(%arg0: i32, %arg1: i32) -> (i32, i32) {
    %c0_i32 = arith.constant 0 : i32
    %c0_i32_0 = arith.constant 0 : i32
    %c0_i32_1 = arith.constant 0 : i32
    return %c0_i32, %c0_i32_0 : i32, i32
  }
  func.func @transform_8(%arg0: i32, %arg1: i32) -> (i32, i32) {
    %c0_i32 = arith.constant 0 : i32
    %c0_i32_0 = arith.constant 0 : i32
    %c0_i32_1 = arith.constant 0 : i32
    return %c0_i32, %c0_i32_0 : i32, i32
  }
  func.func @transform_9(%arg0: i32, %arg1: i32) -> (i32, i32) {
    %c0_i32 = arith.constant 0 : i32
    %c0_i32_0 = arith.constant 0 : i32
    %c0_i32_1 = arith.constant 0 : i32
    return %c0_i32, %c0_i32_0 : i32, i32
  }
  func.func @transform_10(%arg0: i32, %arg1: i32) -> (i32, i32) {
    %c0_i32 = arith.constant 0 : i32
    %c0_i32_0 = arith.constant 0 : i32
    %c0_i32_1 = arith.constant 0 : i32
    return %c0_i32, %c0_i32_0 : i32, i32
  }
  func.func @transform_11(%arg0: i32, %arg1: i32) -> (i32, i32) {
    %c0_i32 = arith.constant 0 : i32
    %c0_i32_0 = arith.constant 0 : i32
    return %arg0, %c0_i32 : i32, i32
  }
}

</mosaic_0001>

<llo_original>
// kernel: tpu_custom_call.1
$region0: #{tpu_custom_call.1}
  #allocation0 [shape = 'u32[]', space=smem, size = 0x4, offset = 0x4, fixed_abs, tag = 'smem constant byte address 0x4 - core index']
  #allocation1 [shape = 'u32[144,128]{1,0:T(1,128)}', space=vmem, size = 0x12000, scoped, tag = 'internal scratch']
  #allocation2 [shape = 'f32[8,128]{1,0:T(8,128)}', space=vmem, size = 0x1000, scoped, tag = 'scratch operand']
  #allocation3 [shape = 'f32[8,128]{1,0:T(8,128)}', space=vmem, size = 0x1000, scoped, tag = 'scratch operand']
  %s0 = inlined_call_operand.hbm [shape: bf16[8,8,128], index: 0, kind: input, shape index: {}]
  %s1 = inlined_call_operand.hbm [shape: bf16[128,128], index: 1, kind: input, shape index: {}]
  %s2 = inlined_call_operand.vmem [shape: f32[1,128], index: 2, kind: input, shape index: {}]
  %s3 = inlined_call_operand.hbm [shape: bf16[128,384], index: 3, kind: input, shape index: {}]
  %s4 = inlined_call_operand.vmem [shape: f32[1,384], index: 4, kind: input, shape index: {}]
  %s5 = inlined_call_operand.hbm [shape: bf16[128,256], index: 5, kind: input, shape index: {}]
  %s6 = inlined_call_operand.hbm [shape: bf16[128,128], index: 6, kind: input, shape index: {}]
  %s7 = inlined_call_operand.vmem [shape: f32[1,128], index: 7, kind: input, shape index: {}]
  %s8 = inlined_call_operand.vmem [shape: f32[1,128], index: 8, kind: input, shape index: {}]
  %s9 = inlined_call_operand.hbm [shape: bf16[128,128], index: 9, kind: input, shape index: {}]
  %s10 = inlined_call_operand.vmem [shape: f32[1,128], index: 10, kind: input, shape index: {}]
  %s11 = inlined_call_operand.hbm [shape: f32[8,128], index: 11, kind: output, shape index: {}]
  %s12 = sld [smem:[#allocation0]]
  $region86: #{tpu_custom_call.1} parent=0
    _
  %s14 = ssub.s32 1, %s12
  %s15 = scalar_select 0, %s14, %s12
  $region1: #{tpu_custom_call.1} parent=0
    #allocation4 [shape = 'u8[16384]{0}', space=vmem, size = 0x4000, scoped, tag = 'input window, operand 0, single buffered']
    #allocation5 [shape = 's32[1]{0}', space=sflag, size = 0x4, scoped, tag = 'scoped memory for tpu_custom_call.1']
    #allocation6 [shape = 's32[1]{0}', space=sflag, size = 0x4, scoped, tag = 'scoped memory for tpu_custom_call.1']
    #allocation7 [shape = 'u8[32768]{0}', space=vmem, size = 0x8000, scoped, tag = 'input window, operand 1, single buffered']
    #allocation8 [shape = 's32[1]{0}', space=sflag, size = 0x4, scoped, tag = 'scoped memory for tpu_custom_call.1']
    #allocation9 [shape = 'u8[98304]{0}', space=vmem, size = 0x18000, scoped, tag = 'input window, operand 3, single buffered']
    #allocation10 [shape = 'u8[65536]{0}', space=vmem, size = 0x10000, scoped, tag = 'input window, operand 5, single buffered']
    #allocation11 [shape = 's32[1]{0}', space=sflag, size = 0x4, scoped, tag = 'scoped memory for tpu_custom_call.1']
    #allocation12 [shape = 'u8[32768]{0}', space=vmem, size = 0x8000, scoped, tag = 'input window, operand 6, single buffered']
    #allocation13 [shape = 'u8[32768]{0}', space=vmem, size = 0x8000, scoped, tag = 'input window, operand 9, single buffered']
    #allocation14 [shape = 's32[1]{0}', space=sflag, size = 0x4, scoped, tag = 'scoped memory for tpu_custom_call.1']
    #allocation15 [shape = 'u8[4096]{0}', space=vmem, size = 0x1000, scoped, tag = 'output window, operand 0, single buffered']
    %16 = vsyncpa [#allocation5], 0
    %17 = vsyncpa [#allocation8], 0
    %18 = vsyncpa [#allocation11], 0
    %19 = vsyncpa [#allocation14], 0
    %20 = vsyncpa [#allocation6], 0
    // Predicated region
    $region2: #{tpu_custom_call.1} parent=1 // pred_check
      _
    $region3: #{tpu_custom_call.1} parent=1 // pred_check_branch
      %22 = sbr.rel (0) target = $region5
    $region4: #{tpu_custom_call.1} parent=1 // pred_region
      %s24 = ssub.s32 512, 512
      %25 = vsyncadd [#allocation5], %s24
      %s26 = sshll.u32 [#allocation4], 4
      %s27 = int_to_ptr.vmem [resolvable:$true] %s26
      %32 = dma.hbm_to_vmem [thread:$0]  %s0, 512, %s27, [#allocation5], 64, 64, 4
    $region5: #{tpu_custom_call.1} parent=1 // pred_fallthru
      _
    // Predicated region
    $region6: #{tpu_custom_call.1} parent=1 // pred_check
      _
    $region7: #{tpu_custom_call.1} parent=1 // pred_check_branch
      %34 = sbr.rel (0) target = $region9
    $region8: #{tpu_custom_call.1} parent=1 // pred_region
      %s36 = ssub.s32 1024, 1024
      %37 = vsyncadd [#allocation8], %s36
      %s38 = sshll.u32 [#allocation7], 4
      %s39 = int_to_ptr.vmem [resolvable:$true] %s38
      %44 = dma.hbm_to_vmem [thread:$0]  %s1, 1024, %s39, [#allocation8], 64, 64, 4
    $region9: #{tpu_custom_call.1} parent=1 // pred_fallthru
      _
    // Predicated region
    $region10: #{tpu_custom_call.1} parent=1 // pred_check
      _
    $region11: #{tpu_custom_call.1} parent=1 // pred_check_branch
      %46 = sbr.rel (0) target = $region13
    $region12: #{tpu_custom_call.1} parent=1 // pred_region
      _
    $region13: #{tpu_custom_call.1} parent=1 // pred_fallthru
      _
    // Predicated region
    $region14: #{tpu_custom_call.1} parent=1 // pred_check
      _
    $region15: #{tpu_custom_call.1} parent=1 // pred_check_branch
      %48 = sbr.rel (0) target = $region17
    $region16: #{tpu_custom_call.1} parent=1 // pred_region
      %s50 = ssub.s32 3072, 3072
      %51 = vsyncadd [#allocation8], %s50
      %s52 = sshll.u32 [#allocation9], 4
      %s53 = int_to_ptr.vmem [resolvable:$true] %s52
      %58 = dma.hbm_to_vmem [thread:$0]  %s3, 3072, %s53, [#allocation8], 192, 192, 12
    $region17: #{tpu_custom_call.1} parent=1 // pred_fallthru
      _
    // Predicated region
    $region18: #{tpu_custom_call.1} parent=1 // pred_check
      _
    $region19: #{tpu_custom_call.1} parent=1 // pred_check_branch
      %60 = sbr.rel (0) target = $region21
    $region20: #{tpu_custom_call.1} parent=1 // pred_region
      _
    $region21: #{tpu_custom_call.1} parent=1 // pred_fallthru
      _
    // Predicated region
    $region22: #{tpu_custom_call.1} parent=1 // pred_check
      _
    $region23: #{tpu_custom_call.1} parent=1 // pred_check_branch
      %62 = sbr.rel (0) target = $region25
    $region24: #{tpu_custom_call.1} parent=1 // pred_region
      %s64 = ssub.s32 2048, 2048
      %65 = vsyncadd [#allocation11], %s64
      %s66 = sshll.u32 [#allocation10], 4
      %s67 = int_to_ptr.vmem [resolvable:$true] %s66
      %72 = dma.hbm_to_vmem [thread:$0]  %s5, 2048, %s67, [#allocation11], 128, 128, 8
    $region25: #{tpu_custom_call.1} parent=1 // pred_fallthru
      _
    // Predicated region
    $region26: #{tpu_custom_call.1} parent=1 // pred_check
      _
    $region27: #{tpu_custom_call.1} parent=1 // pred_check_branch
      %74 = sbr.rel (0) target = $region29
    $region28: #{tpu_custom_call.1} parent=1 // pred_region
      %s76 = ssub.s32 1024, 1024
      %77 = vsyncadd [#allocation11], %s76
      %s78 = sshll.u32 [#allocation12], 4
      %s79 = int_to_ptr.vmem [resolvable:$true] %s78
      %84 = dma.hbm_to_vmem [thread:$0]  %s6, 1024, %s79, [#allocation11], 64, 64, 4
    $region29: #{tpu_custom_call.1} parent=1 // pred_fallthru
      _
    // Predicated region
    $region30: #{tpu_custom_call.1} parent=1 // pred_check
      _
    $region31: #{tpu_custom_call.1} parent=1 // pred_check_branch
      %86 = sbr.rel (0) target = $region33
    $region32: #{tpu_custom_call.1} parent=1 // pred_region
      _
    $region33: #{tpu_custom_call.1} parent=1 // pred_fallthru
      _
    // Predicated region
    $region34: #{tpu_custom_call.1} parent=1 // pred_check
      _
    $region35: #{tpu_custom_call.1} parent=1 // pred_check_branch
      %88 = sbr.rel (0) target = $region37
    $region36: #{tpu_custom_call.1} parent=1 // pred_region
      _
    $region37: #{tpu_custom_call.1} parent=1 // pred_fallthru
      _
    // Predicated region
    $region38: #{tpu_custom_call.1} parent=1 // pred_check
      _
    $region39: #{tpu_custom_call.1} parent=1 // pred_check_branch
      %90 = sbr.rel (0) target = $region41
    $region40: #{tpu_custom_call.1} parent=1 // pred_region
      %s92 = ssub.s32 1024, 1024
      %93 = vsyncadd [#allocation14], %s92
      %s94 = sshll.u32 [#allocation13], 4
      %s95 = int_to_ptr.vmem [resolvable:$true] %s94
      %100 = dma.hbm_to_vmem [thread:$0]  %s9, 1024, %s95, [#allocation14], 64, 64, 4
    $region41: #{tpu_custom_call.1} parent=1 // pred_fallthru
      _
    // Predicated region
    $region42: #{tpu_custom_call.1} parent=1 // pred_check
      _
    $region43: #{tpu_custom_call.1} parent=1 // pred_check_branch
      %102 = sbr.rel (0) target = $region45
    $region44: #{tpu_custom_call.1} parent=1 // pred_region
      _
    $region45: #{tpu_custom_call.1} parent=1 // pred_fallthru
      _
    // Predicated region
    $region46: #{tpu_custom_call.1} parent=1 // pred_check
      _
    $region47: #{tpu_custom_call.1} parent=1 // pred_check_branch
      %104 = sbr.rel (0) target = $region49
    $region48: #{tpu_custom_call.1} parent=1 // pred_region
      %105 = dma.done [#allocation5], 512
    $region49: #{tpu_custom_call.1} parent=1 // pred_fallthru
      _
    // Predicated region
    $region50: #{tpu_custom_call.1} parent=1 // pred_check
      _
    $region51: #{tpu_custom_call.1} parent=1 // pred_check_branch
      %107 = sbr.rel (0) target = $region53
    $region52: #{tpu_custom_call.1} parent=1 // pred_region
      %108 = dma.done [#allocation8], 1024
    $region53: #{tpu_custom_call.1} parent=1 // pred_fallthru
      _
    // Predicated region
    $region54: #{tpu_custom_call.1} parent=1 // pred_check
      _
    $region55: #{tpu_custom_call.1} parent=1 // pred_check_branch
      %110 = sbr.rel (0) target = $region57
    $region56: #{tpu_custom_call.1} parent=1 // pred_region
      %111 = dma.done [#allocation8], 3072
    $region57: #{tpu_custom_call.1} parent=1 // pred_fallthru
      _
    // Predicated region
    $region58: #{tpu_custom_call.1} parent=1 // pred_check
      _
    $region59: #{tpu_custom_call.1} parent=1 // pred_check_branch
      %113 = sbr.rel (0) target = $region61
    $region60: #{tpu_custom_call.1} parent=1 // pred_region
      %114 = dma.done [#allocation11], 2048
    $region61: #{tpu_custom_call.1} parent=1 // pred_fallthru
      _
    // Predicated region
    $region62: #{tpu_custom_call.1} parent=1 // pred_check
      _
    $region63: #{tpu_custom_call.1} parent=1 // pred_check_branch
      %116 = sbr.rel (0) target = $region65
    $region64: #{tpu_custom_call.1} parent=1 // pred_region
      %117 = dma.done [#allocation11], 1024
    $region65: #{tpu_custom_call.1} parent=1 // pred_fallthru
      _
    // Predicated region
    $region66: #{tpu_custom_call.1} parent=1 // pred_check
      _
    $region67: #{tpu_custom_call.1} parent=1 // pred_check_branch
      %119 = sbr.rel (0) target = $region69
    $region68: #{tpu_custom_call.1} parent=1 // pred_region
      %120 = dma.done [#allocation14], 1024
    $region69: #{tpu_custom_call.1} parent=1 // pred_fallthru
      _
    %p122 = scmp.eq.s32.totalorder 0, 0
    // Predicated region
    $region70: #{tpu_custom_call.1} parent=1 // pred_check
      %p123 = pneg %p122
    $region71: #{tpu_custom_call.1} parent=1 // pred_check_branch
      %125 = sbr.rel (%p123) target = $region73
    $region72: #{tpu_custom_call.1} parent=1 // pred_region
      %126 = vst [vmem:[#allocation2] sm:$0xff] 0.0
      %127 = vst [vmem:[#allocation3] sm:$0xff] 0.0
    $region73: #{tpu_custom_call.1} parent=1 // pred_fallthru
      _
    %v128 = vld [vmem:[%s2] sm:$0x1]
    %v129 = vld [vmem:[%s4] sm:$0x7]
    %v130 = vld [vmem:[%s7] sm:$0x1]
    %v131 = vld [vmem:[%s8] sm:$0x1]
    %v132 = vld [vmem:[#allocation2] sm:$0xff]
    %v133 = vld [vmem:[#allocation3] sm:$0xff]
    %v134 = vld [vmem:[#allocation4] sm:$0xf]
    %v135 = vld [vmem:[#allocation7] sm:$0xf]
    %v136 = vld [vmem:[#allocation7 + $0x4] sm:$0xf]
    %v137 = vld [vmem:[#allocation7 + $0x8] sm:$0xf]
    %v138 = vld [vmem:[#allocation7 + $0xc] sm:$0xf]
    %v139 = vld [vmem:[#allocation7 + $0x10] sm:$0xf]
    %v140 = vld [vmem:[#allocation7 + $0x14] sm:$0xf]
    %v141 = vld [vmem:[#allocation7 + $0x18] sm:$0xf]
    %v142 = vld [vmem:[#allocation7 + $0x1c] sm:$0xf]
    %v143 = vld [vmem:[#allocation7 + $0x20] sm:$0xf]
    %v144 = vld [vmem:[#allocation7 + $0x24] sm:$0xf]
    %v145 = vld [vmem:[#allocation7 + $0x28] sm:$0xf]
    %v146 = vld [vmem:[#allocation7 + $0x2c] sm:$0xf]
    %v147 = vld [vmem:[#allocation7 + $0x30] sm:$0xf]
    %v148 = vld [vmem:[#allocation7 + $0x34] sm:$0xf]
    %v149 = vld [vmem:[#allocation7 + $0x38] sm:$0xf]
    %v150 = vld [vmem:[#allocation7 + $0x3c] sm:$0xf]
    %v152 = vlaneseq
    %v153 = vshrl.u32 %v152, 7
    %v154 = vsub.s32 0, %v153
    %v155 = vrot.slane %v128, %v154
    %v173 = vunpack.c.l.b16 %v135
    %v174 = vunpack.c.l.b16 %v136
    %v175 = vunpack.c.l.b16 %v137
    %v176 = vunpack.c.l.b16 %v138
    %v177 = vunpack.c.l.b16 %v139
    %v178 = vunpack.c.l.b16 %v140
    %v179 = vunpack.c.l.b16 %v141
    %v180 = vunpack.c.l.b16 %v142
    %v181 = vunpack.c.l.b16 %v143
    %v182 = vunpack.c.l.b16 %v144
    %v183 = vunpack.c.l.b16 %v145
    %v184 = vunpack.c.l.b16 %v146
    %v185 = vunpack.c.l.b16 %v147
    %v186 = vunpack.c.l.b16 %v148
    %v187 = vunpack.c.l.b16 %v149
    %v188 = vunpack.c.l.b16 %v150
    %v189 = vpack.c.b16 %v174, %v173
    %v190 = vpack.c.b16 %v176, %v175
    %v191 = vpack.c.b16 %v178, %v177
    %v192 = vpack.c.b16 %v180, %v179
    %v193 = vpack.c.b16 %v182, %v181
    %v194 = vpack.c.b16 %v184, %v183
    %v195 = vpack.c.b16 %v186, %v185
    %v196 = vpack.c.b16 %v188, %v187
    %205 = vmatprep.subr.bf16.mxu0 0
    %206 = vmatpush1.bf16.msra.mxu0 %v196
    %207 = vmatprep.subr.bf16.mxu0 0
    %208 = vmatpush1.bf16.msra.mxu0 %v195
    %209 = vmatprep.subr.bf16.mxu0 0
    %210 = vmatpush1.bf16.msra.mxu0 %v194
    %211 = vmatprep.subr.bf16.mxu0 0
    %212 = vmatpush1.bf16.msra.mxu0 %v193
    %213 = vmatprep.subr.bf16.mxu0 0
    %214 = vmatpush1.bf16.msra.mxu0 %v192
    %215 = vmatprep.subr.bf16.mxu0 0
    %216 = vmatpush1.bf16.msra.mxu0 %v191
    %217 = vmatprep.subr.bf16.mxu0 0
    %218 = vmatpush1.bf16.msra.mxu0 %v190
    %219 = vmatprep.subr.bf16.mxu0 0
    %220 = vmatpush1.bf16.msra.mxu0 %v189
    %221 = vmatprep.subr.bf16.mxu0 0
    %222 = vmatpush2.bf16.msra.mxu0 0
    %223 = vmatprep.subr.bf16.mxu0 0
    %224 = vmatpush2.bf16.msra.mxu0 0
    %225 = vmatprep.subr.bf16.mxu0 0
    %226 = vmatpush2.bf16.msra.mxu0 0
    %227 = vmatprep.subr.bf16.mxu0 0
    %228 = vmatpush2.bf16.msra.mxu0 0
    %229 = vmatprep.subr.bf16.mxu0 0
    %230 = vmatpush2.bf16.msra.mxu0 0
    %231 = vmatprep.subr.bf16.mxu0 0
    %232 = vmatpush2.bf16.msra.mxu0 0
    %233 = vmatprep.subr.bf16.mxu0 0
    %234 = vmatpush2.bf16.msra.mxu0 0
    %235 = vmatprep.subr.bf16.mxu0 0
    %236 = vmatpush2.bf16.msra.mxu0 0
    %237 = vmatprep.mubr.bf16.mxu0 0
    %238 = vmatmul.mubr.bf16.gmra.mxu0 %v134
    %v239 = vpop.f32.mrf.mxu0
    %v240 = vadd.f32 %v155, %v239
    %v241 = vpop.f32.mrf.mxu0
    %v242 = vpop.f32.mrf.mxu0
    %v243 = vpop.f32.mrf.mxu0
    %244 = vdwg.mxu0
    %v245 = vadd.f32 %v133, %v240
    %v247 = vlaneseq
    %v248 = vshrl.u32 %v247, 7
    %v249 = vsub.s32 0, %v248
    %v250 = vrot.slane %v130, %v249
    %v252 = vsub.f32 %v245, %v250
    %vm253 = vcmp.gt.f32.partialorder %v252, 0.0
    %v254 = vsel %vm253, 1, 0
    %v255 = vcvt.s32.f32 %v254
    %v256 = vmul.f32 %v255, %v245
    %v257 = vsub.f32 %v245, %v256
    %v259 = vlaneseq
    %v260 = vshrl.u32 %v259, 7
    %v261 = vsub.s32 0, %v260
    %v262 = vrot.slane %v131, %v261
    %v264 = vmul.f32 %v257, %v262
    %v265 = vpack.c.bf16 %v256, %v256
    %v266 = vld [vmem:[#allocation9] sm:$0xff]
    %v267 = vld [vmem:[#allocation9 + $0x8] sm:$0xf]
    %v268 = vld [vmem:[#allocation9 + $0xc] sm:$0xff]
    %v269 = vld [vmem:[#allocation9 + $0x14] sm:$0xf]
    %v270 = vld [vmem:[#allocation9 + $0x18] sm:$0xff]
    %v271 = vld [vmem:[#allocation9 + $0x20] sm:$0xf]
    %v272 = vld [vmem:[#allocation9 + $0x24] sm:$0xff]
    %v273 = vld [vmem:[#allocation9 + $0x2c] sm:$0xf]
    %v274 = vld [vmem:[#allocation9 + $0x30] sm:$0xff]
    %v275 = vld [vmem:[#allocation9 + $0x38] sm:$0xf]
    %v276 = vld [vmem:[#allocation9 + $0x3c] sm:$0xff]
    %v277 = vld [vmem:[#allocation9 + $0x44] sm:$0xf]
    %v278 = vld [vmem:[#allocation9 + $0x48] sm:$0xff]
    %v279 = vld [vmem:[#allocation9 + $0x50] sm:$0xf]
    %v280 = vld [vmem:[#allocation9 + $0x54] sm:$0xff]
    %v281 = vld [vmem:[#allocation9 + $0x5c] sm:$0xf]
    %v282 = vld [vmem:[#allocation9 + $0x60] sm:$0xff]
    %v283 = vld [vmem:[#allocation9 + $0x68] sm:$0xf]
    %v284 = vld [vmem:[#allocation9 + $0x6c] sm:$0xff]
    %v285 = vld [vmem:[#allocation9 + $0x74] sm:$0xf]
    %v286 = vld [vmem:[#allocation9 + $0x78] sm:$0xff]
    %v287 = vld [vmem:[#allocation9 + $0x80] sm:$0xf]
    %v288 = vld [vmem:[#allocation9 + $0x84] sm:$0xff]
    %v289 = vld [vmem:[#allocation9 + $0x8c] sm:$0xf]
    %v290 = vld [vmem:[#allocation9 + $0x90] sm:$0xff]
    %v291 = vld [vmem:[#allocation9 + $0x98] sm:$0xf]
    %v292 = vld [vmem:[#allocation9 + $0x9c] sm:$0xff]
    %v293 = vld [vmem:[#allocation9 + $0xa4] sm:$0xf]
    %v294 = vld [vmem:[#allocation9 + $0xa8] sm:$0xff]
    %v295 = vld [vmem:[#allocation9 + $0xb0] sm:$0xf]
    %v296 = vld [vmem:[#allocation9 + $0xb4] sm:$0xff]
    %v297 = vld [vmem:[#allocation9 + $0xbc] sm:$0xf]
    %v299 = vlaneseq
    %v300 = vshrl.u32 %v299, 7
    %v301 = vsub.s32 0, %v300
    %v302 = vrot.slane %v129, %v301
    %v303 = vlaneseq
    %v304 = vshrl.u32 %v303, 7
    %v305 = vsub.s32 1, %v304
    %v306 = vrot.slane %v129, %v305
    %v307 = vlaneseq
    %v308 = vshrl.u32 %v307, 7
    %v309 = vsub.s32 2, %v308
    %v310 = vrot.slane %v129, %v309
    %v346 = vunpack.c.l.b16 %v266
    %v347 = vunpack.c.h.b16 %v266
    %v348 = vunpack.c.l.b16 %v267
    %v349 = vunpack.c.l.b16 %v268
    %v350 = vunpack.c.h.b16 %v268
    %v351 = vunpack.c.l.b16 %v269
    %v352 = vunpack.c.l.b16 %v270
    %v353 = vunpack.c.h.b16 %v270
    %v354 = vunpack.c.l.b16 %v271
    %v355 = vunpack.c.l.b16 %v272
    %v356 = vunpack.c.h.b16 %v272
    %v357 = vunpack.c.l.b16 %v273
    %v358 = vunpack.c.l.b16 %v274
    %v359 = vunpack.c.h.b16 %v274
    %v360 = vunpack.c.l.b16 %v275
    %v361 = vunpack.c.l.b16 %v276
    %v362 = vunpack.c.h.b16 %v276
    %v363 = vunpack.c.l.b16 %v277
    %v364 = vunpack.c.l.b16 %v278
    %v365 = vunpack.c.h.b16 %v278
    %v366 = vunpack.c.l.b16 %v279
    %v367 = vunpack.c.l.b16 %v280
    %v368 = vunpack.c.h.b16 %v280
    %v369 = vunpack.c.l.b16 %v281
    %v370 = vunpack.c.l.b16 %v282
    %v371 = vunpack.c.h.b16 %v282
    %v372 = vunpack.c.l.b16 %v283
    %v373 = vunpack.c.l.b16 %v284
    %v374 = vunpack.c.h.b16 %v284
    %v375 = vunpack.c.l.b16 %v285
    %v376 = vunpack.c.l.b16 %v286
    %v377 = vunpack.c.h.b16 %v286
    %v378 = vunpack.c.l.b16 %v287
    %v379 = vunpack.c.l.b16 %v288
    %v380 = vunpack.c.h.b16 %v288
    %v381 = vunpack.c.l.b16 %v289
    %v382 = vunpack.c.l.b16 %v290
    %v383 = vunpack.c.h.b16 %v290
    %v384 = vunpack.c.l.b16 %v291
    %v385 = vunpack.c.l.b16 %v292
    %v386 = vunpack.c.h.b16 %v292
    %v387 = vunpack.c.l.b16 %v293
    %v388 = vunpack.c.l.b16 %v294
    %v389 = vunpack.c.h.b16 %v294
    %v390 = vunpack.c.l.b16 %v295
    %v391 = vunpack.c.l.b16 %v296
    %v392 = vunpack.c.h.b16 %v296
    %v393 = vunpack.c.l.b16 %v297
    %v394 = vpack.c.b16 %v349, %v346
    %v395 = vpack.c.b16 %v350, %v347
    %v396 = vpack.c.b16 %v351, %v348
    %v397 = vpack.c.b16 %v355, %v352
    %v398 = vpack.c.b16 %v356, %v353
    %v399 = vpack.c.b16 %v357, %v354
    %v400 = vpack.c.b16 %v361, %v358
    %v401 = vpack.c.b16 %v362, %v359
    %v402 = vpack.c.b16 %v363, %v360
    %v403 = vpack.c.b16 %v367, %v364
    %v404 = vpack.c.b16 %v368, %v365
    %v405 = vpack.c.b16 %v369, %v366
    %v406 = vpack.c.b16 %v373, %v370
    %v407 = vpack.c.b16 %v374, %v371
    %v408 = vpack.c.b16 %v375, %v372
    %v409 = vpack.c.b16 %v379, %v376
    %v410 = vpack.c.b16 %v380, %v377
    %v411 = vpack.c.b16 %v381, %v378
    %v412 = vpack.c.b16 %v385, %v382
    %v413 = vpack.c.b16 %v386, %v383
    %v414 = vpack.c.b16 %v387, %v384
    %v415 = vpack.c.b16 %v391, %v388
    %v416 = vpack.c.b16 %v392, %v389
    %v417 = vpack.c.b16 %v393, %v390
    %442 = vmatprep.subr.bf16.mxu0 %v416
    %443 = vmatpush1.bf16.msra.mxu0 %v415
    %444 = vmatprep.subr.bf16.mxu0 %v413
    %445 = vmatpush1.bf16.msra.mxu0 %v412
    %446 = vmatprep.subr.bf16.mxu0 %v410
    %447 = vmatpush1.bf16.msra.mxu0 %v409
    %448 = vmatprep.subr.bf16.mxu0 %v407
    %449 = vmatpush1.bf16.msra.mxu0 %v406
    %450 = vmatprep.subr.bf16.mxu0 %v404
    %451 = vmatpush1.bf16.msra.mxu0 %v403
    %452 = vmatprep.subr.bf16.mxu0 %v401
    %453 = vmatpush1.bf16.msra.mxu0 %v400
    %454 = vmatprep.subr.bf16.mxu0 %v398
    %455 = vmatpush1.bf16.msra.mxu0 %v397
    %456 = vmatprep.subr.bf16.mxu0 %v395
    %457 = vmatpush1.bf16.msra.mxu0 %v394
    %458 = vmatprep.subr.bf16.mxu0 0
    %459 = vmatpush2.bf16.msra.mxu0 0
    %460 = vmatprep.subr.bf16.mxu0 0
    %461 = vmatpush2.bf16.msra.mxu0 0
    %462 = vmatprep.subr.bf16.mxu0 0
    %463 = vmatpush2.bf16.msra.mxu0 0
    %464 = vmatprep.subr.bf16.mxu0 0
    %465 = vmatpush2.bf16.msra.mxu0 0
    %466 = vmatprep.subr.bf16.mxu0 0
    %467 = vmatpush2.bf16.msra.mxu0 0
    %468 = vmatprep.subr.bf16.mxu0 0
    %469 = vmatpush2.bf16.msra.mxu0 0
    %470 = vmatprep.subr.bf16.mxu0 0
    %471 = vmatpush2.bf16.msra.mxu0 0
    %472 = vmatprep.subr.bf16.mxu0 0
    %473 = vmatpush2.bf16.msra.mxu0 0
    %474 = vmatprep.mubr.bf16.mxu0 0
    %475 = vmatmul.mubr.bf16.gmra.mxu0 %v265
    %v476 = vpop.f32.mrf.mxu0
    %v477 = vadd.f32 %v302, %v476
    %v478 = vpop.f32.mrf.mxu0
    %v479 = vadd.f32 %v306, %v478
    %v480 = vpop.f32.mrf.mxu0
    %v481 = vpop.f32.mrf.mxu0
    %482 = vdwg.mxu0
    %483 = vmatprep.subr.bf16.mxu0 0
    %484 = vmatpush1.bf16.msra.mxu0 %v417
    %485 = vmatprep.subr.bf16.mxu0 0
    %486 = vmatpush1.bf16.msra.mxu0 %v414
    %487 = vmatprep.subr.bf16.mxu0 0
    %488 = vmatpush1.bf16.msra.mxu0 %v411
    %489 = vmatprep.subr.bf16.mxu0 0
    %490 = vmatpush1.bf16.msra.mxu0 %v408
    %491 = vmatprep.subr.bf16.mxu0 0
    %492 = vmatpush1.bf16.msra.mxu0 %v405
    %493 = vmatprep.subr.bf16.mxu0 0
    %494 = vmatpush1.bf16.msra.mxu0 %v402
    %495 = vmatprep.subr.bf16.mxu0 0
    %496 = vmatpush1.bf16.msra.mxu0 %v399
    %497 = vmatprep.subr.bf16.mxu0 0
    %498 = vmatpush1.bf16.msra.mxu0 %v396
    %499 = vmatprep.subr.bf16.mxu0 0
    %500 = vmatpush2.bf16.msra.mxu0 0
    %501 = vmatprep.subr.bf16.mxu0 0
    %502 = vmatpush2.bf16.msra.mxu0 0
    %503 = vmatprep.subr.bf16.mxu0 0
    %504 = vmatpush2.bf16.msra.mxu0 0
    %505 = vmatprep.subr.bf16.mxu0 0
    %506 = vmatpush2.bf16.msra.mxu0 0
    %507 = vmatprep.subr.bf16.mxu0 0
    %508 = vmatpush2.bf16.msra.mxu0 0
    %509 = vmatprep.subr.bf16.mxu0 0
    %510 = vmatpush2.bf16.msra.mxu0 0
    %511 = vmatprep.subr.bf16.mxu0 0
    %512 = vmatpush2.bf16.msra.mxu0 0
    %513 = vmatprep.subr.bf16.mxu0 0
    %514 = vmatpush2.bf16.msra.mxu0 0
    %515 = vmatprep.mubr.bf16.mxu0 0
    %516 = vmatmul.mubr.bf16.gmra.mxu0 %v265
    %v517 = vpop.f32.mrf.mxu0
    %v518 = vadd.f32 %v310, %v517
    %v519 = vpop.f32.mrf.mxu0
    %v520 = vpop.f32.mrf.mxu0
    %v521 = vpop.f32.mrf.mxu0
    %522 = vdwg.mxu0
    %v523 = vpack.c.bf16 %v132, %v132
    %v524 = vld [vmem:[#allocation10] sm:$0xff]
    %v525 = vld [vmem:[#allocation10 + $0x8] sm:$0xff]
    %v526 = vld [vmem:[#allocation10 + $0x10] sm:$0xff]
    %v527 = vld [vmem:[#allocation10 + $0x18] sm:$0xff]
    %v528 = vld [vmem:[#allocation10 + $0x20] sm:$0xff]
    %v529 = vld [vmem:[#allocation10 + $0x28] sm:$0xff]
    %v530 = vld [vmem:[#allocation10 + $0x30] sm:$0xff]
    %v531 = vld [vmem:[#allocation10 + $0x38] sm:$0xff]
    %v532 = vld [vmem:[#allocation10 + $0x40] sm:$0xff]
    %v533 = vld [vmem:[#allocation10 + $0x48] sm:$0xff]
    %v534 = vld [vmem:[#allocation10 + $0x50] sm:$0xff]
    %v535 = vld [vmem:[#allocation10 + $0x58] sm:$0xff]
    %v536 = vld [vmem:[#allocation10 + $0x60] sm:$0xff]
    %v537 = vld [vmem:[#allocation10 + $0x68] sm:$0xff]
    %v538 = vld [vmem:[#allocation10 + $0x70] sm:$0xff]
    %v539 = vld [vmem:[#allocation10 + $0x78] sm:$0xff]
    %v556 = vunpack.c.l.b16 %v524
    %v557 = vunpack.c.h.b16 %v524
    %v558 = vunpack.c.l.b16 %v525
    %v559 = vunpack.c.h.b16 %v525
    %v560 = vunpack.c.l.b16 %v526
    %v561 = vunpack.c.h.b16 %v526
    %v562 = vunpack.c.l.b16 %v527
    %v563 = vunpack.c.h.b16 %v527
    %v564 = vunpack.c.l.b16 %v528
    %v565 = vunpack.c.h.b16 %v528
    %v566 = vunpack.c.l.b16 %v529
    %v567 = vunpack.c.h.b16 %v529
    %v568 = vunpack.c.l.b16 %v530
    %v569 = vunpack.c.h.b16 %v530
    %v570 = vunpack.c.l.b16 %v531
    %v571 = vunpack.c.h.b16 %v531
    %v572 = vunpack.c.l.b16 %v532
    %v573 = vunpack.c.h.b16 %v532
    %v574 = vunpack.c.l.b16 %v533
    %v575 = vunpack.c.h.b16 %v533
    %v576 = vunpack.c.l.b16 %v534
    %v577 = vunpack.c.h.b16 %v534
    %v578 = vunpack.c.l.b16 %v535
    %v579 = vunpack.c.h.b16 %v535
    %v580 = vunpack.c.l.b16 %v536
    %v581 = vunpack.c.h.b16 %v536
    %v582 = vunpack.c.l.b16 %v537
    %v583 = vunpack.c.h.b16 %v537
    %v584 = vunpack.c.l.b16 %v538
    %v585 = vunpack.c.h.b16 %v538
    %v586 = vunpack.c.l.b16 %v539
    %v587 = vunpack.c.h.b16 %v539
    %v588 = vpack.c.b16 %v558, %v556
    %v589 = vpack.c.b16 %v559, %v557
    %v590 = vpack.c.b16 %v562, %v560
    %v591 = vpack.c.b16 %v563, %v561
    %v592 = vpack.c.b16 %v566, %v564
    %v593 = vpack.c.b16 %v567, %v565
    %v594 = vpack.c.b16 %v570, %v568
    %v595 = vpack.c.b16 %v571, %v569
    %v596 = vpack.c.b16 %v574, %v572
    %v597 = vpack.c.b16 %v575, %v573
    %v598 = vpack.c.b16 %v578, %v576
    %v599 = vpack.c.b16 %v579, %v577
    %v600 = vpack.c.b16 %v582, %v580
    %v601 = vpack.c.b16 %v583, %v581
    %v602 = vpack.c.b16 %v586, %v584
    %v603 = vpack.c.b16 %v587, %v585
    %620 = vmatprep.subr.bf16.mxu0 %v603
    %621 = vmatpush1.bf16.msra.mxu0 %v602
    %622 = vmatprep.subr.bf16.mxu0 %v601
    %623 = vmatpush1.bf16.msra.mxu0 %v600
    %624 = vmatprep.subr.bf16.mxu0 %v599
    %625 = vmatpush1.bf16.msra.mxu0 %v598
    %626 = vmatprep.subr.bf16.mxu0 %v597
    %627 = vmatpush1.bf16.msra.mxu0 %v596
    %628 = vmatprep.subr.bf16.mxu0 %v595
    %629 = vmatpush1.bf16.msra.mxu0 %v594
    %630 = vmatprep.subr.bf16.mxu0 %v593
    %631 = vmatpush1.bf16.msra.mxu0 %v592
    %632 = vmatprep.subr.bf16.mxu0 %v591
    %633 = vmatpush1.bf16.msra.mxu0 %v590
    %634 = vmatprep.subr.bf16.mxu0 %v589
    %635 = vmatpush1.bf16.msra.mxu0 %v588
    %636 = vmatprep.subr.bf16.mxu0 0
    %637 = vmatpush2.bf16.msra.mxu0 0
    %638 = vmatprep.subr.bf16.mxu0 0
    %639 = vmatpush2.bf16.msra.mxu0 0
    %640 = vmatprep.subr.bf16.mxu0 0
    %641 = vmatpush2.bf16.msra.mxu0 0
    %642 = vmatprep.subr.bf16.mxu0 0
    %643 = vmatpush2.bf16.msra.mxu0 0
    %644 = vmatprep.subr.bf16.mxu0 0
    %645 = vmatpush2.bf16.msra.mxu0 0
    %646 = vmatprep.subr.bf16.mxu0 0
    %647 = vmatpush2.bf16.msra.mxu0 0
    %648 = vmatprep.subr.bf16.mxu0 0
    %649 = vmatpush2.bf16.msra.mxu0 0
    %650 = vmatprep.subr.bf16.mxu0 0
    %651 = vmatpush2.bf16.msra.mxu0 0
    %652 = vmatprep.mubr.bf16.mxu0 0
    %653 = vmatmul.mubr.bf16.gmra.mxu0 %v523
    %v654 = vpop.f32.mrf.mxu0
    %v655 = vadd.f32 0.0, %v654
    %v656 = vpop.f32.mrf.mxu0
    %v657 = vadd.f32 0.0, %v656
    %v658 = vpop.f32.mrf.mxu0
    %v659 = vpop.f32.mrf.mxu0
    %660 = vdwg.mxu0
    %v661 = vadd.f32 %v477, %v655
    %v662 = vxor.u32 %v661, 2147483648
    %v663 = vmul.f32 %v662, 1.442695
    %v664 = vpow.pop %v663
    %v665 = vadd.f32 %v664, 1.0
    %v666 = vrcp.pop %v665
    %v667 = vmul.f32 1.0, %v666
    %v668 = vadd.f32 %v479, %v657
    %v669 = vxor.u32 %v668, 2147483648
    %v670 = vmul.f32 %v669, 1.442695
    %v671 = vpow.pop %v670
    %v672 = vadd.f32 %v671, 1.0
    %v673 = vrcp.pop %v672
    %v674 = vmul.f32 1.0, %v673
    %v675 = vmul.f32 %v667, %v132
    %v676 = vpack.c.bf16 %v675, %v675
    %v677 = vld [vmem:[#allocation12] sm:$0xf]
    %v678 = vld [vmem:[#allocation12 + $0x4] sm:$0xf]
    %v679 = vld [vmem:[#allocation12 + $0x8] sm:$0xf]
    %v680 = vld [vmem:[#allocation12 + $0xc] sm:$0xf]
    %v681 = vld [vmem:[#allocation12 + $0x10] sm:$0xf]
    %v682 = vld [vmem:[#allocation12 + $0x14] sm:$0xf]
    %v683 = vld [vmem:[#allocation12 + $0x18] sm:$0xf]
    %v684 = vld [vmem:[#allocation12 + $0x1c] sm:$0xf]
    %v685 = vld [vmem:[#allocation12 + $0x20] sm:$0xf]
    %v686 = vld [vmem:[#allocation12 + $0x24] sm:$0xf]
    %v687 = vld [vmem:[#allocation12 + $0x28] sm:$0xf]
    %v688 = vld [vmem:[#allocation12 + $0x2c] sm:$0xf]
    %v689 = vld [vmem:[#allocation12 + $0x30] sm:$0xf]
    %v690 = vld [vmem:[#allocation12 + $0x34] sm:$0xf]
    %v691 = vld [vmem:[#allocation12 + $0x38] sm:$0xf]
    %v692 = vld [vmem:[#allocation12 + $0x3c] sm:$0xf]
    %v709 = vunpack.c.l.b16 %v677
    %v710 = vunpack.c.l.b16 %v678
    %v711 = vunpack.c.l.b16 %v679
    %v712 = vunpack.c.l.b16 %v680
    %v713 = vunpack.c.l.b16 %v681
    %v714 = vunpack.c.l.b16 %v682
    %v715 = vunpack.c.l.b16 %v683
    %v716 = vunpack.c.l.b16 %v684
    %v717 = vunpack.c.l.b16 %v685
    %v718 = vunpack.c.l.b16 %v686
    %v719 = vunpack.c.l.b16 %v687
    %v720 = vunpack.c.l.b16 %v688
    %v721 = vunpack.c.l.b16 %v689
    %v722 = vunpack.c.l.b16 %v690
    %v723 = vunpack.c.l.b16 %v691
    %v724 = vunpack.c.l.b16 %v692
    %v725 = vpack.c.b16 %v710, %v709
    %v726 = vpack.c.b16 %v712, %v711
    %v727 = vpack.c.b16 %v714, %v713
    %v728 = vpack.c.b16 %v716, %v715
    %v729 = vpack.c.b16 %v718, %v717
    %v730 = vpack.c.b16 %v720, %v719
    %v731 = vpack.c.b16 %v722, %v721
    %v732 = vpack.c.b16 %v724, %v723
    %741 = vmatprep.subr.bf16.mxu0 0
    %742 = vmatpush1.bf16.msra.mxu0 %v732
    %743 = vmatprep.subr.bf16.mxu0 0
    %744 = vmatpush1.bf16.msra.mxu0 %v731
    %745 = vmatprep.subr.bf16.mxu0 0
    %746 = vmatpush1.bf16.msra.mxu0 %v730
    %747 = vmatprep.subr.bf16.mxu0 0
    %748 = vmatpush1.bf16.msra.mxu0 %v729
    %749 = vmatprep.subr.bf16.mxu0 0
    %750 = vmatpush1.bf16.msra.mxu0 %v728
    %751 = vmatprep.subr.bf16.mxu0 0
    %752 = vmatpush1.bf16.msra.mxu0 %v727
    %753 = vmatprep.subr.bf16.mxu0 0
    %754 = vmatpush1.bf16.msra.mxu0 %v726
    %755 = vmatprep.subr.bf16.mxu0 0
    %756 = vmatpush1.bf16.msra.mxu0 %v725
    %757 = vmatprep.subr.bf16.mxu0 0
    %758 = vmatpush2.bf16.msra.mxu0 0
    %759 = vmatprep.subr.bf16.mxu0 0
    %760 = vmatpush2.bf16.msra.mxu0 0
    %761 = vmatprep.subr.bf16.mxu0 0
    %762 = vmatpush2.bf16.msra.mxu0 0
    %763 = vmatprep.subr.bf16.mxu0 0
    %764 = vmatpush2.bf16.msra.mxu0 0
    %765 = vmatprep.subr.bf16.mxu0 0
    %766 = vmatpush2.bf16.msra.mxu0 0
    %767 = vmatprep.subr.bf16.mxu0 0
    %768 = vmatpush2.bf16.msra.mxu0 0
    %769 = vmatprep.subr.bf16.mxu0 0
    %770 = vmatpush2.bf16.msra.mxu0 0
    %771 = vmatprep.subr.bf16.mxu0 0
    %772 = vmatpush2.bf16.msra.mxu0 0
    %773 = vmatprep.mubr.bf16.mxu0 0
    %774 = vmatmul.mubr.bf16.gmra.mxu0 %v676
    %v775 = vpop.f32.mrf.mxu0
    %v776 = vadd.f32 0.0, %v775
    %v777 = vpop.f32.mrf.mxu0
    %v778 = vpop.f32.mrf.mxu0
    %v779 = vpop.f32.mrf.mxu0
    %780 = vdwg.mxu0
    %v781 = vadd.f32 %v518, %v776
    %v782 = vtanh.pop %v781
    %v783 = vsub.f32 1.0, %v674
    %v784 = vmul.f32 %v783, %v132
    %v785 = vmul.f32 %v674, %v782
    %v786 = vadd.f32 %v784, %v785
    %s787 = scalar_lea.vmem [#allocation4], 4
    %v788 = vld [vmem:[%s787] sm:$0xf]
    %789 = vmatprep.subr.bf16.mxu0 0
    %790 = vmatpush1.bf16.msra.mxu0 %v196
    %791 = vmatprep.subr.bf16.mxu0 0
    %792 = vmatpush1.bf16.msra.mxu0 %v195
    %793 = vmatprep.subr.bf16.mxu0 0
    %794 = vmatpush1.bf16.msra.mxu0 %v194
    %795 = vmatprep.subr.bf16.mxu0 0
    %796 = vmatpush1.bf16.msra.mxu0 %v193
    %797 = vmatprep.subr.bf16.mxu0 0
    %798 = vmatpush1.bf16.msra.mxu0 %v192
    %799 = vmatprep.subr.bf16.mxu0 0
    %800 = vmatpush1.bf16.msra.mxu0 %v191
    %801 = vmatprep.subr.bf16.mxu0 0
    %802 = vmatpush1.bf16.msra.mxu0 %v190
    %803 = vmatprep.subr.bf16.mxu0 0
    %804 = vmatpush1.bf16.msra.mxu0 %v189
    %805 = vmatprep.subr.bf16.mxu0 0
    %806 = vmatpush2.bf16.msra.mxu0 0
    %807 = vmatprep.subr.bf16.mxu0 0
    %808 = vmatpush2.bf16.msra.mxu0 0
    %809 = vmatprep.subr.bf16.mxu0 0
    %810 = vmatpush2.bf16.msra.mxu0 0
    %811 = vmatprep.subr.bf16.mxu0 0
    %812 = vmatpush2.bf16.msra.mxu0 0
    %813 = vmatprep.subr.bf16.mxu0 0
    %814 = vmatpush2.bf16.msra.mxu0 0
    %815 = vmatprep.subr.bf16.mxu0 0
    %816 = vmatpush2.bf16.msra.mxu0 0
    %817 = vmatprep.subr.bf16.mxu0 0
    %818 = vmatpush2.bf16.msra.mxu0 0
    %819 = vmatprep.subr.bf16.mxu0 0
    %820 = vmatpush2.bf16.msra.mxu0 0
    %821 = vmatprep.mubr.bf16.mxu0 0
    %822 = vmatmul.mubr.bf16.gmra.mxu0 %v788
    %v823 = vpop.f32.mrf.mxu0
    %v824 = vadd.f32 %v155, %v823
    %v825 = vpop.f32.mrf.mxu0
    %v826 = vpop.f32.mrf.mxu0
    %v827 = vpop.f32.mrf.mxu0
    %828 = vdwg.mxu0
    %v829 = vadd.f32 %v264, %v824
    %v830 = vsub.f32 %v829, %v250
    %vm831 = vcmp.gt.f32.partialorder %v830, 0.0
    %v832 = vsel %vm831, 1, 0
    %v833 = vcvt.s32.f32 %v832
    %v834 = vmul.f32 %v833, %v829
    %v835 = vsub.f32 %v829, %v834
    %v836 = vmul.f32 %v835, %v262
    %v837 = vpack.c.bf16 %v834, %v834
    %838 = vmatprep.subr.bf16.mxu0 %v416
    %839 = vmatpush1.bf16.msra.mxu0 %v415
    %840 = vmatprep.subr.bf16.mxu0 %v413
    %841 = vmatpush1.bf16.msra.mxu0 %v412
    %842 = vmatprep.subr.bf16.mxu0 %v410
    %843 = vmatpush1.bf16.msra.mxu0 %v409
    %844 = vmatprep.subr.bf16.mxu0 %v407
    %845 = vmatpush1.bf16.msra.mxu0 %v406
    %846 = vmatprep.subr.bf16.mxu0 %v404
    %847 = vmatpush1.bf16.msra.mxu0 %v403
    %848 = vmatprep.subr.bf16.mxu0 %v401
    %849 = vmatpush1.bf16.msra.mxu0 %v400
    %850 = vmatprep.subr.bf16.mxu0 %v398
    %851 = vmatpush1.bf16.msra.mxu0 %v397
    %852 = vmatprep.subr.bf16.mxu0 %v395
    %853 = vmatpush1.bf16.msra.mxu0 %v394
    %854 = vmatprep.subr.bf16.mxu0 0
    %855 = vmatpush2.bf16.msra.mxu0 0
    %856 = vmatprep.subr.bf16.mxu0 0
    %857 = vmatpush2.bf16.msra.mxu0 0
    %858 = vmatprep.subr.bf16.mxu0 0
    %859 = vmatpush2.bf16.msra.mxu0 0
    %860 = vmatprep.subr.bf16.mxu0 0
    %861 = vmatpush2.bf16.msra.mxu0 0
    %862 = vmatprep.subr.bf16.mxu0 0
    %863 = vmatpush2.bf16.msra.mxu0 0
    %864 = vmatprep.subr.bf16.mxu0 0
    %865 = vmatpush2.bf16.msra.mxu0 0
    %866 = vmatprep.subr.bf16.mxu0 0
    %867 = vmatpush2.bf16.msra.mxu0 0
    %868 = vmatprep.subr.bf16.mxu0 0
    %869 = vmatpush2.bf16.msra.mxu0 0
    %870 = vmatprep.mubr.bf16.mxu0 0
    %871 = vmatmul.mubr.bf16.gmra.mxu0 %v837
    %v872 = vpop.f32.mrf.mxu0
    %v873 = vadd.f32 %v302, %v872
    %v874 = vpop.f32.mrf.mxu0
    %v875 = vadd.f32 %v306, %v874
    %v876 = vpop.f32.mrf.mxu0
    %v877 = vpop.f32.mrf.mxu0
    %878 = vdwg.mxu0
    %879 = vmatprep.subr.bf16.mxu0 0
    %880 = vmatpush1.bf16.msra.mxu0 %v417
    %881 = vmatprep.subr.bf16.mxu0 0
    %882 = vmatpush1.bf16.msra.mxu0 %v414
    %883 = vmatprep.subr.bf16.mxu0 0
    %884 = vmatpush1.bf16.msra.mxu0 %v411
    %885 = vmatprep.subr.bf16.mxu0 0
    %886 = vmatpush1.bf16.msra.mxu0 %v408
    %887 = vmatprep.subr.bf16.mxu0 0
    %888 = vmatpush1.bf16.msra.mxu0 %v405
    %889 = vmatprep.subr.bf16.mxu0 0
    %890 = vmatpush1.bf16.msra.mxu0 %v402
    %891 = vmatprep.subr.bf16.mxu0 0
    %892 = vmatpush1.bf16.msra.mxu0 %v399
    %893 = vmatprep.subr.bf16.mxu0 0
    %894 = vmatpush1.bf16.msra.mxu0 %v396
    %895 = vmatprep.subr.bf16.mxu0 0
    %896 = vmatpush2.bf16.msra.mxu0 0
    %897 = vmatprep.subr.bf16.mxu0 0
    %898 = vmatpush2.bf16.msra.mxu0 0
    %899 = vmatprep.subr.bf16.mxu0 0
    %900 = vmatpush2.bf16.msra.mxu0 0
    %901 = vmatprep.subr.bf16.mxu0 0
    %902 = vmatpush2.bf16.msra.mxu0 0
    %903 = vmatprep.subr.bf16.mxu0 0
    %904 = vmatpush2.bf16.msra.mxu0 0
    %905 = vmatprep.subr.bf16.mxu0 0
    %906 = vmatpush2.bf16.msra.mxu0 0
    %907 = vmatprep.subr.bf16.mxu0 0
    %908 = vmatpush2.bf16.msra.mxu0 0
    %909 = vmatprep.subr.bf16.mxu0 0
    %910 = vmatpush2.bf16.msra.mxu0 0
    %911 = vmatprep.mubr.bf16.mxu0 0
    %912 = vmatmul.mubr.bf16.gmra.mxu0 %v837
    %v913 = vpop.f32.mrf.mxu0
    %v914 = vadd.f32 %v310, %v913
    %v915 = vpop.f32.mrf.mxu0
    %v916 = vpop.f32.mrf.mxu0
    %v917 = vpop.f32.mrf.mxu0
    %918 = vdwg.mxu0
    %v919 = vpack.c.bf16 %v786, %v786
    %920 = vmatprep.subr.bf16.mxu0 %v603
    %921 = vmatpush1.bf16.msra.mxu0 %v602
    %922 = vmatprep.subr.bf16.mxu0 %v601
    %923 = vmatpush1.bf16.msra.mxu0 %v600
    %924 = vmatprep.subr.bf16.mxu0 %v599
    %925 = vmatpush1.bf16.msra.mxu0 %v598
    %926 = vmatprep.subr.bf16.mxu0 %v597
    %927 = vmatpush1.bf16.msra.mxu0 %v596
    %928 = vmatprep.subr.bf16.mxu0 %v595
    %929 = vmatpush1.bf16.msra.mxu0 %v594
    %930 = vmatprep.subr.bf16.mxu0 %v593
    %931 = vmatpush1.bf16.msra.mxu0 %v592
    %932 = vmatprep.subr.bf16.mxu0 %v591
    %933 = vmatpush1.bf16.msra.mxu0 %v590
    %934 = vmatprep.subr.bf16.mxu0 %v589
    %935 = vmatpush1.bf16.msra.mxu0 %v588
    %936 = vmatprep.subr.bf16.mxu0 0
    %937 = vmatpush2.bf16.msra.mxu0 0
    %938 = vmatprep.subr.bf16.mxu0 0
    %939 = vmatpush2.bf16.msra.mxu0 0
    %940 = vmatprep.subr.bf16.mxu0 0
    %941 = vmatpush2.bf16.msra.mxu0 0
    %942 = vmatprep.subr.bf16.mxu0 0
    %943 = vmatpush2.bf16.msra.mxu0 0
    %944 = vmatprep.subr.bf16.mxu0 0
    %945 = vmatpush2.bf16.msra.mxu0 0
    %946 = vmatprep.subr.bf16.mxu0 0
    %947 = vmatpush2.bf16.msra.mxu0 0
    %948 = vmatprep.subr.bf16.mxu0 0
    %949 = vmatpush2.bf16.msra.mxu0 0
    %950 = vmatprep.subr.bf16.mxu0 0
    %951 = vmatpush2.bf16.msra.mxu0 0
    %952 = vmatprep.mubr.bf16.mxu0 0
    %953 = vmatmul.mubr.bf16.gmra.mxu0 %v919
    %v954 = vpop.f32.mrf.mxu0
    %v955 = vadd.f32 0.0, %v954
    %v956 = vpop.f32.mrf.mxu0
    %v957 = vadd.f32 0.0, %v956
    %v958 = vpop.f32.mrf.mxu0
    %v959 = vpop.f32.mrf.mxu0
    %960 = vdwg.mxu0
    %v961 = vadd.f32 %v873, %v955
    %v962 = vxor.u32 %v961, 2147483648
    %v963 = vmul.f32 %v962, 1.442695
    %v964 = vpow.pop %v963
    %v965 = vadd.f32 %v964, 1.0
    %v966 = vrcp.pop %v965
    %v967 = vmul.f32 1.0, %v966
    %v968 = vadd.f32 %v875, %v957
    %v969 = vxor.u32 %v968, 2147483648
    %v970 = vmul.f32 %v969, 1.442695
    %v971 = vpow.pop %v970
    %v972 = vadd.f32 %v971, 1.0
    %v973 = vrcp.pop %v972
    %v974 = vmul.f32 1.0, %v973
    %v975 = vmul.f32 %v967, %v786
    %v976 = vpack.c.bf16 %v975, %v975
    %977 = vmatprep.subr.bf16.mxu0 0
    %978 = vmatpush1.bf16.msra.mxu0 %v732
    %979 = vmatprep.subr.bf16.mxu0 0
    %980 = vmatpush1.bf16.msra.mxu0 %v731
    %981 = vmatprep.subr.bf16.mxu0 0
    %982 = vmatpush1.bf16.msra.mxu0 %v730
    %983 = vmatprep.subr.bf16.mxu0 0
    %984 = vmatpush1.bf16.msra.mxu0 %v729
    %985 = vmatprep.subr.bf16.mxu0 0
    %986 = vmatpush1.bf16.msra.mxu0 %v728
    %987 = vmatprep.subr.bf16.mxu0 0
    %988 = vmatpush1.bf16.msra.mxu0 %v727
    %989 = vmatprep.subr.bf16.mxu0 0
    %990 = vmatpush1.bf16.msra.mxu0 %v726
    %991 = vmatprep.subr.bf16.mxu0 0
    %992 = vmatpush1.bf16.msra.mxu0 %v725
    %993 = vmatprep.subr.bf16.mxu0 0
    %994 = vmatpush2.bf16.msra.mxu0 0
    %995 = vmatprep.subr.bf16.mxu0 0
    %996 = vmatpush2.bf16.msra.mxu0 0
    %997 = vmatprep.subr.bf16.mxu0 0
    %998 = vmatpush2.bf16.msra.mxu0 0
    %999 = vmatprep.subr.bf16.mxu0 0
    %1000 = vmatpush2.bf16.msra.mxu0 0
    %1001 = vmatprep.subr.bf16.mxu0 0
    %1002 = vmatpush2.bf16.msra.mxu0 0
    %1003 = vmatprep.subr.bf16.mxu0 0
    %1004 = vmatpush2.bf16.msra.mxu0 0
    %1005 = vmatprep.subr.bf16.mxu0 0
    %1006 = vmatpush2.bf16.msra.mxu0 0
    %1007 = vmatprep.subr.bf16.mxu0 0
    %1008 = vmatpush2.bf16.msra.mxu0 0
    %1009 = vmatprep.mubr.bf16.mxu0 0
    %1010 = vmatmul.mubr.bf16.gmra.mxu0 %v976
    %v1011 = vpop.f32.mrf.mxu0
    %v1012 = vadd.f32 0.0, %v1011
    %v1013 = vpop.f32.mrf.mxu0
    %v1014 = vpop.f32.mrf.mxu0
    %v1015 = vpop.f32.mrf.mxu0
    %1016 = vdwg.mxu0
    %v1017 = vadd.f32 %v914, %v1012
    %v1018 = vtanh.pop %v1017
    %v1019 = vsub.f32 1.0, %v974
    %v1020 = vmul.f32 %v1019, %v786
    %v1021 = vmul.f32 %v974, %v1018
    %v1022 = vadd.f32 %v1020, %v1021
    %s1023 = scalar_lea.vmem [#allocation4], 8
    %v1024 = vld [vmem:[%s1023] sm:$0xf]
    %1025 = vmatprep.subr.bf16.mxu0 0
    %1026 = vmatpush1.bf16.msra.mxu0 %v196
    %1027 = vmatprep.subr.bf16.mxu0 0
    %1028 = vmatpush1.bf16.msra.mxu0 %v195
    %1029 = vmatprep.subr.bf16.mxu0 0
    %1030 = vmatpush1.bf16.msra.mxu0 %v194
    %1031 = vmatprep.subr.bf16.mxu0 0
    %1032 = vmatpush1.bf16.msra.mxu0 %v193
    %1033 = vmatprep.subr.bf16.mxu0 0
    %1034 = vmatpush1.bf16.msra.mxu0 %v192
    %1035 = vmatprep.subr.bf16.mxu0 0
    %1036 = vmatpush1.bf16.msra.mxu0 %v191
    %1037 = vmatprep.subr.bf16.mxu0 0
    %1038 = vmatpush1.bf16.msra.mxu0 %v190
    %1039 = vmatprep.subr.bf16.mxu0 0
    %1040 = vmatpush1.bf16.msra.mxu0 %v189
    %1041 = vmatprep.subr.bf16.mxu0 0
    %1042 = vmatpush2.bf16.msra.mxu0 0
    %1043 = vmatprep.subr.bf16.mxu0 0
    %1044 = vmatpush2.bf16.msra.mxu0 0
    %1045 = vmatprep.subr.bf16.mxu0 0
    %1046 = vmatpush2.bf16.msra.mxu0 0
    %1047 = vmatprep.subr.bf16.mxu0 0
    %1048 = vmatpush2.bf16.msra.mxu0 0
    %1049 = vmatprep.subr.bf16.mxu0 0
    %1050 = vmatpush2.bf16.msra.mxu0 0
    %1051 = vmatprep.subr.bf16.mxu0 0
    %1052 = vmatpush2.bf16.msra.mxu0 0
    %1053 = vmatprep.subr.bf16.mxu0 0
    %1054 = vmatpush2.bf16.msra.mxu0 0
    %1055 = vmatprep.subr.bf16.mxu0 0
    %1056 = vmatpush2.bf16.msra.mxu0 0
    %1057 = vmatprep.mubr.bf16.mxu0 0
    %1058 = vmatmul.mubr.bf16.gmra.mxu0 %v1024
    %v1059 = vpop.f32.mrf.mxu0
    %v1060 = vadd.f32 %v155, %v1059
    %v1061 = vpop.f32.mrf.mxu0
    %v1062 = vpop.f32.mrf.mxu0
    %v1063 = vpop.f32.mrf.mxu0
    %1064 = vdwg.mxu0
    %v1065 = vadd.f32 %v836, %v1060
    %v1066 = vsub.f32 %v1065, %v250
    %vm1067 = vcmp.gt.f32.partialorder %v1066, 0.0
    %v1068 = vsel %vm1067, 1, 0
    %v1069 = vcvt.s32.f32 %v1068
    %v1070 = vmul.f32 %v1069, %v1065
    %v1071 = vsub.f32 %v1065, %v1070
    %v1072 = vmul.f32 %v1071, %v262
    %v1073 = vpack.c.bf16 %v1070, %v1070
    %1074 = vmatprep.subr.bf16.mxu0 %v416
    %1075 = vmatpush1.bf16.msra.mxu0 %v415
    %1076 = vmatprep.subr.bf16.mxu0 %v413
    %1077 = vmatpush1.bf16.msra.mxu0 %v412
    %1078 = vmatprep.subr.bf16.mxu0 %v410
    %1079 = vmatpush1.bf16.msra.mxu0 %v409
    %1080 = vmatprep.subr.bf16.mxu0 %v407
    %1081 = vmatpush1.bf16.msra.mxu0 %v406
    %1082 = vmatprep.subr.bf16.mxu0 %v404
    %1083 = vmatpush1.bf16.msra.mxu0 %v403
    %1084 = vmatprep.subr.bf16.mxu0 %v401
    %1085 = vmatpush1.bf16.msra.mxu0 %v400
    %1086 = vmatprep.subr.bf16.mxu0 %v398
    %1087 = vmatpush1.bf16.msra.mxu0 %v397
    %1088 = vmatprep.subr.bf16.mxu0 %v395
    %1089 = vmatpush1.bf16.msra.mxu0 %v394
    %1090 = vmatprep.subr.bf16.mxu0 0
    %1091 = vmatpush2.bf16.msra.mxu0 0
    %1092 = vmatprep.subr.bf16.mxu0 0
    %1093 = vmatpush2.bf16.msra.mxu0 0
    %1094 = vmatprep.subr.bf16.mxu0 0
    %1095 = vmatpush2.bf16.msra.mxu0 0
    %1096 = vmatprep.subr.bf16.mxu0 0
    %1097 = vmatpush2.bf16.msra.mxu0 0
    %1098 = vmatprep.subr.bf16.mxu0 0
    %1099 = vmatpush2.bf16.msra.mxu0 0
    %1100 = vmatprep.subr.bf16.mxu0 0
    %1101 = vmatpush2.bf16.msra.mxu0 0
    %1102 = vmatprep.subr.bf16.mxu0 0
    %1103 = vmatpush2.bf16.msra.mxu0 0
    %1104 = vmatprep.subr.bf16.mxu0 0
    %1105 = vmatpush2.bf16.msra.mxu0 0
    %1106 = vmatprep.mubr.bf16.mxu0 0
    %1107 = vmatmul.mubr.bf16.gmra.mxu0 %v1073
    %v1108 = vpop.f32.mrf.mxu0
    %v1109 = vadd.f32 %v302, %v1108
    %v1110 = vpop.f32.mrf.mxu0
    %v1111 = vadd.f32 %v306, %v1110
    %v1112 = vpop.f32.mrf.mxu0
    %v1113 = vpop.f32.mrf.mxu0
    %1114 = vdwg.mxu0
    %1115 = vmatprep.subr.bf16.mxu0 0
    %1116 = vmatpush1.bf16.msra.mxu0 %v417
    %1117 = vmatprep.subr.bf16.mxu0 0
    %1118 = vmatpush1.bf16.msra.mxu0 %v414
    %1119 = vmatprep.subr.bf16.mxu0 0
    %1120 = vmatpush1.bf16.msra.mxu0 %v411
    %1121 = vmatprep.subr.bf16.mxu0 0
    %1122 = vmatpush1.bf16.msra.mxu0 %v408
    %1123 = vmatprep.subr.bf16.mxu0 0
    %1124 = vmatpush1.bf16.msra.mxu0 %v405
    %1125 = vmatprep.subr.bf16.mxu0 0
    %1126 = vmatpush1.bf16.msra.mxu0 %v402
    %1127 = vmatprep.subr.bf16.mxu0 0
    %1128 = vmatpush1.bf16.msra.mxu0 %v399
    %1129 = vmatprep.subr.bf16.mxu0 0
    %1130 = vmatpush1.bf16.msra.mxu0 %v396
    %1131 = vmatprep.subr.bf16.mxu0 0
    %1132 = vmatpush2.bf16.msra.mxu0 0
    %1133 = vmatprep.subr.bf16.mxu0 0
    %1134 = vmatpush2.bf16.msra.mxu0 0
    %1135 = vmatprep.subr.bf16.mxu0 0
    %1136 = vmatpush2.bf16.msra.mxu0 0
    %1137 = vmatprep.subr.bf16.mxu0 0
    %1138 = vmatpush2.bf16.msra.mxu0 0
    %1139 = vmatprep.subr.bf16.mxu0 0
    %1140 = vmatpush2.bf16.msra.mxu0 0
    %1141 = vmatprep.subr.bf16.mxu0 0
    %1142 = vmatpush2.bf16.msra.mxu0 0
    %1143 = vmatprep.subr.bf16.mxu0 0
    %1144 = vmatpush2.bf16.msra.mxu0 0
    %1145 = vmatprep.subr.bf16.mxu0 0
    %1146 = vmatpush2.bf16.msra.mxu0 0
    %1147 = vmatprep.mubr.bf16.mxu0 0
    %1148 = vmatmul.mubr.bf16.gmra.mxu0 %v1073
    %v1149 = vpop.f32.mrf.mxu0
    %v1150 = vadd.f32 %v310, %v1149
    %v1151 = vpop.f32.mrf.mxu0
    %v1152 = vpop.f32.mrf.mxu0
    %v1153 = vpop.f32.mrf.mxu0
    %1154 = vdwg.mxu0
    %v1155 = vpack.c.bf16 %v1022, %v1022
    %1156 = vmatprep.subr.bf16.mxu0 %v603
    %1157 = vmatpush1.bf16.msra.mxu0 %v602
    %1158 = vmatprep.subr.bf16.mxu0 %v601
    %1159 = vmatpush1.bf16.msra.mxu0 %v600
    %1160 = vmatprep.subr.bf16.mxu0 %v599
    %1161 = vmatpush1.bf16.msra.mxu0 %v598
    %1162 = vmatprep.subr.bf16.mxu0 %v597
    %1163 = vmatpush1.bf16.msra.mxu0 %v596
    %1164 = vmatprep.subr.bf16.mxu0 %v595
    %1165 = vmatpush1.bf16.msra.mxu0 %v594
    %1166 = vmatprep.subr.bf16.mxu0 %v593
    %1167 = vmatpush1.bf16.msra.mxu0 %v592
    %1168 = vmatprep.subr.bf16.mxu0 %v591
    %1169 = vmatpush1.bf16.msra.mxu0 %v590
    %1170 = vmatprep.subr.bf16.mxu0 %v589
    %1171 = vmatpush1.bf16.msra.mxu0 %v588
    %1172 = vmatprep.subr.bf16.mxu0 0
    %1173 = vmatpush2.bf16.msra.mxu0 0
    %1174 = vmatprep.subr.bf16.mxu0 0
    %1175 = vmatpush2.bf16.msra.mxu0 0
    %1176 = vmatprep.subr.bf16.mxu0 0
    %1177 = vmatpush2.bf16.msra.mxu0 0
    %1178 = vmatprep.subr.bf16.mxu0 0
    %1179 = vmatpush2.bf16.msra.mxu0 0
    %1180 = vmatprep.subr.bf16.mxu0 0
    %1181 = vmatpush2.bf16.msra.mxu0 0
    %1182 = vmatprep.subr.bf16.mxu0 0
    %1183 = vmatpush2.bf16.msra.mxu0 0
    %1184 = vmatprep.subr.bf16.mxu0 0
    %1185 = vmatpush2.bf16.msra.mxu0 0
    %1186 = vmatprep.subr.bf16.mxu0 0
    %1187 = vmatpush2.bf16.msra.mxu0 0
    %1188 = vmatprep.mubr.bf16.mxu0 0
    %1189 = vmatmul.mubr.bf16.gmra.mxu0 %v1155
    %v1190 = vpop.f32.mrf.mxu0
    %v1191 = vadd.f32 0.0, %v1190
    %v1192 = vpop.f32.mrf.mxu0
    %v1193 = vadd.f32 0.0, %v1192
    %v1194 = vpop.f32.mrf.mxu0
    %v1195 = vpop.f32.mrf.mxu0
    %1196 = vdwg.mxu0
    %v1197 = vadd.f32 %v1109, %v1191
    %v1198 = vxor.u32 %v1197, 2147483648
    %v1199 = vmul.f32 %v1198, 1.442695
    %v1200 = vpow.pop %v1199
    %v1201 = vadd.f32 %v1200, 1.0
    %v1202 = vrcp.pop %v1201
    %v1203 = vmul.f32 1.0, %v1202
    %v1204 = vadd.f32 %v1111, %v1193
    %v1205 = vxor.u32 %v1204, 2147483648
    %v1206 = vmul.f32 %v1205, 1.442695
    %v1207 = vpow.pop %v1206
    %v1208 = vadd.f32 %v1207, 1.0
    %v1209 = vrcp.pop %v1208
    %v1210 = vmul.f32 1.0, %v1209
    %v1211 = vmul.f32 %v1203, %v1022
    %v1212 = vpack.c.bf16 %v1211, %v1211
    %1213 = vmatprep.subr.bf16.mxu0 0
    %1214 = vmatpush1.bf16.msra.mxu0 %v732
    %1215 = vmatprep.subr.bf16.mxu0 0
    %1216 = vmatpush1.bf16.msra.mxu0 %v731
    %1217 = vmatprep.subr.bf16.mxu0 0
    %1218 = vmatpush1.bf16.msra.mxu0 %v730
    %1219 = vmatprep.subr.bf16.mxu0 0
    %1220 = vmatpush1.bf16.msra.mxu0 %v729
    %1221 = vmatprep.subr.bf16.mxu0 0
    %1222 = vmatpush1.bf16.msra.mxu0 %v728
    %1223 = vmatprep.subr.bf16.mxu0 0
    %1224 = vmatpush1.bf16.msra.mxu0 %v727
    %1225 = vmatprep.subr.bf16.mxu0 0
    %1226 = vmatpush1.bf16.msra.mxu0 %v726
    %1227 = vmatprep.subr.bf16.mxu0 0
    %1228 = vmatpush1.bf16.msra.mxu0 %v725
    %1229 = vmatprep.subr.bf16.mxu0 0
    %1230 = vmatpush2.bf16.msra.mxu0 0
    %1231 = vmatprep.subr.bf16.mxu0 0
    %1232 = vmatpush2.bf16.msra.mxu0 0
    %1233 = vmatprep.subr.bf16.mxu0 0
    %1234 = vmatpush2.bf16.msra.mxu0 0
    %1235 = vmatprep.subr.bf16.mxu0 0
    %1236 = vmatpush2.bf16.msra.mxu0 0
    %1237 = vmatprep.subr.bf16.mxu0 0
    %1238 = vmatpush2.bf16.msra.mxu0 0
    %1239 = vmatprep.subr.bf16.mxu0 0
    %1240 = vmatpush2.bf16.msra.mxu0 0
    %1241 = vmatprep.subr.bf16.mxu0 0
    %1242 = vmatpush2.bf16.msra.mxu0 0
    %1243 = vmatprep.subr.bf16.mxu0 0
    %1244 = vmatpush2.bf16.msra.mxu0 0
    %1245 = vmatprep.mubr.bf16.mxu0 0
    %1246 = vmatmul.mubr.bf16.gmra.mxu0 %v1212
    %v1247 = vpop.f32.mrf.mxu0
    %v1248 = vadd.f32 0.0, %v1247
    %v1249 = vpop.f32.mrf.mxu0
    %v1250 = vpop.f32.mrf.mxu0
    %v1251 = vpop.f32.mrf.mxu0
    %1252 = vdwg.mxu0
    %v1253 = vadd.f32 %v1150, %v1248
    %v1254 = vtanh.pop %v1253
    %v1255 = vsub.f32 1.0, %v1210
    %v1256 = vmul.f32 %v1255, %v1022
    %v1257 = vmul.f32 %v1210, %v1254
    %v1258 = vadd.f32 %v1256, %v1257
    %s1259 = scalar_lea.vmem [#allocation4], 12
    %v1260 = vld [vmem:[%s1259] sm:$0xf]
    %1261 = vmatprep.subr.bf16.mxu0 0
    %1262 = vmatpush1.bf16.msra.mxu0 %v196
    %1263 = vmatprep.subr.bf16.mxu0 0
    %1264 = vmatpush1.bf16.msra.mxu0 %v195
    %1265 = vmatprep.subr.bf16.mxu0 0
    %1266 = vmatpush1.bf16.msra.mxu0 %v194
    %1267 = vmatprep.subr.bf16.mxu0 0
    %1268 = vmatpush1.bf16.msra.mxu0 %v193
    %1269 = vmatprep.subr.bf16.mxu0 0
    %1270 = vmatpush1.bf16.msra.mxu0 %v192
    %1271 = vmatprep.subr.bf16.mxu0 0
    %1272 = vmatpush1.bf16.msra.mxu0 %v191
    %1273 = vmatprep.subr.bf16.mxu0 0
    %1274 = vmatpush1.bf16.msra.mxu0 %v190
    %1275 = vmatprep.subr.bf16.mxu0 0
    %1276 = vmatpush1.bf16.msra.mxu0 %v189
    %1277 = vmatprep.subr.bf16.mxu0 0
    %1278 = vmatpush2.bf16.msra.mxu0 0
    %1279 = vmatprep.subr.bf16.mxu0 0
    %1280 = vmatpush2.bf16.msra.mxu0 0
    %1281 = vmatprep.subr.bf16.mxu0 0
    %1282 = vmatpush2.bf16.msra.mxu0 0
    %1283 = vmatprep.subr.bf16.mxu0 0
    %1284 = vmatpush2.bf16.msra.mxu0 0
    %1285 = vmatprep.subr.bf16.mxu0 0
    %1286 = vmatpush2.bf16.msra.mxu0 0
    %1287 = vmatprep.subr.bf16.mxu0 0
    %1288 = vmatpush2.bf16.msra.mxu0 0
    %1289 = vmatprep.subr.bf16.mxu0 0
    %1290 = vmatpush2.bf16.msra.mxu0 0
    %1291 = vmatprep.subr.bf16.mxu0 0
    %1292 = vmatpush2.bf16.msra.mxu0 0
    %1293 = vmatprep.mubr.bf16.mxu0 0
    %1294 = vmatmul.mubr.bf16.gmra.mxu0 %v1260
    %v1295 = vpop.f32.mrf.mxu0
    %v1296 = vadd.f32 %v155, %v1295
    %v1297 = vpop.f32.mrf.mxu0
    %v1298 = vpop.f32.mrf.mxu0
    %v1299 = vpop.f32.mrf.mxu0
    %1300 = vdwg.mxu0
    %v1301 = vadd.f32 %v1072, %v1296
    %v1302 = vsub.f32 %v1301, %v250
    %vm1303 = vcmp.gt.f32.partialorder %v1302, 0.0
    %v1304 = vsel %vm1303, 1, 0
    %v1305 = vcvt.s32.f32 %v1304
    %v1306 = vmul.f32 %v1305, %v1301
    %v1307 = vsub.f32 %v1301, %v1306
    %v1308 = vmul.f32 %v1307, %v262
    %v1309 = vpack.c.bf16 %v1306, %v1306
    %1310 = vmatprep.subr.bf16.mxu0 %v416
    %1311 = vmatpush1.bf16.msra.mxu0 %v415
    %1312 = vmatprep.subr.bf16.mxu0 %v413
    %1313 = vmatpush1.bf16.msra.mxu0 %v412
    %1314 = vmatprep.subr.bf16.mxu0 %v410
    %1315 = vmatpush1.bf16.msra.mxu0 %v409
    %1316 = vmatprep.subr.bf16.mxu0 %v407
    %1317 = vmatpush1.bf16.msra.mxu0 %v406
    %1318 = vmatprep.subr.bf16.mxu0 %v404
    %1319 = vmatpush1.bf16.msra.mxu0 %v403
    %1320 = vmatprep.subr.bf16.mxu0 %v401
    %1321 = vmatpush1.bf16.msra.mxu0 %v400
    %1322 = vmatprep.subr.bf16.mxu0 %v398
    %1323 = vmatpush1.bf16.msra.mxu0 %v397
    %1324 = vmatprep.subr.bf16.mxu0 %v395
    %1325 = vmatpush1.bf16.msra.mxu0 %v394
    %1326 = vmatprep.subr.bf16.mxu0 0
    %1327 = vmatpush2.bf16.msra.mxu0 0
    %1328 = vmatprep.subr.bf16.mxu0 0
    %1329 = vmatpush2.bf16.msra.mxu0 0
    %1330 = vmatprep.subr.bf16.mxu0 0
    %1331 = vmatpush2.bf16.msra.mxu0 0
    %1332 = vmatprep.subr.bf16.mxu0 0
    %1333 = vmatpush2.bf16.msra.mxu0 0
    %1334 = vmatprep.subr.bf16.mxu0 0
    %1335 = vmatpush2.bf16.msra.mxu0 0
    %1336 = vmatprep.subr.bf16.mxu0 0
    %1337 = vmatpush2.bf16.msra.mxu0 0
    %1338 = vmatprep.subr.bf16.mxu0 0
    %1339 = vmatpush2.bf16.msra.mxu0 0
    %1340 = vmatprep.subr.bf16.mxu0 0
    %1341 = vmatpush2.bf16.msra.mxu0 0
    %1342 = vmatprep.mubr.bf16.mxu0 0
    %1343 = vmatmul.mubr.bf16.gmra.mxu0 %v1309
    %v1344 = vpop.f32.mrf.mxu0
    %v1345 = vadd.f32 %v302, %v1344
    %v1346 = vpop.f32.mrf.mxu0
    %v1347 = vadd.f32 %v306, %v1346
    %v1348 = vpop.f32.mrf.mxu0
    %v1349 = vpop.f32.mrf.mxu0
    %1350 = vdwg.mxu0
    %1351 = vmatprep.subr.bf16.mxu0 0
    %1352 = vmatpush1.bf16.msra.mxu0 %v417
    %1353 = vmatprep.subr.bf16.mxu0 0
    %1354 = vmatpush1.bf16.msra.mxu0 %v414
    %1355 = vmatprep.subr.bf16.mxu0 0
    %1356 = vmatpush1.bf16.msra.mxu0 %v411
    %1357 = vmatprep.subr.bf16.mxu0 0
    %1358 = vmatpush1.bf16.msra.mxu0 %v408
    %1359 = vmatprep.subr.bf16.mxu0 0
    %1360 = vmatpush1.bf16.msra.mxu0 %v405
    %1361 = vmatprep.subr.bf16.mxu0 0
    %1362 = vmatpush1.bf16.msra.mxu0 %v402
    %1363 = vmatprep.subr.bf16.mxu0 0
    %1364 = vmatpush1.bf16.msra.mxu0 %v399
    %1365 = vmatprep.subr.bf16.mxu0 0
    %1366 = vmatpush1.bf16.msra.mxu0 %v396
    %1367 = vmatprep.subr.bf16.mxu0 0
    %1368 = vmatpush2.bf16.msra.mxu0 0
    %1369 = vmatprep.subr.bf16.mxu0 0
    %1370 = vmatpush2.bf16.msra.mxu0 0
    %1371 = vmatprep.subr.bf16.mxu0 0
    %1372 = vmatpush2.bf16.msra.mxu0 0
    %1373 = vmatprep.subr.bf16.mxu0 0
    %1374 = vmatpush2.bf16.msra.mxu0 0
    %1375 = vmatprep.subr.bf16.mxu0 0
    %1376 = vmatpush2.bf16.msra.mxu0 0
    %1377 = vmatprep.subr.bf16.mxu0 0
    %1378 = vmatpush2.bf16.msra.mxu0 0
    %1379 = vmatprep.subr.bf16.mxu0 0
    %1380 = vmatpush2.bf16.msra.mxu0 0
    %1381 = vmatprep.subr.bf16.mxu0 0
    %1382 = vmatpush2.bf16.msra.mxu0 0
    %1383 = vmatprep.mubr.bf16.mxu0 0
    %1384 = vmatmul.mubr.bf16.gmra.mxu0 %v1309
    %v1385 = vpop.f32.mrf.mxu0
    %v1386 = vadd.f32 %v310, %v1385
    %v1387 = vpop.f32.mrf.mxu0
    %v1388 = vpop.f32.mrf.mxu0
    %v1389 = vpop.f32.mrf.mxu0
    %1390 = vdwg.mxu0
    %v1391 = vpack.c.bf16 %v1258, %v1258
    %1392 = vmatprep.subr.bf16.mxu0 %v603
    %1393 = vmatpush1.bf16.msra.mxu0 %v602
    %1394 = vmatprep.subr.bf16.mxu0 %v601
    %1395 = vmatpush1.bf16.msra.mxu0 %v600
    %1396 = vmatprep.subr.bf16.mxu0 %v599
    %1397 = vmatpush1.bf16.msra.mxu0 %v598
    %1398 = vmatprep.subr.bf16.mxu0 %v597
    %1399 = vmatpush1.bf16.msra.mxu0 %v596
    %1400 = vmatprep.subr.bf16.mxu0 %v595
    %1401 = vmatpush1.bf16.msra.mxu0 %v594
    %1402 = vmatprep.subr.bf16.mxu0 %v593
    %1403 = vmatpush1.bf16.msra.mxu0 %v592
    %1404 = vmatprep.subr.bf16.mxu0 %v591
    %1405 = vmatpush1.bf16.msra.mxu0 %v590
    %1406 = vmatprep.subr.bf16.mxu0 %v589
    %1407 = vmatpush1.bf16.msra.mxu0 %v588
    %1408 = vmatprep.subr.bf16.mxu0 0
    %1409 = vmatpush2.bf16.msra.mxu0 0
    %1410 = vmatprep.subr.bf16.mxu0 0
    %1411 = vmatpush2.bf16.msra.mxu0 0
    %1412 = vmatprep.subr.bf16.mxu0 0
    %1413 = vmatpush2.bf16.msra.mxu0 0
    %1414 = vmatprep.subr.bf16.mxu0 0
    %1415 = vmatpush2.bf16.msra.mxu0 0
    %1416 = vmatprep.subr.bf16.mxu0 0
    %1417 = vmatpush2.bf16.msra.mxu0 0
    %1418 = vmatprep.subr.bf16.mxu0 0
    %1419 = vmatpush2.bf16.msra.mxu0 0
    %1420 = vmatprep.subr.bf16.mxu0 0
    %1421 = vmatpush2.bf16.msra.mxu0 0
    %1422 = vmatprep.subr.bf16.mxu0 0
    %1423 = vmatpush2.bf16.msra.mxu0 0
    %1424 = vmatprep.mubr.bf16.mxu0 0
    %1425 = vmatmul.mubr.bf16.gmra.mxu0 %v1391
    %v1426 = vpop.f32.mrf.mxu0
    %v1427 = vadd.f32 0.0, %v1426
    %v1428 = vpop.f32.mrf.mxu0
    %v1429 = vadd.f32 0.0, %v1428
    %v1430 = vpop.f32.mrf.mxu0
    %v1431 = vpop.f32.mrf.mxu0
    %1432 = vdwg.mxu0
    %v1433 = vadd.f32 %v1345, %v1427
    %v1434 = vxor.u32 %v1433, 2147483648
    %v1435 = vmul.f32 %v1434, 1.442695
    %v1436 = vpow.pop %v1435
    %v1437 = vadd.f32 %v1436, 1.0
    %v1438 = vrcp.pop %v1437
    %v1439 = vmul.f32 1.0, %v1438
    %v1440 = vadd.f32 %v1347, %v1429
    %v1441 = vxor.u32 %v1440, 2147483648
    %v1442 = vmul.f32 %v1441, 1.442695
    %v1443 = vpow.pop %v1442
    %v1444 = vadd.f32 %v1443, 1.0
    %v1445 = vrcp.pop %v1444
    %v1446 = vmul.f32 1.0, %v1445
    %v1447 = vmul.f32 %v1439, %v1258
    %v1448 = vpack.c.bf16 %v1447, %v1447
    %1449 = vmatprep.subr.bf16.mxu0 0
    %1450 = vmatpush1.bf16.msra.mxu0 %v732
    %1451 = vmatprep.subr.bf16.mxu0 0
    %1452 = vmatpush1.bf16.msra.mxu0 %v731
    %1453 = vmatprep.subr.bf16.mxu0 0
    %1454 = vmatpush1.bf16.msra.mxu0 %v730
    %1455 = vmatprep.subr.bf16.mxu0 0
    %1456 = vmatpush1.bf16.msra.mxu0 %v729
    %1457 = vmatprep.subr.bf16.mxu0 0
    %1458 = vmatpush1.bf16.msra.mxu0 %v728
    %1459 = vmatprep.subr.bf16.mxu0 0
    %1460 = vmatpush1.bf16.msra.mxu0 %v727
    %1461 = vmatprep.subr.bf16.mxu0 0
    %1462 = vmatpush1.bf16.msra.mxu0 %v726
    %1463 = vmatprep.subr.bf16.mxu0 0
    %1464 = vmatpush1.bf16.msra.mxu0 %v725
    %1465 = vmatprep.subr.bf16.mxu0 0
    %1466 = vmatpush2.bf16.msra.mxu0 0
    %1467 = vmatprep.subr.bf16.mxu0 0
    %1468 = vmatpush2.bf16.msra.mxu0 0
    %1469 = vmatprep.subr.bf16.mxu0 0
    %1470 = vmatpush2.bf16.msra.mxu0 0
    %1471 = vmatprep.subr.bf16.mxu0 0
    %1472 = vmatpush2.bf16.msra.mxu0 0
    %1473 = vmatprep.subr.bf16.mxu0 0
    %1474 = vmatpush2.bf16.msra.mxu0 0
    %1475 = vmatprep.subr.bf16.mxu0 0
    %1476 = vmatpush2.bf16.msra.mxu0 0
    %1477 = vmatprep.subr.bf16.mxu0 0
    %1478 = vmatpush2.bf16.msra.mxu0 0
    %1479 = vmatprep.subr.bf16.mxu0 0
    %1480 = vmatpush2.bf16.msra.mxu0 0
    %1481 = vmatprep.mubr.bf16.mxu0 0
    %1482 = vmatmul.mubr.bf16.gmra.mxu0 %v1448
    %v1483 = vpop.f32.mrf.mxu0
    %v1484 = vadd.f32 0.0, %v1483
    %v1485 = vpop.f32.mrf.mxu0
    %v1486 = vpop.f32.mrf.mxu0
    %v1487 = vpop.f32.mrf.mxu0
    %1488 = vdwg.mxu0
    %v1489 = vadd.f32 %v1386, %v1484
    %v1490 = vtanh.pop %v1489
    %v1491 = vsub.f32 1.0, %v1446
    %v1492 = vmul.f32 %v1491, %v1258
    %v1493 = vmul.f32 %v1446, %v1490
    %v1494 = vadd.f32 %v1492, %v1493
    %s1495 = scalar_lea.vmem [#allocation4], 16
    %v1496 = vld [vmem:[%s1495] sm:$0xf]
    %1497 = vmatprep.subr.bf16.mxu0 0
    %1498 = vmatpush1.bf16.msra.mxu0 %v196
    %1499 = vmatprep.subr.bf16.mxu0 0
    %1500 = vmatpush1.bf16.msra.mxu0 %v195
    %1501 = vmatprep.subr.bf16.mxu0 0
    %1502 = vmatpush1.bf16.msra.mxu0 %v194
    %1503 = vmatprep.subr.bf16.mxu0 0
    %1504 = vmatpush1.bf16.msra.mxu0 %v193
    %1505 = vmatprep.subr.bf16.mxu0 0
    %1506 = vmatpush1.bf16.msra.mxu0 %v192
    %1507 = vmatprep.subr.bf16.mxu0 0
    %1508 = vmatpush1.bf16.msra.mxu0 %v191
    %1509 = vmatprep.subr.bf16.mxu0 0
    %1510 = vmatpush1.bf16.msra.mxu0 %v190
    %1511 = vmatprep.subr.bf16.mxu0 0
    %1512 = vmatpush1.bf16.msra.mxu0 %v189
    %1513 = vmatprep.subr.bf16.mxu0 0
    %1514 = vmatpush2.bf16.msra.mxu0 0
    %1515 = vmatprep.subr.bf16.mxu0 0
    %1516 = vmatpush2.bf16.msra.mxu0 0
    %1517 = vmatprep.subr.bf16.mxu0 0
    %1518 = vmatpush2.bf16.msra.mxu0 0
    %1519 = vmatprep.subr.bf16.mxu0 0
    %1520 = vmatpush2.bf16.msra.mxu0 0
    %1521 = vmatprep.subr.bf16.mxu0 0
    %1522 = vmatpush2.bf16.msra.mxu0 0
    %1523 = vmatprep.subr.bf16.mxu0 0
    %1524 = vmatpush2.bf16.msra.mxu0 0
    %1525 = vmatprep.subr.bf16.mxu0 0
    %1526 = vmatpush2.bf16.msra.mxu0 0
    %1527 = vmatprep.subr.bf16.mxu0 0
    %1528 = vmatpush2.bf16.msra.mxu0 0
    %1529 = vmatprep.mubr.bf16.mxu0 0
    %1530 = vmatmul.mubr.bf16.gmra.mxu0 %v1496
    %v1531 = vpop.f32.mrf.mxu0
    %v1532 = vadd.f32 %v155, %v1531
    %v1533 = vpop.f32.mrf.mxu0
    %v1534 = vpop.f32.mrf.mxu0
    %v1535 = vpop.f32.mrf.mxu0
    %1536 = vdwg.mxu0
    %v1537 = vadd.f32 %v1308, %v1532
    %v1538 = vsub.f32 %v1537, %v250
    %vm1539 = vcmp.gt.f32.partialorder %v1538, 0.0
    %v1540 = vsel %vm1539, 1, 0
    %v1541 = vcvt.s32.f32 %v1540
    %v1542 = vmul.f32 %v1541, %v1537
    %v1543 = vsub.f32 %v1537, %v1542
    %v1544 = vmul.f32 %v1543, %v262
    %v1545 = vpack.c.bf16 %v1542, %v1542
    %1546 = vmatprep.subr.bf16.mxu0 %v416
    %1547 = vmatpush1.bf16.msra.mxu0 %v415
    %1548 = vmatprep.subr.bf16.mxu0 %v413
    %1549 = vmatpush1.bf16.msra.mxu0 %v412
    %1550 = vmatprep.subr.bf16.mxu0 %v410
    %1551 = vmatpush1.bf16.msra.mxu0 %v409
    %1552 = vmatprep.subr.bf16.mxu0 %v407
    %1553 = vmatpush1.bf16.msra.mxu0 %v406
    %1554 = vmatprep.subr.bf16.mxu0 %v404
    %1555 = vmatpush1.bf16.msra.mxu0 %v403
    %1556 = vmatprep.subr.bf16.mxu0 %v401
    %1557 = vmatpush1.bf16.msra.mxu0 %v400
    %1558 = vmatprep.subr.bf16.mxu0 %v398
    %1559 = vmatpush1.bf16.msra.mxu0 %v397
    %1560 = vmatprep.subr.bf16.mxu0 %v395
    %1561 = vmatpush1.bf16.msra.mxu0 %v394
    %1562 = vmatprep.subr.bf16.mxu0 0
    %1563 = vmatpush2.bf16.msra.mxu0 0
    %1564 = vmatprep.subr.bf16.mxu0 0
    %1565 = vmatpush2.bf16.msra.mxu0 0
    %1566 = vmatprep.subr.bf16.mxu0 0
    %1567 = vmatpush2.bf16.msra.mxu0 0
    %1568 = vmatprep.subr.bf16.mxu0 0
    %1569 = vmatpush2.bf16.msra.mxu0 0
    %1570 = vmatprep.subr.bf16.mxu0 0
    %1571 = vmatpush2.bf16.msra.mxu0 0
    %1572 = vmatprep.subr.bf16.mxu0 0
    %1573 = vmatpush2.bf16.msra.mxu0 0
    %1574 = vmatprep.subr.bf16.mxu0 0
    %1575 = vmatpush2.bf16.msra.mxu0 0
    %1576 = vmatprep.subr.bf16.mxu0 0
    %1577 = vmatpush2.bf16.msra.mxu0 0
    %1578 = vmatprep.mubr.bf16.mxu0 0
    %1579 = vmatmul.mubr.bf16.gmra.mxu0 %v1545
    %v1580 = vpop.f32.mrf.mxu0
    %v1581 = vadd.f32 %v302, %v1580
    %v1582 = vpop.f32.mrf.mxu0
    %v1583 = vadd.f32 %v306, %v1582
    %v1584 = vpop.f32.mrf.mxu0
    %v1585 = vpop.f32.mrf.mxu0
    %1586 = vdwg.mxu0
    %1587 = vmatprep.subr.bf16.mxu0 0
    %1588 = vmatpush1.bf16.msra.mxu0 %v417
    %1589 = vmatprep.subr.bf16.mxu0 0
    %1590 = vmatpush1.bf16.msra.mxu0 %v414
    %1591 = vmatprep.subr.bf16.mxu0 0
    %1592 = vmatpush1.bf16.msra.mxu0 %v411
    %1593 = vmatprep.subr.bf16.mxu0 0
    %1594 = vmatpush1.bf16.msra.mxu0 %v408
    %1595 = vmatprep.subr.bf16.mxu0 0
    %1596 = vmatpush1.bf16.msra.mxu0 %v405
    %1597 = vmatprep.subr.bf16.mxu0 0
    %1598 = vmatpush1.bf16.msra.mxu0 %v402
    %1599 = vmatprep.subr.bf16.mxu0 0
    %1600 = vmatpush1.bf16.msra.mxu0 %v399
    %1601 = vmatprep.subr.bf16.mxu0 0
    %1602 = vmatpush1.bf16.msra.mxu0 %v396
    %1603 = vmatprep.subr.bf16.mxu0 0
    %1604 = vmatpush2.bf16.msra.mxu0 0
    %1605 = vmatprep.subr.bf16.mxu0 0
    %1606 = vmatpush2.bf16.msra.mxu0 0
    %1607 = vmatprep.subr.bf16.mxu0 0
    %1608 = vmatpush2.bf16.msra.mxu0 0
    %1609 = vmatprep.subr.bf16.mxu0 0
    %1610 = vmatpush2.bf16.msra.mxu0 0
    %1611 = vmatprep.subr.bf16.mxu0 0
    %1612 = vmatpush2.bf16.msra.mxu0 0
    %1613 = vmatprep.subr.bf16.mxu0 0
    %1614 = vmatpush2.bf16.msra.mxu0 0
    %1615 = vmatprep.subr.bf16.mxu0 0
    %1616 = vmatpush2.bf16.msra.mxu0 0
    %1617 = vmatprep.subr.bf16.mxu0 0
    %1618 = vmatpush2.bf16.msra.mxu0 0
    %1619 = vmatprep.mubr.bf16.mxu0 0
    %1620 = vmatmul.mubr.bf16.gmra.mxu0 %v1545
    %v1621 = vpop.f32.mrf.mxu0
    %v1622 = vadd.f32 %v310, %v1621
    %v1623 = vpop.f32.mrf.mxu0
    %v1624 = vpop.f32.mrf.mxu0
    %v1625 = vpop.f32.mrf.mxu0
    %1626 = vdwg.mxu0
    %v1627 = vpack.c.bf16 %v1494, %v1494
    %1628 = vmatprep.subr.bf16.mxu0 %v603
    %1629 = vmatpush1.bf16.msra.mxu0 %v602
    %1630 = vmatprep.subr.bf16.mxu0 %v601
    %1631 = vmatpush1.bf16.msra.mxu0 %v600
    %1632 = vmatprep.subr.bf16.mxu0 %v599
    %1633 = vmatpush1.bf16.msra.mxu0 %v598
    %1634 = vmatprep.subr.bf16.mxu0 %v597
    %1635 = vmatpush1.bf16.msra.mxu0 %v596
    %1636 = vmatprep.subr.bf16.mxu0 %v595
    %1637 = vmatpush1.bf16.msra.mxu0 %v594
    %1638 = vmatprep.subr.bf16.mxu0 %v593
    %1639 = vmatpush1.bf16.msra.mxu0 %v592
    %1640 = vmatprep.subr.bf16.mxu0 %v591
    %1641 = vmatpush1.bf16.msra.mxu0 %v590
    %1642 = vmatprep.subr.bf16.mxu0 %v589
    %1643 = vmatpush1.bf16.msra.mxu0 %v588
    %1644 = vmatprep.subr.bf16.mxu0 0
    %1645 = vmatpush2.bf16.msra.mxu0 0
    %1646 = vmatprep.subr.bf16.mxu0 0
    %1647 = vmatpush2.bf16.msra.mxu0 0
    %1648 = vmatprep.subr.bf16.mxu0 0
    %1649 = vmatpush2.bf16.msra.mxu0 0
    %1650 = vmatprep.subr.bf16.mxu0 0
    %1651 = vmatpush2.bf16.msra.mxu0 0
    %1652 = vmatprep.subr.bf16.mxu0 0
    %1653 = vmatpush2.bf16.msra.mxu0 0
    %1654 = vmatprep.subr.bf16.mxu0 0
    %1655 = vmatpush2.bf16.msra.mxu0 0
    %1656 = vmatprep.subr.bf16.mxu0 0
    %1657 = vmatpush2.bf16.msra.mxu0 0
    %1658 = vmatprep.subr.bf16.mxu0 0
    %1659 = vmatpush2.bf16.msra.mxu0 0
    %1660 = vmatprep.mubr.bf16.mxu0 0
    %1661 = vmatmul.mubr.bf16.gmra.mxu0 %v1627
    %v1662 = vpop.f32.mrf.mxu0
    %v1663 = vadd.f32 0.0, %v1662
    %v1664 = vpop.f32.mrf.mxu0
    %v1665 = vadd.f32 0.0, %v1664
    %v1666 = vpop.f32.mrf.mxu0
    %v1667 = vpop.f32.mrf.mxu0
    %1668 = vdwg.mxu0
    %v1669 = vadd.f32 %v1581, %v1663
    %v1670 = vxor.u32 %v1669, 2147483648
    %v1671 = vmul.f32 %v1670, 1.442695
    %v1672 = vpow.pop %v1671
    %v1673 = vadd.f32 %v1672, 1.0
    %v1674 = vrcp.pop %v1673
    %v1675 = vmul.f32 1.0, %v1674
    %v1676 = vadd.f32 %v1583, %v1665
    %v1677 = vxor.u32 %v1676, 2147483648
    %v1678 = vmul.f32 %v1677, 1.442695
    %v1679 = vpow.pop %v1678
    %v1680 = vadd.f32 %v1679, 1.0
    %v1681 = vrcp.pop %v1680
    %v1682 = vmul.f32 1.0, %v1681
    %v1683 = vmul.f32 %v1675, %v1494
    %v1684 = vpack.c.bf16 %v1683, %v1683
    %1685 = vmatprep.subr.bf16.mxu0 0
    %1686 = vmatpush1.bf16.msra.mxu0 %v732
    %1687 = vmatprep.subr.bf16.mxu0 0
    %1688 = vmatpush1.bf16.msra.mxu0 %v731
    %1689 = vmatprep.subr.bf16.mxu0 0
    %1690 = vmatpush1.bf16.msra.mxu0 %v730
    %1691 = vmatprep.subr.bf16.mxu0 0
    %1692 = vmatpush1.bf16.msra.mxu0 %v729
    %1693 = vmatprep.subr.bf16.mxu0 0
    %1694 = vmatpush1.bf16.msra.mxu0 %v728
    %1695 = vmatprep.subr.bf16.mxu0 0
    %1696 = vmatpush1.bf16.msra.mxu0 %v727
    %1697 = vmatprep.subr.bf16.mxu0 0
    %1698 = vmatpush1.bf16.msra.mxu0 %v726
    %1699 = vmatprep.subr.bf16.mxu0 0
    %1700 = vmatpush1.bf16.msra.mxu0 %v725
    %1701 = vmatprep.subr.bf16.mxu0 0
    %1702 = vmatpush2.bf16.msra.mxu0 0
    %1703 = vmatprep.subr.bf16.mxu0 0
    %1704 = vmatpush2.bf16.msra.mxu0 0
    %1705 = vmatprep.subr.bf16.mxu0 0
    %1706 = vmatpush2.bf16.msra.mxu0 0
    %1707 = vmatprep.subr.bf16.mxu0 0
    %1708 = vmatpush2.bf16.msra.mxu0 0
    %1709 = vmatprep.subr.bf16.mxu0 0
    %1710 = vmatpush2.bf16.msra.mxu0 0
    %1711 = vmatprep.subr.bf16.mxu0 0
    %1712 = vmatpush2.bf16.msra.mxu0 0
    %1713 = vmatprep.subr.bf16.mxu0 0
    %1714 = vmatpush2.bf16.msra.mxu0 0
    %1715 = vmatprep.subr.bf16.mxu0 0
    %1716 = vmatpush2.bf16.msra.mxu0 0
    %1717 = vmatprep.mubr.bf16.mxu0 0
    %1718 = vmatmul.mubr.bf16.gmra.mxu0 %v1684
    %v1719 = vpop.f32.mrf.mxu0
    %v1720 = vadd.f32 0.0, %v1719
    %v1721 = vpop.f32.mrf.mxu0
    %v1722 = vpop.f32.mrf.mxu0
    %v1723 = vpop.f32.mrf.mxu0
    %1724 = vdwg.mxu0
    %v1725 = vadd.f32 %v1622, %v1720
    %v1726 = vtanh.pop %v1725
    %v1727 = vsub.f32 1.0, %v1682
    %v1728 = vmul.f32 %v1727, %v1494
    %v1729 = vmul.f32 %v1682, %v1726
    %v1730 = vadd.f32 %v1728, %v1729
    %s1731 = scalar_lea.vmem [#allocation4], 20
    %v1732 = vld [vmem:[%s1731] sm:$0xf]
    %1733 = vmatprep.subr.bf16.mxu0 0
    %1734 = vmatpush1.bf16.msra.mxu0 %v196
    %1735 = vmatprep.subr.bf16.mxu0 0
    %1736 = vmatpush1.bf16.msra.mxu0 %v195
    %1737 = vmatprep.subr.bf16.mxu0 0
    %1738 = vmatpush1.bf16.msra.mxu0 %v194
    %1739 = vmatprep.subr.bf16.mxu0 0
    %1740 = vmatpush1.bf16.msra.mxu0 %v193
    %1741 = vmatprep.subr.bf16.mxu0 0
    %1742 = vmatpush1.bf16.msra.mxu0 %v192
    %1743 = vmatprep.subr.bf16.mxu0 0
    %1744 = vmatpush1.bf16.msra.mxu0 %v191
    %1745 = vmatprep.subr.bf16.mxu0 0
    %1746 = vmatpush1.bf16.msra.mxu0 %v190
    %1747 = vmatprep.subr.bf16.mxu0 0
    %1748 = vmatpush1.bf16.msra.mxu0 %v189
    %1749 = vmatprep.subr.bf16.mxu0 0
    %1750 = vmatpush2.bf16.msra.mxu0 0
    %1751 = vmatprep.subr.bf16.mxu0 0
    %1752 = vmatpush2.bf16.msra.mxu0 0
    %1753 = vmatprep.subr.bf16.mxu0 0
    %1754 = vmatpush2.bf16.msra.mxu0 0
    %1755 = vmatprep.subr.bf16.mxu0 0
    %1756 = vmatpush2.bf16.msra.mxu0 0
    %1757 = vmatprep.subr.bf16.mxu0 0
    %1758 = vmatpush2.bf16.msra.mxu0 0
    %1759 = vmatprep.subr.bf16.mxu0 0
    %1760 = vmatpush2.bf16.msra.mxu0 0
    %1761 = vmatprep.subr.bf16.mxu0 0
    %1762 = vmatpush2.bf16.msra.mxu0 0
    %1763 = vmatprep.subr.bf16.mxu0 0
    %1764 = vmatpush2.bf16.msra.mxu0 0
    %1765 = vmatprep.mubr.bf16.mxu0 0
    %1766 = vmatmul.mubr.bf16.gmra.mxu0 %v1732
    %v1767 = vpop.f32.mrf.mxu0
    %v1768 = vadd.f32 %v155, %v1767
    %v1769 = vpop.f32.mrf.mxu0
    %v1770 = vpop.f32.mrf.mxu0
    %v1771 = vpop.f32.mrf.mxu0
    %1772 = vdwg.mxu0
    %v1773 = vadd.f32 %v1544, %v1768
    %v1774 = vsub.f32 %v1773, %v250
    %vm1775 = vcmp.gt.f32.partialorder %v1774, 0.0
    %v1776 = vsel %vm1775, 1, 0
    %v1777 = vcvt.s32.f32 %v1776
    %v1778 = vmul.f32 %v1777, %v1773
    %v1779 = vsub.f32 %v1773, %v1778
    %v1780 = vmul.f32 %v1779, %v262
    %v1781 = vpack.c.bf16 %v1778, %v1778
    %1782 = vmatprep.subr.bf16.mxu0 %v416
    %1783 = vmatpush1.bf16.msra.mxu0 %v415
    %1784 = vmatprep.subr.bf16.mxu0 %v413
    %1785 = vmatpush1.bf16.msra.mxu0 %v412
    %1786 = vmatprep.subr.bf16.mxu0 %v410
    %1787 = vmatpush1.bf16.msra.mxu0 %v409
    %1788 = vmatprep.subr.bf16.mxu0 %v407
    %1789 = vmatpush1.bf16.msra.mxu0 %v406
    %1790 = vmatprep.subr.bf16.mxu0 %v404
    %1791 = vmatpush1.bf16.msra.mxu0 %v403
    %1792 = vmatprep.subr.bf16.mxu0 %v401
    %1793 = vmatpush1.bf16.msra.mxu0 %v400
    %1794 = vmatprep.subr.bf16.mxu0 %v398
    %1795 = vmatpush1.bf16.msra.mxu0 %v397
    %1796 = vmatprep.subr.bf16.mxu0 %v395
    %1797 = vmatpush1.bf16.msra.mxu0 %v394
    %1798 = vmatprep.subr.bf16.mxu0 0
    %1799 = vmatpush2.bf16.msra.mxu0 0
    %1800 = vmatprep.subr.bf16.mxu0 0
    %1801 = vmatpush2.bf16.msra.mxu0 0
    %1802 = vmatprep.subr.bf16.mxu0 0
    %1803 = vmatpush2.bf16.msra.mxu0 0
    %1804 = vmatprep.subr.bf16.mxu0 0
    %1805 = vmatpush2.bf16.msra.mxu0 0
    %1806 = vmatprep.subr.bf16.mxu0 0
    %1807 = vmatpush2.bf16.msra.mxu0 0
    %1808 = vmatprep.subr.bf16.mxu0 0
    %1809 = vmatpush2.bf16.msra.mxu0 0
    %1810 = vmatprep.subr.bf16.mxu0 0
    %1811 = vmatpush2.bf16.msra.mxu0 0
    %1812 = vmatprep.subr.bf16.mxu0 0
    %1813 = vmatpush2.bf16.msra.mxu0 0
    %1814 = vmatprep.mubr.bf16.mxu0 0
    %1815 = vmatmul.mubr.bf16.gmra.mxu0 %v1781
    %v1816 = vpop.f32.mrf.mxu0
    %v1817 = vadd.f32 %v302, %v1816
    %v1818 = vpop.f32.mrf.mxu0
    %v1819 = vadd.f32 %v306, %v1818
    %v1820 = vpop.f32.mrf.mxu0
    %v1821 = vpop.f32.mrf.mxu0
    %1822 = vdwg.mxu0
    %1823 = vmatprep.subr.bf16.mxu0 0
    %1824 = vmatpush1.bf16.msra.mxu0 %v417
    %1825 = vmatprep.subr.bf16.mxu0 0
    %1826 = vmatpush1.bf16.msra.mxu0 %v414
    %1827 = vmatprep.subr.bf16.mxu0 0
    %1828 = vmatpush1.bf16.msra.mxu0 %v411
    %1829 = vmatprep.subr.bf16.mxu0 0
    %1830 = vmatpush1.bf16.msra.mxu0 %v408
    %1831 = vmatprep.subr.bf16.mxu0 0
    %1832 = vmatpush1.bf16.msra.mxu0 %v405
    %1833 = vmatprep.subr.bf16.mxu0 0
    %1834 = vmatpush1.bf16.msra.mxu0 %v402
    %1835 = vmatprep.subr.bf16.mxu0 0
    %1836 = vmatpush1.bf16.msra.mxu0 %v399
    %1837 = vmatprep.subr.bf16.mxu0 0
    %1838 = vmatpush1.bf16.msra.mxu0 %v396
    %1839 = vmatprep.subr.bf16.mxu0 0
    %1840 = vmatpush2.bf16.msra.mxu0 0
    %1841 = vmatprep.subr.bf16.mxu0 0
    %1842 = vmatpush2.bf16.msra.mxu0 0
    %1843 = vmatprep.subr.bf16.mxu0 0
    %1844 = vmatpush2.bf16.msra.mxu0 0
    %1845 = vmatprep.subr.bf16.mxu0 0
    %1846 = vmatpush2.bf16.msra.mxu0 0
    %1847 = vmatprep.subr.bf16.mxu0 0
    %1848 = vmatpush2.bf16.msra.mxu0 0
    %1849 = vmatprep.subr.bf16.mxu0 0
    %1850 = vmatpush2.bf16.msra.mxu0 0
    %1851 = vmatprep.subr.bf16.mxu0 0
    %1852 = vmatpush2.bf16.msra.mxu0 0
    %1853 = vmatprep.subr.bf16.mxu0 0
    %1854 = vmatpush2.bf16.msra.mxu0 0
    %1855 = vmatprep.mubr.bf16.mxu0 0
    %1856 = vmatmul.mubr.bf16.gmra.mxu0 %v1781
    %v1857 = vpop.f32.mrf.mxu0
    %v1858 = vadd.f32 %v310, %v1857
    %v1859 = vpop.f32.mrf.mxu0
    %v1860 = vpop.f32.mrf.mxu0
    %v1861 = vpop.f32.mrf.mxu0
    %1862 = vdwg.mxu0
    %v1863 = vpack.c.bf16 %v1730, %v1730
    %1864 = vmatprep.subr.bf16.mxu0 %v603
    %1865 = vmatpush1.bf16.msra.mxu0 %v602
    %1866 = vmatprep.subr.bf16.mxu0 %v601
    %1867 = vmatpush1.bf16.msra.mxu0 %v600
    %1868 = vmatprep.subr.bf16.mxu0 %v599
    %1869 = vmatpush1.bf16.msra.mxu0 %v598
    %1870 = vmatprep.subr.bf16.mxu0 %v597
    %1871 = vmatpush1.bf16.msra.mxu0 %v596
    %1872 = vmatprep.subr.bf16.mxu0 %v595
    %1873 = vmatpush1.bf16.msra.mxu0 %v594
    %1874 = vmatprep.subr.bf16.mxu0 %v593
    %1875 = vmatpush1.bf16.msra.mxu0 %v592
    %1876 = vmatprep.subr.bf16.mxu0 %v591
    %1877 = vmatpush1.bf16.msra.mxu0 %v590
    %1878 = vmatprep.subr.bf16.mxu0 %v589
    %1879 = vmatpush1.bf16.msra.mxu0 %v588
    %1880 = vmatprep.subr.bf16.mxu0 0
    %1881 = vmatpush2.bf16.msra.mxu0 0
    %1882 = vmatprep.subr.bf16.mxu0 0
    %1883 = vmatpush2.bf16.msra.mxu0 0
    %1884 = vmatprep.subr.bf16.mxu0 0
    %1885 = vmatpush2.bf16.msra.mxu0 0
    %1886 = vmatprep.subr.bf16.mxu0 0
    %1887 = vmatpush2.bf16.msra.mxu0 0
    %1888 = vmatprep.subr.bf16.mxu0 0
    %1889 = vmatpush2.bf16.msra.mxu0 0
    %1890 = vmatprep.subr.bf16.mxu0 0
    %1891 = vmatpush2.bf16.msra.mxu0 0
    %1892 = vmatprep.subr.bf16.mxu0 0
    %1893 = vmatpush2.bf16.msra.mxu0 0
    %1894 = vmatprep.subr.bf16.mxu0 0
    %1895 = vmatpush2.bf16.msra.mxu0 0
    %1896 = vmatprep.mubr.bf16.mxu0 0
    %1897 = vmatmul.mubr.bf16.gmra.mxu0 %v1863
    %v1898 = vpop.f32.mrf.mxu0
    %v1899 = vadd.f32 0.0, %v1898
    %v1900 = vpop.f32.mrf.mxu0
    %v1901 = vadd.f32 0.0, %v1900
    %v1902 = vpop.f32.mrf.mxu0
    %v1903 = vpop.f32.mrf.mxu0
    %1904 = vdwg.mxu0
    %v1905 = vadd.f32 %v1817, %v1899
    %v1906 = vxor.u32 %v1905, 2147483648
    %v1907 = vmul.f32 %v1906, 1.442695
    %v1908 = vpow.pop %v1907
    %v1909 = vadd.f32 %v1908, 1.0
    %v1910 = vrcp.pop %v1909
    %v1911 = vmul.f32 1.0, %v1910
    %v1912 = vadd.f32 %v1819, %v1901
    %v1913 = vxor.u32 %v1912, 2147483648
    %v1914 = vmul.f32 %v1913, 1.442695
    %v1915 = vpow.pop %v1914
    %v1916 = vadd.f32 %v1915, 1.0
    %v1917 = vrcp.pop %v1916
    %v1918 = vmul.f32 1.0, %v1917
    %v1919 = vmul.f32 %v1911, %v1730
    %v1920 = vpack.c.bf16 %v1919, %v1919
    %1921 = vmatprep.subr.bf16.mxu0 0
    %1922 = vmatpush1.bf16.msra.mxu0 %v732
    %1923 = vmatprep.subr.bf16.mxu0 0
    %1924 = vmatpush1.bf16.msra.mxu0 %v731
    %1925 = vmatprep.subr.bf16.mxu0 0
    %1926 = vmatpush1.bf16.msra.mxu0 %v730
    %1927 = vmatprep.subr.bf16.mxu0 0
    %1928 = vmatpush1.bf16.msra.mxu0 %v729
    %1929 = vmatprep.subr.bf16.mxu0 0
    %1930 = vmatpush1.bf16.msra.mxu0 %v728
    %1931 = vmatprep.subr.bf16.mxu0 0
    %1932 = vmatpush1.bf16.msra.mxu0 %v727
    %1933 = vmatprep.subr.bf16.mxu0 0
    %1934 = vmatpush1.bf16.msra.mxu0 %v726
    %1935 = vmatprep.subr.bf16.mxu0 0
    %1936 = vmatpush1.bf16.msra.mxu0 %v725
    %1937 = vmatprep.subr.bf16.mxu0 0
    %1938 = vmatpush2.bf16.msra.mxu0 0
    %1939 = vmatprep.subr.bf16.mxu0 0
    %1940 = vmatpush2.bf16.msra.mxu0 0
    %1941 = vmatprep.subr.bf16.mxu0 0
    %1942 = vmatpush2.bf16.msra.mxu0 0
    %1943 = vmatprep.subr.bf16.mxu0 0
    %1944 = vmatpush2.bf16.msra.mxu0 0
    %1945 = vmatprep.subr.bf16.mxu0 0
    %1946 = vmatpush2.bf16.msra.mxu0 0
    %1947 = vmatprep.subr.bf16.mxu0 0
    %1948 = vmatpush2.bf16.msra.mxu0 0
    %1949 = vmatprep.subr.bf16.mxu0 0
    %1950 = vmatpush2.bf16.msra.mxu0 0
    %1951 = vmatprep.subr.bf16.mxu0 0
    %1952 = vmatpush2.bf16.msra.mxu0 0
    %1953 = vmatprep.mubr.bf16.mxu0 0
    %1954 = vmatmul.mubr.bf16.gmra.mxu0 %v1920
    %v1955 = vpop.f32.mrf.mxu0
    %v1956 = vadd.f32 0.0, %v1955
    %v1957 = vpop.f32.mrf.mxu0
    %v1958 = vpop.f32.mrf.mxu0
    %v1959 = vpop.f32.mrf.mxu0
    %1960 = vdwg.mxu0
    %v1961 = vadd.f32 %v1858, %v1956
    %v1962 = vtanh.pop %v1961
    %v1963 = vsub.f32 1.0, %v1918
    %v1964 = vmul.f32 %v1963, %v1730
    %v1965 = vmul.f32 %v1918, %v1962
    %v1966 = vadd.f32 %v1964, %v1965
    %s1967 = scalar_lea.vmem [#allocation4], 24
    %v1968 = vld [vmem:[%s1967] sm:$0xf]
    %1969 = vmatprep.subr.bf16.mxu0 0
    %1970 = vmatpush1.bf16.msra.mxu0 %v196
    %1971 = vmatprep.subr.bf16.mxu0 0
    %1972 = vmatpush1.bf16.msra.mxu0 %v195
    %1973 = vmatprep.subr.bf16.mxu0 0
    %1974 = vmatpush1.bf16.msra.mxu0 %v194
    %1975 = vmatprep.subr.bf16.mxu0 0
    %1976 = vmatpush1.bf16.msra.mxu0 %v193
    %1977 = vmatprep.subr.bf16.mxu0 0
    %1978 = vmatpush1.bf16.msra.mxu0 %v192
    %1979 = vmatprep.subr.bf16.mxu0 0
    %1980 = vmatpush1.bf16.msra.mxu0 %v191
    %1981 = vmatprep.subr.bf16.mxu0 0
    %1982 = vmatpush1.bf16.msra.mxu0 %v190
    %1983 = vmatprep.subr.bf16.mxu0 0
    %1984 = vmatpush1.bf16.msra.mxu0 %v189
    %1985 = vmatprep.subr.bf16.mxu0 0
    %1986 = vmatpush2.bf16.msra.mxu0 0
    %1987 = vmatprep.subr.bf16.mxu0 0
    %1988 = vmatpush2.bf16.msra.mxu0 0
    %1989 = vmatprep.subr.bf16.mxu0 0
    %1990 = vmatpush2.bf16.msra.mxu0 0
    %1991 = vmatprep.subr.bf16.mxu0 0
    %1992 = vmatpush2.bf16.msra.mxu0 0
    %1993 = vmatprep.subr.bf16.mxu0 0
    %1994 = vmatpush2.bf16.msra.mxu0 0
    %1995 = vmatprep.subr.bf16.mxu0 0
    %1996 = vmatpush2.bf16.msra.mxu0 0
    %1997 = vmatprep.subr.bf16.mxu0 0
    %1998 = vmatpush2.bf16.msra.mxu0 0
    %1999 = vmatprep.subr.bf16.mxu0 0
    %2000 = vmatpush2.bf16.msra.mxu0 0
    %2001 = vmatprep.mubr.bf16.mxu0 0
    %2002 = vmatmul.mubr.bf16.gmra.mxu0 %v1968
    %v2003 = vpop.f32.mrf.mxu0
    %v2004 = vadd.f32 %v155, %v2003
    %v2005 = vpop.f32.mrf.mxu0
    %v2006 = vpop.f32.mrf.mxu0
    %v2007 = vpop.f32.mrf.mxu0
    %2008 = vdwg.mxu0
    %v2009 = vadd.f32 %v1780, %v2004
    %v2010 = vsub.f32 %v2009, %v250
    %vm2011 = vcmp.gt.f32.partialorder %v2010, 0.0
    %v2012 = vsel %vm2011, 1, 0
    %v2013 = vcvt.s32.f32 %v2012
    %v2014 = vmul.f32 %v2013, %v2009
    %v2015 = vsub.f32 %v2009, %v2014
    %v2016 = vmul.f32 %v2015, %v262
    %v2017 = vpack.c.bf16 %v2014, %v2014
    %2018 = vmatprep.subr.bf16.mxu0 %v416
    %2019 = vmatpush1.bf16.msra.mxu0 %v415
    %2020 = vmatprep.subr.bf16.mxu0 %v413
    %2021 = vmatpush1.bf16.msra.mxu0 %v412
    %2022 = vmatprep.subr.bf16.mxu0 %v410
    %2023 = vmatpush1.bf16.msra.mxu0 %v409
    %2024 = vmatprep.subr.bf16.mxu0 %v407
    %2025 = vmatpush1.bf16.msra.mxu0 %v406
    %2026 = vmatprep.subr.bf16.mxu0 %v404
    %2027 = vmatpush1.bf16.msra.mxu0 %v403
    %2028 = vmatprep.subr.bf16.mxu0 %v401
    %2029 = vmatpush1.bf16.msra.mxu0 %v400
    %2030 = vmatprep.subr.bf16.mxu0 %v398
    %2031 = vmatpush1.bf16.msra.mxu0 %v397
    %2032 = vmatprep.subr.bf16.mxu0 %v395
    %2033 = vmatpush1.bf16.msra.mxu0 %v394
    %2034 = vmatprep.subr.bf16.mxu0 0
    %2035 = vmatpush2.bf16.msra.mxu0 0
    %2036 = vmatprep.subr.bf16.mxu0 0
    %2037 = vmatpush2.bf16.msra.mxu0 0
    %2038 = vmatprep.subr.bf16.mxu0 0
    %2039 = vmatpush2.bf16.msra.mxu0 0
    %2040 = vmatprep.subr.bf16.mxu0 0
    %2041 = vmatpush2.bf16.msra.mxu0 0
    %2042 = vmatprep.subr.bf16.mxu0 0
    %2043 = vmatpush2.bf16.msra.mxu0 0
    %2044 = vmatprep.subr.bf16.mxu0 0
    %2045 = vmatpush2.bf16.msra.mxu0 0
    %2046 = vmatprep.subr.bf16.mxu0 0
    %2047 = vmatpush2.bf16.msra.mxu0 0
    %2048 = vmatprep.subr.bf16.mxu0 0
    %2049 = vmatpush2.bf16.msra.mxu0 0
    %2050 = vmatprep.mubr.bf16.mxu0 0
    %2051 = vmatmul.mubr.bf16.gmra.mxu0 %v2017
    %v2052 = vpop.f32.mrf.mxu0
    %v2053 = vadd.f32 %v302, %v2052
    %v2054 = vpop.f32.mrf.mxu0
    %v2055 = vadd.f32 %v306, %v2054
    %v2056 = vpop.f32.mrf.mxu0
    %v2057 = vpop.f32.mrf.mxu0
    %2058 = vdwg.mxu0
    %2059 = vmatprep.subr.bf16.mxu0 0
    %2060 = vmatpush1.bf16.msra.mxu0 %v417
    %2061 = vmatprep.subr.bf16.mxu0 0
    %2062 = vmatpush1.bf16.msra.mxu0 %v414
    %2063 = vmatprep.subr.bf16.mxu0 0
    %2064 = vmatpush1.bf16.msra.mxu0 %v411
    %2065 = vmatprep.subr.bf16.mxu0 0
    %2066 = vmatpush1.bf16.msra.mxu0 %v408
    %2067 = vmatprep.subr.bf16.mxu0 0
    %2068 = vmatpush1.bf16.msra.mxu0 %v405
    %2069 = vmatprep.subr.bf16.mxu0 0
    %2070 = vmatpush1.bf16.msra.mxu0 %v402
    %2071 = vmatprep.subr.bf16.mxu0 0
    %2072 = vmatpush1.bf16.msra.mxu0 %v399
    %2073 = vmatprep.subr.bf16.mxu0 0
    %2074 = vmatpush1.bf16.msra.mxu0 %v396
    %2075 = vmatprep.subr.bf16.mxu0 0
    %2076 = vmatpush2.bf16.msra.mxu0 0
    %2077 = vmatprep.subr.bf16.mxu0 0
    %2078 = vmatpush2.bf16.msra.mxu0 0
    %2079 = vmatprep.subr.bf16.mxu0 0
    %2080 = vmatpush2.bf16.msra.mxu0 0
    %2081 = vmatprep.subr.bf16.mxu0 0
    %2082 = vmatpush2.bf16.msra.mxu0 0
    %2083 = vmatprep.subr.bf16.mxu0 0
    %2084 = vmatpush2.bf16.msra.mxu0 0
    %2085 = vmatprep.subr.bf16.mxu0 0
    %2086 = vmatpush2.bf16.msra.mxu0 0
    %2087 = vmatprep.subr.bf16.mxu0 0
    %2088 = vmatpush2.bf16.msra.mxu0 0
    %2089 = vmatprep.subr.bf16.mxu0 0
    %2090 = vmatpush2.bf16.msra.mxu0 0
    %2091 = vmatprep.mubr.bf16.mxu0 0
    %2092 = vmatmul.mubr.bf16.gmra.mxu0 %v2017
    %v2093 = vpop.f32.mrf.mxu0
    %v2094 = vadd.f32 %v310, %v2093
    %v2095 = vpop.f32.mrf.mxu0
    %v2096 = vpop.f32.mrf.mxu0
    %v2097 = vpop.f32.mrf.mxu0
    %2098 = vdwg.mxu0
    %v2099 = vpack.c.bf16 %v1966, %v1966
    %2100 = vmatprep.subr.bf16.mxu0 %v603
    %2101 = vmatpush1.bf16.msra.mxu0 %v602
    %2102 = vmatprep.subr.bf16.mxu0 %v601
    %2103 = vmatpush1.bf16.msra.mxu0 %v600
    %2104 = vmatprep.subr.bf16.mxu0 %v599
    %2105 = vmatpush1.bf16.msra.mxu0 %v598
    %2106 = vmatprep.subr.bf16.mxu0 %v597
    %2107 = vmatpush1.bf16.msra.mxu0 %v596
    %2108 = vmatprep.subr.bf16.mxu0 %v595
    %2109 = vmatpush1.bf16.msra.mxu0 %v594
    %2110 = vmatprep.subr.bf16.mxu0 %v593
    %2111 = vmatpush1.bf16.msra.mxu0 %v592
    %2112 = vmatprep.subr.bf16.mxu0 %v591
    %2113 = vmatpush1.bf16.msra.mxu0 %v590
    %2114 = vmatprep.subr.bf16.mxu0 %v589
    %2115 = vmatpush1.bf16.msra.mxu0 %v588
    %2116 = vmatprep.subr.bf16.mxu0 0
    %2117 = vmatpush2.bf16.msra.mxu0 0
    %2118 = vmatprep.subr.bf16.mxu0 0
    %2119 = vmatpush2.bf16.msra.mxu0 0
    %2120 = vmatprep.subr.bf16.mxu0 0
    %2121 = vmatpush2.bf16.msra.mxu0 0
    %2122 = vmatprep.subr.bf16.mxu0 0
    %2123 = vmatpush2.bf16.msra.mxu0 0
    %2124 = vmatprep.subr.bf16.mxu0 0
    %2125 = vmatpush2.bf16.msra.mxu0 0
    %2126 = vmatprep.subr.bf16.mxu0 0
    %2127 = vmatpush2.bf16.msra.mxu0 0
    %2128 = vmatprep.subr.bf16.mxu0 0
    %2129 = vmatpush2.bf16.msra.mxu0 0
    %2130 = vmatprep.subr.bf16.mxu0 0
    %2131 = vmatpush2.bf16.msra.mxu0 0
    %2132 = vmatprep.mubr.bf16.mxu0 0
    %2133 = vmatmul.mubr.bf16.gmra.mxu0 %v2099
    %v2134 = vpop.f32.mrf.mxu0
    %v2135 = vadd.f32 0.0, %v2134
    %v2136 = vpop.f32.mrf.mxu0
    %v2137 = vadd.f32 0.0, %v2136
    %v2138 = vpop.f32.mrf.mxu0
    %v2139 = vpop.f32.mrf.mxu0
    %2140 = vdwg.mxu0
    %v2141 = vadd.f32 %v2053, %v2135
    %v2142 = vxor.u32 %v2141, 2147483648
    %v2143 = vmul.f32 %v2142, 1.442695
    %v2144 = vpow.pop %v2143
    %v2145 = vadd.f32 %v2144, 1.0
    %v2146 = vrcp.pop %v2145
    %v2147 = vmul.f32 1.0, %v2146
    %v2148 = vadd.f32 %v2055, %v2137
    %v2149 = vxor.u32 %v2148, 2147483648
    %v2150 = vmul.f32 %v2149, 1.442695
    %v2151 = vpow.pop %v2150
    %v2152 = vadd.f32 %v2151, 1.0
    %v2153 = vrcp.pop %v2152
    %v2154 = vmul.f32 1.0, %v2153
    %v2155 = vmul.f32 %v2147, %v1966
    %v2156 = vpack.c.bf16 %v2155, %v2155
    %2157 = vmatprep.subr.bf16.mxu0 0
    %2158 = vmatpush1.bf16.msra.mxu0 %v732
    %2159 = vmatprep.subr.bf16.mxu0 0
    %2160 = vmatpush1.bf16.msra.mxu0 %v731
    %2161 = vmatprep.subr.bf16.mxu0 0
    %2162 = vmatpush1.bf16.msra.mxu0 %v730
    %2163 = vmatprep.subr.bf16.mxu0 0
    %2164 = vmatpush1.bf16.msra.mxu0 %v729
    %2165 = vmatprep.subr.bf16.mxu0 0
    %2166 = vmatpush1.bf16.msra.mxu0 %v728
    %2167 = vmatprep.subr.bf16.mxu0 0
    %2168 = vmatpush1.bf16.msra.mxu0 %v727
    %2169 = vmatprep.subr.bf16.mxu0 0
    %2170 = vmatpush1.bf16.msra.mxu0 %v726
    %2171 = vmatprep.subr.bf16.mxu0 0
    %2172 = vmatpush1.bf16.msra.mxu0 %v725
    %2173 = vmatprep.subr.bf16.mxu0 0
    %2174 = vmatpush2.bf16.msra.mxu0 0
    %2175 = vmatprep.subr.bf16.mxu0 0
    %2176 = vmatpush2.bf16.msra.mxu0 0
    %2177 = vmatprep.subr.bf16.mxu0 0
    %2178 = vmatpush2.bf16.msra.mxu0 0
    %2179 = vmatprep.subr.bf16.mxu0 0
    %2180 = vmatpush2.bf16.msra.mxu0 0
    %2181 = vmatprep.subr.bf16.mxu0 0
    %2182 = vmatpush2.bf16.msra.mxu0 0
    %2183 = vmatprep.subr.bf16.mxu0 0
    %2184 = vmatpush2.bf16.msra.mxu0 0
    %2185 = vmatprep.subr.bf16.mxu0 0
    %2186 = vmatpush2.bf16.msra.mxu0 0
    %2187 = vmatprep.subr.bf16.mxu0 0
    %2188 = vmatpush2.bf16.msra.mxu0 0
    %2189 = vmatprep.mubr.bf16.mxu0 0
    %2190 = vmatmul.mubr.bf16.gmra.mxu0 %v2156
    %v2191 = vpop.f32.mrf.mxu0
    %v2192 = vadd.f32 0.0, %v2191
    %v2193 = vpop.f32.mrf.mxu0
    %v2194 = vpop.f32.mrf.mxu0
    %v2195 = vpop.f32.mrf.mxu0
    %2196 = vdwg.mxu0
    %v2197 = vadd.f32 %v2094, %v2192
    %v2198 = vtanh.pop %v2197
    %v2199 = vsub.f32 1.0, %v2154
    %v2200 = vmul.f32 %v2199, %v1966
    %v2201 = vmul.f32 %v2154, %v2198
    %v2202 = vadd.f32 %v2200, %v2201
    %s2203 = scalar_lea.vmem [#allocation4], 28
    %v2204 = vld [vmem:[%s2203] sm:$0xf]
    %2205 = vmatprep.subr.bf16.mxu0 0
    %2206 = vmatpush1.bf16.msra.mxu0 %v196
    %2207 = vmatprep.subr.bf16.mxu0 0
    %2208 = vmatpush1.bf16.msra.mxu0 %v195
    %2209 = vmatprep.subr.bf16.mxu0 0
    %2210 = vmatpush1.bf16.msra.mxu0 %v194
    %2211 = vmatprep.subr.bf16.mxu0 0
    %2212 = vmatpush1.bf16.msra.mxu0 %v193
    %2213 = vmatprep.subr.bf16.mxu0 0
    %2214 = vmatpush1.bf16.msra.mxu0 %v192
    %2215 = vmatprep.subr.bf16.mxu0 0
    %2216 = vmatpush1.bf16.msra.mxu0 %v191
    %2217 = vmatprep.subr.bf16.mxu0 0
    %2218 = vmatpush1.bf16.msra.mxu0 %v190
    %2219 = vmatprep.subr.bf16.mxu0 0
    %2220 = vmatpush1.bf16.msra.mxu0 %v189
    %2221 = vmatprep.subr.bf16.mxu0 0
    %2222 = vmatpush2.bf16.msra.mxu0 0
    %2223 = vmatprep.subr.bf16.mxu0 0
    %2224 = vmatpush2.bf16.msra.mxu0 0
    %2225 = vmatprep.subr.bf16.mxu0 0
    %2226 = vmatpush2.bf16.msra.mxu0 0
    %2227 = vmatprep.subr.bf16.mxu0 0
    %2228 = vmatpush2.bf16.msra.mxu0 0
    %2229 = vmatprep.subr.bf16.mxu0 0
    %2230 = vmatpush2.bf16.msra.mxu0 0
    %2231 = vmatprep.subr.bf16.mxu0 0
    %2232 = vmatpush2.bf16.msra.mxu0 0
    %2233 = vmatprep.subr.bf16.mxu0 0
    %2234 = vmatpush2.bf16.msra.mxu0 0
    %2235 = vmatprep.subr.bf16.mxu0 0
    %2236 = vmatpush2.bf16.msra.mxu0 0
    %2237 = vmatprep.mubr.bf16.mxu0 0
    %2238 = vmatmul.mubr.bf16.gmra.mxu0 %v2204
    %v2239 = vpop.f32.mrf.mxu0
    %v2240 = vadd.f32 %v155, %v2239
    %v2241 = vpop.f32.mrf.mxu0
    %v2242 = vpop.f32.mrf.mxu0
    %v2243 = vpop.f32.mrf.mxu0
    %2244 = vdwg.mxu0
    %v2245 = vadd.f32 %v2016, %v2240
    %v2246 = vsub.f32 %v2245, %v250
    %vm2247 = vcmp.gt.f32.partialorder %v2246, 0.0
    %v2248 = vsel %vm2247, 1, 0
    %v2249 = vcvt.s32.f32 %v2248
    %v2250 = vmul.f32 %v2249, %v2245
    %v2251 = vsub.f32 %v2245, %v2250
    %v2252 = vmul.f32 %v2251, %v262
    %v2253 = vpack.c.bf16 %v2250, %v2250
    %2254 = vmatprep.subr.bf16.mxu0 %v416
    %2255 = vmatpush1.bf16.msra.mxu0 %v415
    %2256 = vmatprep.subr.bf16.mxu0 %v413
    %2257 = vmatpush1.bf16.msra.mxu0 %v412
    %2258 = vmatprep.subr.bf16.mxu0 %v410
    %2259 = vmatpush1.bf16.msra.mxu0 %v409
    %2260 = vmatprep.subr.bf16.mxu0 %v407
    %2261 = vmatpush1.bf16.msra.mxu0 %v406
    %2262 = vmatprep.subr.bf16.mxu0 %v404
    %2263 = vmatpush1.bf16.msra.mxu0 %v403
    %2264 = vmatprep.subr.bf16.mxu0 %v401
    %2265 = vmatpush1.bf16.msra.mxu0 %v400
    %2266 = vmatprep.subr.bf16.mxu0 %v398
    %2267 = vmatpush1.bf16.msra.mxu0 %v397
    %2268 = vmatprep.subr.bf16.mxu0 %v395
    %2269 = vmatpush1.bf16.msra.mxu0 %v394
    %2270 = vmatprep.subr.bf16.mxu0 0
    %2271 = vmatpush2.bf16.msra.mxu0 0
    %2272 = vmatprep.subr.bf16.mxu0 0
    %2273 = vmatpush2.bf16.msra.mxu0 0
    %2274 = vmatprep.subr.bf16.mxu0 0
    %2275 = vmatpush2.bf16.msra.mxu0 0
    %2276 = vmatprep.subr.bf16.mxu0 0
    %2277 = vmatpush2.bf16.msra.mxu0 0
    %2278 = vmatprep.subr.bf16.mxu0 0
    %2279 = vmatpush2.bf16.msra.mxu0 0
    %2280 = vmatprep.subr.bf16.mxu0 0
    %2281 = vmatpush2.bf16.msra.mxu0 0
    %2282 = vmatprep.subr.bf16.mxu0 0
    %2283 = vmatpush2.bf16.msra.mxu0 0
    %2284 = vmatprep.subr.bf16.mxu0 0
    %2285 = vmatpush2.bf16.msra.mxu0 0
    %2286 = vmatprep.mubr.bf16.mxu0 0
    %2287 = vmatmul.mubr.bf16.gmra.mxu0 %v2253
    %v2288 = vpop.f32.mrf.mxu0
    %v2289 = vadd.f32 %v302, %v2288
    %v2290 = vpop.f32.mrf.mxu0
    %v2291 = vadd.f32 %v306, %v2290
    %v2292 = vpop.f32.mrf.mxu0
    %v2293 = vpop.f32.mrf.mxu0
    %2294 = vdwg.mxu0
    %2295 = vmatprep.subr.bf16.mxu0 0
    %2296 = vmatpush1.bf16.msra.mxu0 %v417
    %2297 = vmatprep.subr.bf16.mxu0 0
    %2298 = vmatpush1.bf16.msra.mxu0 %v414
    %2299 = vmatprep.subr.bf16.mxu0 0
    %2300 = vmatpush1.bf16.msra.mxu0 %v411
    %2301 = vmatprep.subr.bf16.mxu0 0
    %2302 = vmatpush1.bf16.msra.mxu0 %v408
    %2303 = vmatprep.subr.bf16.mxu0 0
    %2304 = vmatpush1.bf16.msra.mxu0 %v405
    %2305 = vmatprep.subr.bf16.mxu0 0
    %2306 = vmatpush1.bf16.msra.mxu0 %v402
    %2307 = vmatprep.subr.bf16.mxu0 0
    %2308 = vmatpush1.bf16.msra.mxu0 %v399
    %2309 = vmatprep.subr.bf16.mxu0 0
    %2310 = vmatpush1.bf16.msra.mxu0 %v396
    %2311 = vmatprep.subr.bf16.mxu0 0
    %2312 = vmatpush2.bf16.msra.mxu0 0
    %2313 = vmatprep.subr.bf16.mxu0 0
    %2314 = vmatpush2.bf16.msra.mxu0 0
    %2315 = vmatprep.subr.bf16.mxu0 0
    %2316 = vmatpush2.bf16.msra.mxu0 0
    %2317 = vmatprep.subr.bf16.mxu0 0
    %2318 = vmatpush2.bf16.msra.mxu0 0
    %2319 = vmatprep.subr.bf16.mxu0 0
    %2320 = vmatpush2.bf16.msra.mxu0 0
    %2321 = vmatprep.subr.bf16.mxu0 0
    %2322 = vmatpush2.bf16.msra.mxu0 0
    %2323 = vmatprep.subr.bf16.mxu0 0
    %2324 = vmatpush2.bf16.msra.mxu0 0
    %2325 = vmatprep.subr.bf16.mxu0 0
    %2326 = vmatpush2.bf16.msra.mxu0 0
    %2327 = vmatprep.mubr.bf16.mxu0 0
    %2328 = vmatmul.mubr.bf16.gmra.mxu0 %v2253
    %v2329 = vpop.f32.mrf.mxu0
    %v2330 = vadd.f32 %v310, %v2329
    %v2331 = vpop.f32.mrf.mxu0
    %v2332 = vpop.f32.mrf.mxu0
    %v2333 = vpop.f32.mrf.mxu0
    %2334 = vdwg.mxu0
    %v2335 = vpack.c.bf16 %v2202, %v2202
    %2336 = vmatprep.subr.bf16.mxu0 %v603
    %2337 = vmatpush1.bf16.msra.mxu0 %v602
    %2338 = vmatprep.subr.bf16.mxu0 %v601
    %2339 = vmatpush1.bf16.msra.mxu0 %v600
    %2340 = vmatprep.subr.bf16.mxu0 %v599
    %2341 = vmatpush1.bf16.msra.mxu0 %v598
    %2342 = vmatprep.subr.bf16.mxu0 %v597
    %2343 = vmatpush1.bf16.msra.mxu0 %v596
    %2344 = vmatprep.subr.bf16.mxu0 %v595
    %2345 = vmatpush1.bf16.msra.mxu0 %v594
    %2346 = vmatprep.subr.bf16.mxu0 %v593
    %2347 = vmatpush1.bf16.msra.mxu0 %v592
    %2348 = vmatprep.subr.bf16.mxu0 %v591
    %2349 = vmatpush1.bf16.msra.mxu0 %v590
    %2350 = vmatprep.subr.bf16.mxu0 %v589
    %2351 = vmatpush1.bf16.msra.mxu0 %v588
    %2352 = vmatprep.subr.bf16.mxu0 0
    %2353 = vmatpush2.bf16.msra.mxu0 0
    %2354 = vmatprep.subr.bf16.mxu0 0
    %2355 = vmatpush2.bf16.msra.mxu0 0
    %2356 = vmatprep.subr.bf16.mxu0 0
    %2357 = vmatpush2.bf16.msra.mxu0 0
    %2358 = vmatprep.subr.bf16.mxu0 0
    %2359 = vmatpush2.bf16.msra.mxu0 0
    %2360 = vmatprep.subr.bf16.mxu0 0
    %2361 = vmatpush2.bf16.msra.mxu0 0
    %2362 = vmatprep.subr.bf16.mxu0 0
    %2363 = vmatpush2.bf16.msra.mxu0 0
    %2364 = vmatprep.subr.bf16.mxu0 0
    %2365 = vmatpush2.bf16.msra.mxu0 0
    %2366 = vmatprep.subr.bf16.mxu0 0
    %2367 = vmatpush2.bf16.msra.mxu0 0
    %2368 = vmatprep.mubr.bf16.mxu0 0
    %2369 = vmatmul.mubr.bf16.gmra.mxu0 %v2335
    %v2370 = vpop.f32.mrf.mxu0
    %v2371 = vadd.f32 0.0, %v2370
    %v2372 = vpop.f32.mrf.mxu0
    %v2373 = vadd.f32 0.0, %v2372
    %v2374 = vpop.f32.mrf.mxu0
    %v2375 = vpop.f32.mrf.mxu0
    %2376 = vdwg.mxu0
    %v2377 = vadd.f32 %v2289, %v2371
    %v2378 = vxor.u32 %v2377, 2147483648
    %v2379 = vmul.f32 %v2378, 1.442695
    %v2380 = vpow.pop %v2379
    %v2381 = vadd.f32 %v2380, 1.0
    %v2382 = vrcp.pop %v2381
    %v2383 = vmul.f32 1.0, %v2382
    %v2384 = vadd.f32 %v2291, %v2373
    %v2385 = vxor.u32 %v2384, 2147483648
    %v2386 = vmul.f32 %v2385, 1.442695
    %v2387 = vpow.pop %v2386
    %v2388 = vadd.f32 %v2387, 1.0
    %v2389 = vrcp.pop %v2388
    %v2390 = vmul.f32 1.0, %v2389
    %v2391 = vmul.f32 %v2383, %v2202
    %v2392 = vpack.c.bf16 %v2391, %v2391
    %2393 = vmatprep.subr.bf16.mxu0 0
    %2394 = vmatpush1.bf16.msra.mxu0 %v732
    %2395 = vmatprep.subr.bf16.mxu0 0
    %2396 = vmatpush1.bf16.msra.mxu0 %v731
    %2397 = vmatprep.subr.bf16.mxu0 0
    %2398 = vmatpush1.bf16.msra.mxu0 %v730
    %2399 = vmatprep.subr.bf16.mxu0 0
    %2400 = vmatpush1.bf16.msra.mxu0 %v729
    %2401 = vmatprep.subr.bf16.mxu0 0
    %2402 = vmatpush1.bf16.msra.mxu0 %v728
    %2403 = vmatprep.subr.bf16.mxu0 0
    %2404 = vmatpush1.bf16.msra.mxu0 %v727
    %2405 = vmatprep.subr.bf16.mxu0 0
    %2406 = vmatpush1.bf16.msra.mxu0 %v726
    %2407 = vmatprep.subr.bf16.mxu0 0
    %2408 = vmatpush1.bf16.msra.mxu0 %v725
    %2409 = vmatprep.subr.bf16.mxu0 0
    %2410 = vmatpush2.bf16.msra.mxu0 0
    %2411 = vmatprep.subr.bf16.mxu0 0
    %2412 = vmatpush2.bf16.msra.mxu0 0
    %2413 = vmatprep.subr.bf16.mxu0 0
    %2414 = vmatpush2.bf16.msra.mxu0 0
    %2415 = vmatprep.subr.bf16.mxu0 0
    %2416 = vmatpush2.bf16.msra.mxu0 0
    %2417 = vmatprep.subr.bf16.mxu0 0
    %2418 = vmatpush2.bf16.msra.mxu0 0
    %2419 = vmatprep.subr.bf16.mxu0 0
    %2420 = vmatpush2.bf16.msra.mxu0 0
    %2421 = vmatprep.subr.bf16.mxu0 0
    %2422 = vmatpush2.bf16.msra.mxu0 0
    %2423 = vmatprep.subr.bf16.mxu0 0
    %2424 = vmatpush2.bf16.msra.mxu0 0
    %2425 = vmatprep.mubr.bf16.mxu0 0
    %2426 = vmatmul.mubr.bf16.gmra.mxu0 %v2392
    %v2427 = vpop.f32.mrf.mxu0
    %v2428 = vadd.f32 0.0, %v2427
    %v2429 = vpop.f32.mrf.mxu0
    %v2430 = vpop.f32.mrf.mxu0
    %v2431 = vpop.f32.mrf.mxu0
    %2432 = vdwg.mxu0
    %v2433 = vadd.f32 %v2330, %v2428
    %v2434 = vtanh.pop %v2433
    %v2435 = vsub.f32 1.0, %v2390
    %v2436 = vmul.f32 %v2435, %v2202
    %v2437 = vmul.f32 %v2390, %v2434
    %v2438 = vadd.f32 %v2436, %v2437
    %2439 = vst [vmem:[#allocation2] sm:$0xff] %v2438
    %2440 = vst [vmem:[#allocation3] sm:$0xff] %v2252
    // Predicated region
    $region74: #{tpu_custom_call.1} parent=1 // pred_check
      %p2441 = pneg %p122
    $region75: #{tpu_custom_call.1} parent=1 // pred_check_branch
      %2443 = sbr.rel (%p2441) target = $region77
    $region76: #{tpu_custom_call.1} parent=1 // pred_region
      %v2444 = vpack.c.bf16 %v2438, %v2438
      %v2445 = vld [vmem:[#allocation13] sm:$0xf]
      %v2446 = vld [vmem:[#allocation13 + $0x4] sm:$0xf]
      %v2447 = vld [vmem:[#allocation13 + $0x8] sm:$0xf]
      %v2448 = vld [vmem:[#allocation13 + $0xc] sm:$0xf]
      %v2449 = vld [vmem:[#allocation13 + $0x10] sm:$0xf]
      %v2450 = vld [vmem:[#allocation13 + $0x14] sm:$0xf]
      %v2451 = vld [vmem:[#allocation13 + $0x18] sm:$0xf]
      %v2452 = vld [vmem:[#allocation13 + $0x1c] sm:$0xf]
      %v2453 = vld [vmem:[#allocation13 + $0x20] sm:$0xf]
      %v2454 = vld [vmem:[#allocation13 + $0x24] sm:$0xf]
      %v2455 = vld [vmem:[#allocation13 + $0x28] sm:$0xf]
      %v2456 = vld [vmem:[#allocation13 + $0x2c] sm:$0xf]
      %v2457 = vld [vmem:[#allocation13 + $0x30] sm:$0xf]
      %v2458 = vld [vmem:[#allocation13 + $0x34] sm:$0xf]
      %v2459 = vld [vmem:[#allocation13 + $0x38] sm:$0xf]
      %v2460 = vld [vmem:[#allocation13 + $0x3c] sm:$0xf]
      %v2461 = vld [vmem:[%s10] sm:$0x1]
      %v2463 = vlaneseq
      %v2464 = vshrl.u32 %v2463, 7
      %v2465 = vsub.s32 0, %v2464
      %v2466 = vrot.slane %v2461, %v2465
      %v2484 = vunpack.c.l.b16 %v2445
      %v2485 = vunpack.c.l.b16 %v2446
      %v2486 = vunpack.c.l.b16 %v2447
      %v2487 = vunpack.c.l.b16 %v2448
      %v2488 = vunpack.c.l.b16 %v2449
      %v2489 = vunpack.c.l.b16 %v2450
      %v2490 = vunpack.c.l.b16 %v2451
      %v2491 = vunpack.c.l.b16 %v2452
      %v2492 = vunpack.c.l.b16 %v2453
      %v2493 = vunpack.c.l.b16 %v2454
      %v2494 = vunpack.c.l.b16 %v2455
      %v2495 = vunpack.c.l.b16 %v2456
      %v2496 = vunpack.c.l.b16 %v2457
      %v2497 = vunpack.c.l.b16 %v2458
      %v2498 = vunpack.c.l.b16 %v2459
      %v2499 = vunpack.c.l.b16 %v2460
      %v2500 = vpack.c.b16 %v2485, %v2484
      %v2501 = vpack.c.b16 %v2487, %v2486
      %v2502 = vpack.c.b16 %v2489, %v2488
      %v2503 = vpack.c.b16 %v2491, %v2490
      %v2504 = vpack.c.b16 %v2493, %v2492
      %v2505 = vpack.c.b16 %v2495, %v2494
      %v2506 = vpack.c.b16 %v2497, %v2496
      %v2507 = vpack.c.b16 %v2499, %v2498
      %2516 = vmatprep.subr.bf16.mxu0 0
      %2517 = vmatpush1.bf16.msra.mxu0 %v2507
      %2518 = vmatprep.subr.bf16.mxu0 0
      %2519 = vmatpush1.bf16.msra.mxu0 %v2506
      %2520 = vmatprep.subr.bf16.mxu0 0
      %2521 = vmatpush1.bf16.msra.mxu0 %v2505
      %2522 = vmatprep.subr.bf16.mxu0 0
      %2523 = vmatpush1.bf16.msra.mxu0 %v2504
      %2524 = vmatprep.subr.bf16.mxu0 0
      %2525 = vmatpush1.bf16.msra.mxu0 %v2503
      %2526 = vmatprep.subr.bf16.mxu0 0
      %2527 = vmatpush1.bf16.msra.mxu0 %v2502
      %2528 = vmatprep.subr.bf16.mxu0 0
      %2529 = vmatpush1.bf16.msra.mxu0 %v2501
      %2530 = vmatprep.subr.bf16.mxu0 0
      %2531 = vmatpush1.bf16.msra.mxu0 %v2500
      %2532 = vmatprep.subr.bf16.mxu0 0
      %2533 = vmatpush2.bf16.msra.mxu0 0
      %2534 = vmatprep.subr.bf16.mxu0 0
      %2535 = vmatpush2.bf16.msra.mxu0 0
      %2536 = vmatprep.subr.bf16.mxu0 0
      %2537 = vmatpush2.bf16.msra.mxu0 0
      %2538 = vmatprep.subr.bf16.mxu0 0
      %2539 = vmatpush2.bf16.msra.mxu0 0
      %2540 = vmatprep.subr.bf16.mxu0 0
      %2541 = vmatpush2.bf16.msra.mxu0 0
      %2542 = vmatprep.subr.bf16.mxu0 0
      %2543 = vmatpush2.bf16.msra.mxu0 0
      %2544 = vmatprep.subr.bf16.mxu0 0
      %2545 = vmatpush2.bf16.msra.mxu0 0
      %2546 = vmatprep.subr.bf16.mxu0 0
      %2547 = vmatpush2.bf16.msra.mxu0 0
      %2548 = vmatprep.mubr.bf16.mxu0 0
      %2549 = vmatmul.mubr.bf16.gmra.mxu0 %v2444
      %v2550 = vpop.f32.mrf.mxu0
      %v2551 = vadd.f32 %v2466, %v2550
      %v2552 = vpop.f32.mrf.mxu0
      %v2553 = vpop.f32.mrf.mxu0
      %v2554 = vpop.f32.mrf.mxu0
      %2555 = vdwg.mxu0
      %2556 = vst [vmem:[#allocation15] sm:$0xff] %v2551
    $region77: #{tpu_custom_call.1} parent=1 // pred_fallthru
      _
    // Predicated region
    $region78: #{tpu_custom_call.1} parent=1 // pred_check
      _
    $region79: #{tpu_custom_call.1} parent=1 // pred_check_branch
      %2558 = sbr.rel (0) target = $region81
    $region80: #{tpu_custom_call.1} parent=1 // pred_region
      %s2560 = ssub.s32 128, 128
      %2561 = vsyncadd [#allocation6], %s2560
      %s2563 = sshll.u32 [#allocation15], 4
      %s2564 = int_to_ptr.vmem [resolvable:$true] %s2563
      %2566 = dma.vmem_to_hbm [thread:$0]  %s2564, 128, %s11, [#allocation6]
    $region81: #{tpu_custom_call.1} parent=1 // pred_fallthru
      _
    // Predicated region
    $region82: #{tpu_custom_call.1} parent=1 // pred_check
      _
    $region83: #{tpu_custom_call.1} parent=1 // pred_check_branch
      %2568 = sbr.rel (0) target = $region85
    $region84: #{tpu_custom_call.1} parent=1 // pred_region
      %2569 = dma.done [#allocation6], 128
    $region85: #{tpu_custom_call.1} parent=1 // pred_fallthru
      _
    %2570 = vsyncpa [#allocation5], 1
    %2571 = vsyncpa [#allocation8], 1
    %2572 = vsyncpa [#allocation11], 1
    %2573 = vsyncpa [#allocation14], 1
    %2574 = vsyncpa [#allocation6], 1

</llo_original>
